<compile_context>
chip_gen: v5e
topology: v5e:2x2
jax: 0.10.0
libtpu: 0.0.40
codegen_flags: <defaults>
</compile_context>

<pallas_src>
import math
from functools import partial

import jax
import jax.numpy as jnp
from jax.experimental import pallas as pl
from jax.experimental.pallas import tpu as pltpu

F32 = jnp.float32
BF16 = jnp.bfloat16


# ----------------------------------------------------------------------------
# tiling helper
# ----------------------------------------------------------------------------
def _pick_tile(dim, pref, align):
    """Largest tile <= pref that is `align`-aligned and divides dim; else dim."""
    if dim <= pref:
        return dim
    t = (pref // align) * align
    while t >= align:
        if dim % t == 0:
            return t
        t -= align
    return dim


# ----------------------------------------------------------------------------
# Dense kernels (bf16 operands, f32 accumulation)
# ----------------------------------------------------------------------------
def _dense_kernel(x_ref, w_ref, b_ref, o_ref, *, activation):
    y = jnp.dot(x_ref[...].astype(BF16), w_ref[...],
                preferred_element_type=jnp.float32) + b_ref[...]
    if activation is not None:
        y = activation(y)
    o_ref[...] = y.astype(o_ref.dtype)


def _dense_kernel_acc(x_ref, w_ref, b_ref, o_ref, acc_ref, *, activation, n_k):
    @pl.when(pl.program_id(2) == 0)
    def _():
        acc_ref[...] = jnp.zeros_like(acc_ref)

    acc_ref[...] += jnp.dot(x_ref[...].astype(BF16), w_ref[...],
                            preferred_element_type=jnp.float32)

    @pl.when(pl.program_id(2) == n_k - 1)
    def _():
        y = acc_ref[...] + b_ref[...]
        if activation is not None:
            y = activation(y)
        o_ref[...] = y.astype(o_ref.dtype)


def dense(x, w, b, activation=None):
    """x: [M, K] f32, w: [K, N] bf16, b: [N] f32 -> [M, N] f32."""
    M, K = x.shape
    N = w.shape[1]
    tm = _pick_tile(M, 256, 8)
    tn = _pick_tile(N, 1024, 128)
    b2 = b.reshape(1, N)
    if K <= 4096:
        # Whole-K tiles: no accumulator, no init/flush branches.
        return pl.pallas_call(
            partial(_dense_kernel, activation=activation),
            out_shape=jax.ShapeDtypeStruct((M, N), F32),
            grid=(M // tm, N // tn),
            in_specs=[pl.BlockSpec((tm, K), lambda i, j: (i, 0)),
                      pl.BlockSpec((K, tn), lambda i, j: (0, j)),
                      pl.BlockSpec((1, tn), lambda i, j: (0, j))],
            out_specs=pl.BlockSpec((tm, tn), lambda i, j: (i, j)),
            compiler_params=pltpu.CompilerParams(
                dimension_semantics=("parallel", "parallel")),
        )(x, w, b2)
    # K-tiled fallback (not exercised at BERT-sized K).
    tk = _pick_tile(K, 1024, 128)
    n_k = K // tk
    return pl.pallas_call(
        partial(_dense_kernel_acc, activation=activation, n_k=n_k),
        out_shape=jax.ShapeDtypeStruct((M, N), F32),
        grid=(M // tm, N // tn, n_k),
        in_specs=[pl.BlockSpec((tm, tk), lambda i, j, k: (i, k)),
                  pl.BlockSpec((tk, tn), lambda i, j, k: (k, j)),
                  pl.BlockSpec((1, tn), lambda i, j, k: (0, j))],
        out_specs=pl.BlockSpec((tm, tn), lambda i, j, k: (i, j)),
        scratch_shapes=[pltpu.VMEM((tm, tn), jnp.float32)],
        compiler_params=pltpu.CompilerParams(
            dimension_semantics=("parallel", "parallel", "arbitrary")),
    )(x, w, b2)


def _dense2_kernel(x1_ref, x2_ref, w1_ref, w2_ref, b_ref, o_ref, *, activation):
    y = (jnp.dot(x1_ref[...].astype(BF16), w1_ref[...],
                 preferred_element_type=jnp.float32)
         + jnp.dot(x2_ref[...].astype(BF16), w2_ref[...],
                   preferred_element_type=jnp.float32)
         + b_ref[...])
    if activation is not None:
        y = activation(y)
    o_ref[...] = y.astype(o_ref.dtype)


def dense2(x1, x2, w1, w2, b, activation=None):
    """[x1 | x2] @ [[w1],[w2]] + b  without materializing the concatenation."""
    M, K1 = x1.shape
    K2 = x2.shape[1]
    N = w1.shape[1]
    tm = _pick_tile(M, 256, 8)
    tn = _pick_tile(N, 1024, 128)
    return pl.pallas_call(
        partial(_dense2_kernel, activation=activation),
        out_shape=jax.ShapeDtypeStruct((M, N), F32),
        grid=(M // tm, N // tn),
        in_specs=[pl.BlockSpec((tm, K1), lambda i, j: (i, 0)),
                  pl.BlockSpec((tm, K2), lambda i, j: (i, 0)),
                  pl.BlockSpec((K1, tn), lambda i, j: (0, j)),
                  pl.BlockSpec((K2, tn), lambda i, j: (0, j)),
                  pl.BlockSpec((1, tn), lambda i, j: (0, j))],
        out_specs=pl.BlockSpec((tm, tn), lambda i, j: (i, j)),
        compiler_params=pltpu.CompilerParams(
            dimension_semantics=("parallel", "parallel")),
    )(x1, x2, w1, w2, b.reshape(1, N))


# ----------------------------------------------------------------------------
# Dense + residual + LayerNorm fused epilogue (eps = 1e-12, BERT)
# ----------------------------------------------------------------------------
def _dense_ln_kernel(x_ref, w_ref, b_ref, r_ref, g_ref, bb_ref, o_ref):
    y = (jnp.dot(x_ref[...].astype(BF16), w_ref[...],
                 preferred_element_type=jnp.float32)
         + b_ref[...] + r_ref[...])
    mu = jnp.mean(y, axis=-1, keepdims=True)
    var = jnp.mean(jnp.square(y - mu), axis=-1, keepdims=True)
    o_ref[...] = ((y - mu) * jax.lax.rsqrt(var + 1e-12) * g_ref[...]
                  + bb_ref[...]).astype(o_ref.dtype)


def dense_ln(x, w, b, residual, gamma, beta):
    """LayerNorm(x @ w + b + residual), fused in one kernel (tn == N, tk == K)."""
    M, K = x.shape
    N = w.shape[1]
    tm = _pick_tile(M, 256, 8)
    row = pl.BlockSpec((tm, N), lambda i: (i, 0))
    vec = pl.BlockSpec((1, N), lambda i: (0, 0))
    return pl.pallas_call(
        _dense_ln_kernel,
        out_shape=jax.ShapeDtypeStruct((M, N), F32),
        grid=(M // tm,),
        in_specs=[pl.BlockSpec((tm, K), lambda i: (i, 0)),
                  pl.BlockSpec((K, N), lambda i: (0, 0)),
                  vec, row, vec, vec],
        out_specs=row,
        compiler_params=pltpu.CompilerParams(dimension_semantics=("parallel",)),
    )(x, w, b.reshape(1, N), residual, gamma.reshape(1, N), beta.reshape(1, N))


# ----------------------------------------------------------------------------
# Standalone LayerNorm (embeddings only)
# ----------------------------------------------------------------------------
def _ln_kernel(x_ref, g_ref, b_ref, o_ref):
    x = x_ref[...]
    mu = jnp.mean(x, axis=-1, keepdims=True)
    var = jnp.mean(jnp.square(x - mu), axis=-1, keepdims=True)
    o_ref[...] = (x - mu) * jax.lax.rsqrt(var + 1e-12) * g_ref[...] + b_ref[...]


def layernorm(x, gamma, beta):
    M, E = x.shape
    tm = _pick_tile(M, 256, 8)
    row = pl.BlockSpec((tm, E), lambda i: (i, 0))
    vec = pl.BlockSpec((1, E), lambda i: (0, 0))
    return pl.pallas_call(
        _ln_kernel,
        out_shape=jax.ShapeDtypeStruct((M, E), F32),
        grid=(M // tm,),
        in_specs=[row, vec, vec],
        out_specs=row,
        compiler_params=pltpu.CompilerParams(dimension_semantics=("parallel",)),
    )(x, gamma.reshape(1, E), beta.reshape(1, E))


# ----------------------------------------------------------------------------
# Attention: one batch per grid step, reads the fused [B*S, 3E] projection
# directly (q columns pre-scaled by 1/sqrt(hd)), writes ctx in [B*S, E] layout.
# ----------------------------------------------------------------------------
def _attn_kernel(qkv_ref, o_ref, *, heads, hd):
    E = heads * hd
    qkv = qkv_ref[...]                                    # [S, 3E] f32
    # TODO(synk): for long sequences (S >= 512) tile the KV axis flash-style so
    # the [S, S] score tile stays within the vreg file; no padding mask here
    # (matches the synthetic stand-in encoder).
    for h in range(heads):                                # static unroll
        q = qkv[:, h * hd:(h + 1) * hd].astype(BF16)               # already scaled
        k = qkv[:, E + h * hd:E + (h + 1) * hd].astype(BF16)
        v = qkv[:, 2 * E + h * hd:2 * E + (h + 1) * hd].astype(BF16)
        s = jax.lax.dot_general(q, k, (((1,), (1,)), ((), ())),
                                preferred_element_type=jnp.float32)  # [S, S]
        s = s - jnp.max(s, axis=-1, keepdims=True)
        p = jnp.exp(s)
        p = p * pl.reciprocal(jnp.sum(p, axis=-1, keepdims=True), approx=True)
        ctx = jnp.dot(p.astype(BF16), v, preferred_element_type=jnp.float32)
        o_ref[:, h * hd:(h + 1) * hd] = ctx


def attention(qkv, B, S, E, heads):
    """qkv: [B*S, 3E] fused projection -> context [B*S, E] (no HBM transposes)."""
    hd = E // heads
    return pl.pallas_call(
        partial(_attn_kernel, heads=heads, hd=hd),
        out_shape=jax.ShapeDtypeStruct((B * S, E), F32),
        grid=(B,),
        in_specs=[pl.BlockSpec((S, 3 * E), lambda b: (b, 0))],
        out_specs=pl.BlockSpec((S, E), lambda b: (b, 0)),
        compiler_params=pltpu.CompilerParams(dimension_semantics=("parallel",)),
    )(qkv)


# ----------------------------------------------------------------------------
# Bidirectional GRU: both directions fused in one body, fused [H, 3H] gate
# matmul per direction, time streamed in chunks over an "arbitrary" grid axis.
# PyTorch gate math: r,z,n order; n = tanh(gx_n + r * (h@W_hn + b_hn)).
# ----------------------------------------------------------------------------
def _gru_kernel(gxf_ref, gxb_ref, whf_ref, whb_ref, bhf_ref, bhb_ref,
                *refs, tch, H, with_ys):
    if with_ys:
        ysf_ref, ysb_ref, hf_f_ref, hf_b_ref, hcar_ref = refs
    else:
        hf_f_ref, hf_b_ref, hcar_ref = refs
        ysf_ref = ysb_ref = None

    @pl.when(pl.program_id(0) == 0)
    def _():
        hcar_ref[...] = jnp.zeros_like(hcar_ref)

    whf = whf_ref[...]            # [H, 3H] bf16
    whb = whb_ref[...]
    bhf = bhf_ref[...]            # [1, 3H] f32
    bhb = bhb_ref[...]

    def cell(gx_t, h, wh, bh):
        gh = jnp.dot(h.astype(BF16), wh,
                     preferred_element_type=jnp.float32) + bh       # [B, 3H]
        r = jax.nn.sigmoid(gx_t[:, 0:H] + gh[:, 0:H])
        z = jax.nn.sigmoid(gx_t[:, H:2 * H] + gh[:, H:2 * H])
        n = jnp.tanh(gx_t[:, 2 * H:3 * H] + r * gh[:, 2 * H:3 * H])
        return (1.0 - z) * n + z * h

    def step(t, carry):
        h_f, h_b = carry
        tb = tch - 1 - t            # backward walks its (mirrored) chunk in reverse
        h_f = cell(gxf_ref[t], h_f, whf, bhf)
        h_b = cell(gxb_ref[tb], h_b, whb, bhb)
        if with_ys:
            ysf_ref[t] = h_f
            ysb_ref[tb] = h_b
        return h_f, h_b

    h_f, h_b = jax.lax.fori_loop(0, tch, step, (hcar_ref[0], hcar_ref[1]))
    hcar_ref[0] = h_f
    hcar_ref[1] = h_b
    hf_f_ref[...] = h_f
    hf_b_ref[...] = h_b


def _input_proj(parts2d, ws, b):
    if len(parts2d) == 1:
        return dense(parts2d[0], ws[0], b)
    return dense2(parts2d[0], parts2d[1], ws[0], ws[1], b)


def gru_layer(x_parts, lp, *, with_ys):
    """One bidirectional GRU layer.

    x_parts: tuple of time-major [S, B, *] inputs whose feature dims together
    form the layer input (a single [S, B, E] for layer 0, (ys_f, ys_b) after).
    Returns ((ys_f, ys_b) or None, (hf_f, hf_b)).
    """
    S, B = x_parts[0].shape[:2]
    H = lp["whh_f"].shape[0]
    parts2d = [p.reshape(S * B, p.shape[-1]) for p in x_parts]

    # Hoisted non-recurrent input projections, one per direction; no
    # transposes / flips -- the kernel mirrors chunk indices for backward.
    gx_f = _input_proj(parts2d, lp["wih_f"], lp["bih_f"]).reshape(S, B, 3 * H)
    gx_b = _input_proj(parts2d, lp["wih_b"], lp["bih_b"]).reshape(S, B, 3 * H)

    tch = _pick_tile(S, 32, 1)       # time chunk: streams gx/ys through VMEM
    n_chunks = S // tch

    fwd_gx = pl.BlockSpec((tch, B, 3 * H), lambda c: (c, 0, 0))
    bwd_gx = pl.BlockSpec((tch, B, 3 * H), lambda c: (n_chunks - 1 - c, 0, 0))
    w_spec = pl.BlockSpec((H, 3 * H), lambda c: (0, 0))
    b_spec = pl.BlockSpec((1, 3 * H), lambda c: (0, 0))
    hf_spec = pl.BlockSpec((B, H), lambda c: (0, 0))

    out_shape = []
    out_specs = []
    if with_ys:
        out_shape += [jax.ShapeDtypeStruct((S, B, H), F32)] * 2
        out_specs += [pl.BlockSpec((tch, B, H), lambda c: (c, 0, 0)),
                      pl.BlockSpec((tch, B, H),
                                   lambda c: (n_chunks - 1 - c, 0, 0))]
    out_shape += [jax.ShapeDtypeStruct((B, H), F32)] * 2
    out_specs += [hf_spec, hf_spec]

    outs = pl.pallas_call(
        partial(_gru_kernel, tch=tch, H=H, with_ys=with_ys),
        out_shape=tuple(out_shape),
        grid=(n_chunks,),
        in_specs=[fwd_gx, bwd_gx, w_spec, w_spec, b_spec, b_spec],
        out_specs=tuple(out_specs),
        scratch_shapes=[pltpu.VMEM((2, B, H), jnp.float32)],
        compiler_params=pltpu.CompilerParams(
            dimension_semantics=("arbitrary",)),
    )(gx_f, gx_b, lp["whh_f"], lp["whh_b"], lp["bhh_f"], lp["bhh_b"])
    # TODO(synk): on v7x the two directions could instead be split across the 2
    # TensorCores via a 2-wide "parallel" grid axis; fused here so one
    # direction's MXU work overlaps the other's EUP sigmoid/tanh on v5e/v6e.

    if with_ys:
        ys_f, ys_b, hf_f, hf_b = outs
        return (ys_f, ys_b), (hf_f, hf_b)
    hf_f, hf_b = outs
    return None, (hf_f, hf_b)


# ----------------------------------------------------------------------------
# Synthetic BERT encoder (stand-in for pretrained bert-base) + GRU + head
# ----------------------------------------------------------------------------
def bert_layer(x2d, p, B, S, E, heads):
    qkv = dense(x2d, p["wqkv"], p["bqkv"])                       # [B*S, 3E]
    ctx = attention(qkv, B, S, E, heads)                         # [B*S, E]
    x1 = dense_ln(ctx, p["wo"], p["bo"], x2d, p["ln1_g"], p["ln1_b"])
    inter = dense(x1, p["wi"], p["bi"], activation=jax.nn.gelu)
    x2 = dense_ln(inter, p["wo2"], p["bo2"], x1, p["ln2_g"], p["ln2_b"])
    return x2


def bert_encoder(params, text, heads):
    B, S = text.shape
    E = params["word_emb"].shape[1]
    # Embedding lookups are JAX glue (gather).
    emb = (params["word_emb"][text]
           + params["pos_emb"][:S][None, :, :]
           + params["type_emb"][0][None, None, :])
    x = layernorm(emb.reshape(B * S, E), params["emb_ln_g"], params["emb_ln_b"])
    for lp in params["bert_layers"]:
        x = bert_layer(x, lp, B, S, E, heads)
    return x.reshape(B, S, E)                                    # bert(text)[0]


def bert_with_gru_forward(params, text, *, heads):
    embedded = bert_encoder(params, text, heads)                 # [B, S, E]
    x_parts = (embedded.transpose(1, 0, 2),)                     # time-major [S, B, E]
    n_layers = len(params["gru_layers"])
    hf = None
    for li, lp in enumerate(params["gru_layers"]):
        ys, hf = gru_layer(x_parts, lp, with_ys=(li < n_layers - 1))
        if ys is not None:
            x_parts = ys       # (ys_f, ys_b) consumed concat-free by dense2
        # inter-layer GRU dropout: identity (eval mode)
    hf_f, hf_b = hf
    # bidirectional: cat(hidden[-2], hidden[-1]) @ W_out + b, concat folded
    # into the 2-operand dense; dropout = identity (eval mode).
    return dense2(hf_f, hf_b, params["out_w_f"], params["out_w_b"],
                  params["out_b"])


# ----------------------------------------------------------------------------
# Deterministic synthetic parameters (stand-in for pretrained weights)
# ----------------------------------------------------------------------------
def init_params(key, *, vocab, E, max_pos, heads, inter, n_bert_layers,
                H, n_gru_layers, out_dim):
    hd = E // heads
    scale = 1.0 / math.sqrt(hd)

    def nrm(k, shape, s=0.1):
        return s * jax.random.normal(k, shape, dtype=F32)

    keys = iter(jax.random.split(key, 1024))
    params = {
        "word_emb": nrm(next(keys), (vocab, E)),
        "pos_emb": nrm(next(keys), (max_pos, E)),
        "type_emb": nrm(next(keys), (2, E)),
        "emb_ln_g": jnp.ones((E,), F32),
        "emb_ln_b": jnp.zeros((E,), F32),
        "bert_layers": [],
        "gru_layers": [],
    }
    for _ in range(n_bert_layers):
        wq, wk, wv = (nrm(next(keys), (E, E)) for _ in range(3))
        params["bert_layers"].append({
            # fused QKV weight [E, 3E], bf16; attention scale folded into Q
            # columns (Q bias is zero so no bias fold needed).
            "wqkv": jnp.concatenate([wq * scale, wk, wv], axis=1).astype(BF16),
            "bqkv": jnp.zeros((3 * E,), F32),
            "wo": nrm(next(keys), (E, E)).astype(BF16),
            "bo": jnp.zeros((E,), F32),
            "ln1_g": jnp.ones((E,), F32), "ln1_b": jnp.zeros((E,), F32),
            "wi": nrm(next(keys), (E, inter)).astype(BF16),
            "bi": jnp.zeros((inter,), F32),
            "wo2": nrm(next(keys), (inter, E)).astype(BF16),
            "bo2": jnp.zeros((E,), F32),
            "ln2_g": jnp.ones((E,), F32), "ln2_b": jnp.zeros((E,), F32),
        })
    in_parts = [E]                # feature widths of the layer-input pieces
    for _ in range(n_gru_layers):
        layer = {}
        for d in ("f", "b"):
            # input->hidden weights per input piece, columns = gates r|z|n
            layer["wih_" + d] = [nrm(next(keys), (p, 3 * H)).astype(BF16)
                                 for p in in_parts]
            layer["bih_" + d] = nrm(next(keys), (3 * H,))
            # hidden->hidden weights fused over gates: [H, 3H]
            layer["whh_" + d] = nrm(next(keys), (H, 3 * H)).astype(BF16)
            layer["bhh_" + d] = nrm(next(keys), (1, 3 * H))
        params["gru_layers"].append(layer)
        in_parts = [H, H]         # bidirectional output feeds the next layer
    params["out_w_f"] = nrm(next(keys), (H, out_dim)).astype(BF16)
    params["out_w_b"] = nrm(next(keys), (H, out_dim)).astype(BF16)
    params["out_b"] = jnp.zeros((out_dim,), F32)
    return params


# ----------------------------------------------------------------------------
if __name__ == "__main__":
    B, S = 2, 8            # batch, sequence length (token ids)
    VOCAB, E = 128, 32     # synthetic "bert-base" hidden size stand-in
    HEADS, INTER = 2, 64
    N_BERT_LAYERS = 2
    H = 32                 # GRU hidden_dim
    N_GRU_LAYERS = 2       # exercises multi-layer + inter-layer-dropout path
    OUT_DIM = 4            # output_dim (number of labels)

    key = jax.random.PRNGKey(0)
    pkey, tkey = jax.random.split(key)
    params = init_params(pkey, vocab=VOCAB, E=E, max_pos=S, heads=HEADS,
                         inter=INTER, n_bert_layers=N_BERT_LAYERS,
                         H=H, n_gru_layers=N_GRU_LAYERS, out_dim=OUT_DIM)
    text = jax.random.randint(tkey, (B, S), 0, VOCAB, dtype=jnp.int32)

    # Static model config (heads) bound via partial -> concrete under jit.
    forward = jax.jit(partial(bert_with_gru_forward, heads=HEADS))

    logits = forward(params, text)
    jax.block_until_ready(logits)
    assert logits.shape == (B, OUT_DIM) and logits.dtype == jnp.float32
    print("KERNEL_OK")
</pallas_src>

<mosaic_0001>
module attributes {stable_mosaic.version = 11 : i64} {
  func.func @_dense_ln_kernel(%arg0: i32, %arg1: memref<16x32xf32, #tpu.memory_space<vmem>>, %arg2: memref<32x32xbf16, #tpu.memory_space<vmem>>, %arg3: memref<1x32xf32, #tpu.memory_space<vmem>>, %arg4: memref<16x32xf32, #tpu.memory_space<vmem>>, %arg5: memref<1x32xf32, #tpu.memory_space<vmem>>, %arg6: memref<1x32xf32, #tpu.memory_space<vmem>>, %arg7: memref<16x32xf32, #tpu.memory_space<vmem>>) attributes {dimension_semantics = [#tpu.dimension_semantics<parallel>], iteration_bounds = array<i64: 1>, scalar_prefetch = 0 : i64, scratch_operands = 0 : i64, tpu.core_type = #tpu.core_type<tc>, window_params = [{transform_indices = @transform_0, window_bounds = array<i64: 16, 32>}, {pipeline_mode = #tpu.pipeline_mode<synchronous>, transform_indices = @transform_1, window_bounds = array<i64: 32, 32>}, {pipeline_mode = #tpu.pipeline_mode<synchronous>, transform_indices = @transform_2, window_bounds = array<i64: 1, 32>}, {transform_indices = @transform_3, window_bounds = array<i64: 16, 32>}, {pipeline_mode = #tpu.pipeline_mode<synchronous>, transform_indices = @transform_4, window_bounds = array<i64: 1, 32>}, {pipeline_mode = #tpu.pipeline_mode<synchronous>, transform_indices = @transform_5, window_bounds = array<i64: 1, 32>}, {transform_indices = @transform_6, window_bounds = array<i64: 16, 32>}]} {
    %c0 = arith.constant 0 : index
    %c0_0 = arith.constant 0 : index
    %0 = vector.load %arg1[%c0, %c0_0] : memref<16x32xf32, #tpu.memory_space<vmem>>, vector<16x32xf32>
    %1 = arith.truncf %0 : vector<16x32xf32> to vector<16x32xbf16>
    %c0_1 = arith.constant 0 : index
    %c0_2 = arith.constant 0 : index
    %2 = vector.load %arg2[%c0_1, %c0_2] : memref<32x32xbf16, #tpu.memory_space<vmem>>, vector<32x32xbf16>
    %cst = arith.constant dense<0.000000e+00> : vector<16x32xf32>
    %3 = tpu.matmul %1, %2, %cst {dimension_numbers = #tpu.dot_dimension_numbers<[1], [0], [0], [1], [0, 0, 1, 1], [], []>} : vector<16x32xbf16>, vector<32x32xbf16>, vector<16x32xf32> -> vector<16x32xf32>
    %c0_3 = arith.constant 0 : index
    %c0_4 = arith.constant 0 : index
    %4 = vector.load %arg3[%c0_3, %c0_4] : memref<1x32xf32, #tpu.memory_space<vmem>>, vector<1x32xf32>
    %5 = vector.broadcast %4 : vector<1x32xf32> to vector<16x32xf32>
    %6 = arith.addf %3, %5 : vector<16x32xf32>
    %c0_5 = arith.constant 0 : index
    %c0_6 = arith.constant 0 : index
    %7 = vector.load %arg4[%c0_5, %c0_6] : memref<16x32xf32, #tpu.memory_space<vmem>>, vector<16x32xf32>
    %8 = arith.addf %6, %7 : vector<16x32xf32>
    %cst_7 = arith.constant dense<0.000000e+00> : vector<16xf32>
    %9 = vector.multi_reduction <add>, %8, %cst_7 [1] : vector<16x32xf32> to vector<16xf32>
    %10 = vector.shape_cast %9 : vector<16xf32> to vector<16x1xf32>
    %cst_8 = arith.constant 3.200000e+01 : f32
    %11 = vector.broadcast %cst_8 : f32 to vector<16x1xf32>
    %12 = arith.divf %10, %11 : vector<16x1xf32>
    %13 = vector.broadcast %12 : vector<16x1xf32> to vector<16x32xf32>
    %14 = arith.subf %8, %13 : vector<16x32xf32>
    %15 = arith.mulf %14, %14 : vector<16x32xf32>
    %cst_9 = arith.constant dense<0.000000e+00> : vector<16xf32>
    %16 = vector.multi_reduction <add>, %15, %cst_9 [1] : vector<16x32xf32> to vector<16xf32>
    %17 = vector.shape_cast %16 : vector<16xf32> to vector<16x1xf32>
    %cst_10 = arith.constant 3.200000e+01 : f32
    %18 = vector.broadcast %cst_10 : f32 to vector<16x1xf32>
    %19 = arith.divf %17, %18 : vector<16x1xf32>
    %20 = vector.broadcast %12 : vector<16x1xf32> to vector<16x32xf32>
    %21 = arith.subf %8, %20 : vector<16x32xf32>
    %cst_11 = arith.constant 9.99999996E-13 : f32
    %22 = vector.broadcast %cst_11 : f32 to vector<16x1xf32>
    %23 = arith.addf %19, %22 : vector<16x1xf32>
    %24 = math.rsqrt %23 : vector<16x1xf32>
    %25 = vector.broadcast %24 : vector<16x1xf32> to vector<16x32xf32>
    %26 = arith.mulf %21, %25 : vector<16x32xf32>
    %c0_12 = arith.constant 0 : index
    %c0_13 = arith.constant 0 : index
    %27 = vector.load %arg5[%c0_12, %c0_13] : memref<1x32xf32, #tpu.memory_space<vmem>>, vector<1x32xf32>
    %28 = vector.broadcast %27 : vector<1x32xf32> to vector<16x32xf32>
    %29 = arith.mulf %26, %28 : vector<16x32xf32>
    %c0_14 = arith.constant 0 : index
    %c0_15 = arith.constant 0 : index
    %30 = vector.load %arg6[%c0_14, %c0_15] : memref<1x32xf32, #tpu.memory_space<vmem>>, vector<1x32xf32>
    %31 = vector.broadcast %30 : vector<1x32xf32> to vector<16x32xf32>
    %32 = arith.addf %29, %31 : vector<16x32xf32>
    %c0_16 = arith.constant 0 : index
    %c0_17 = arith.constant 0 : index
    %33 = vector.load %arg7[%c0_16, %c0_17] : memref<16x32xf32, #tpu.memory_space<vmem>>, vector<16x32xf32>
    tpu.vector_store %arg7[%c0_16, %c0_17], %32 {strides = array<i32>} : memref<16x32xf32, #tpu.memory_space<vmem>>, vector<16x32xf32>,
    return
  }
  func.func @transform_0(%arg0: i32) -> (i32, i32) {
    %c0_i32 = arith.constant 0 : i32
    %c0_i32_0 = arith.constant 0 : i32
    return %arg0, %c0_i32 : i32, i32
  }
  func.func @transform_1(%arg0: i32) -> (i32, i32) {
    %c0_i32 = arith.constant 0 : i32
    %c0_i32_0 = arith.constant 0 : i32
    %c0_i32_1 = arith.constant 0 : i32
    return %c0_i32, %c0_i32_0 : i32, i32
  }
  func.func @transform_2(%arg0: i32) -> (i32, i32) {
    %c0_i32 = arith.constant 0 : i32
    %c0_i32_0 = arith.constant 0 : i32
    %c0_i32_1 = arith.constant 0 : i32
    return %c0_i32, %c0_i32_0 : i32, i32
  }
  func.func @transform_3(%arg0: i32) -> (i32, i32) {
    %c0_i32 = arith.constant 0 : i32
    %c0_i32_0 = arith.constant 0 : i32
    return %arg0, %c0_i32 : i32, i32
  }
  func.func @transform_4(%arg0: i32) -> (i32, i32) {
    %c0_i32 = arith.constant 0 : i32
    %c0_i32_0 = arith.constant 0 : i32
    %c0_i32_1 = arith.constant 0 : i32
    return %c0_i32, %c0_i32_0 : i32, i32
  }
  func.func @transform_5(%arg0: i32) -> (i32, i32) {
    %c0_i32 = arith.constant 0 : i32
    %c0_i32_0 = arith.constant 0 : i32
    %c0_i32_1 = arith.constant 0 : i32
    return %c0_i32, %c0_i32_0 : i32, i32
  }
  func.func @transform_6(%arg0: i32) -> (i32, i32) {
    %c0_i32 = arith.constant 0 : i32
    %c0_i32_0 = arith.constant 0 : i32
    return %arg0, %c0_i32 : i32, i32
  }
}

module attributes {stable_mosaic.version = 11 : i64} {
  func.func @_ln_kernel(%arg0: i32, %arg1: memref<16x32xf32, #tpu.memory_space<vmem>>, %arg2: memref<1x32xf32, #tpu.memory_space<vmem>>, %arg3: memref<1x32xf32, #tpu.memory_space<vmem>>, %arg4: memref<16x32xf32, #tpu.memory_space<vmem>>) attributes {dimension_semantics = [#tpu.dimension_semantics<parallel>], iteration_bounds = array<i64: 1>, scalar_prefetch = 0 : i64, scratch_operands = 0 : i64, tpu.core_type = #tpu.core_type<tc>, window_params = [{transform_indices = @transform_0, window_bounds = array<i64: 16, 32>}, {pipeline_mode = #tpu.pipeline_mode<synchronous>, transform_indices = @transform_1, window_bounds = array<i64: 1, 32>}, {pipeline_mode = #tpu.pipeline_mode<synchronous>, transform_indices = @transform_2, window_bounds = array<i64: 1, 32>}, {transform_indices = @transform_3, window_bounds = array<i64: 16, 32>}]} {
    %c0 = arith.constant 0 : index
    %c0_0 = arith.constant 0 : index
    %0 = vector.load %arg1[%c0, %c0_0] : memref<16x32xf32, #tpu.memory_space<vmem>>, vector<16x32xf32>
    %cst = arith.constant dense<0.000000e+00> : vector<16xf32>
    %1 = vector.multi_reduction <add>, %0, %cst [1] : vector<16x32xf32> to vector<16xf32>
    %2 = vector.shape_cast %1 : vector<16xf32> to vector<16x1xf32>
    %cst_1 = arith.constant 3.200000e+01 : f32
    %3 = vector.broadcast %cst_1 : f32 to vector<16x1xf32>
    %4 = arith.divf %2, %3 : vector<16x1xf32>
    %5 = vector.broadcast %4 : vector<16x1xf32> to vector<16x32xf32>
    %6 = arith.subf %0, %5 : vector<16x32xf32>
    %7 = arith.mulf %6, %6 : vector<16x32xf32>
    %cst_2 = arith.constant dense<0.000000e+00> : vector<16xf32>
    %8 = vector.multi_reduction <add>, %7, %cst_2 [1] : vector<16x32xf32> to vector<16xf32>
    %9 = vector.shape_cast %8 : vector<16xf32> to vector<16x1xf32>
    %cst_3 = arith.constant 3.200000e+01 : f32
    %10 = vector.broadcast %cst_3 : f32 to vector<16x1xf32>
    %11 = arith.divf %9, %10 : vector<16x1xf32>
    %12 = vector.broadcast %4 : vector<16x1xf32> to vector<16x32xf32>
    %13 = arith.subf %0, %12 : vector<16x32xf32>
    %cst_4 = arith.constant 9.99999996E-13 : f32
    %14 = vector.broadcast %cst_4 : f32 to vector<16x1xf32>
    %15 = arith.addf %11, %14 : vector<16x1xf32>
    %16 = math.rsqrt %15 : vector<16x1xf32>
    %17 = vector.broadcast %16 : vector<16x1xf32> to vector<16x32xf32>
    %18 = arith.mulf %13, %17 : vector<16x32xf32>
    %c0_5 = arith.constant 0 : index
    %c0_6 = arith.constant 0 : index
    %19 = vector.load %arg2[%c0_5, %c0_6] : memref<1x32xf32, #tpu.memory_space<vmem>>, vector<1x32xf32>
    %20 = vector.broadcast %19 : vector<1x32xf32> to vector<16x32xf32>
    %21 = arith.mulf %18, %20 : vector<16x32xf32>
    %c0_7 = arith.constant 0 : index
    %c0_8 = arith.constant 0 : index
    %22 = vector.load %arg3[%c0_7, %c0_8] : memref<1x32xf32, #tpu.memory_space<vmem>>, vector<1x32xf32>
    %23 = vector.broadcast %22 : vector<1x32xf32> to vector<16x32xf32>
    %24 = arith.addf %21, %23 : vector<16x32xf32>
    %c0_9 = arith.constant 0 : index
    %c0_10 = arith.constant 0 : index
    %25 = vector.load %arg4[%c0_9, %c0_10] : memref<16x32xf32, #tpu.memory_space<vmem>>, vector<16x32xf32>
    tpu.vector_store %arg4[%c0_9, %c0_10], %24 {strides = array<i32>} : memref<16x32xf32, #tpu.memory_space<vmem>>, vector<16x32xf32>,
    return
  }
  func.func @transform_0(%arg0: i32) -> (i32, i32) {
    %c0_i32 = arith.constant 0 : i32
    %c0_i32_0 = arith.constant 0 : i32
    return %arg0, %c0_i32 : i32, i32
  }
  func.func @transform_1(%arg0: i32) -> (i32, i32) {
    %c0_i32 = arith.constant 0 : i32
    %c0_i32_0 = arith.constant 0 : i32
    %c0_i32_1 = arith.constant 0 : i32
    return %c0_i32, %c0_i32_0 : i32, i32
  }
  func.func @transform_2(%arg0: i32) -> (i32, i32) {
    %c0_i32 = arith.constant 0 : i32
    %c0_i32_0 = arith.constant 0 : i32
    %c0_i32_1 = arith.constant 0 : i32
    return %c0_i32, %c0_i32_0 : i32, i32
  }
  func.func @transform_3(%arg0: i32) -> (i32, i32) {
    %c0_i32 = arith.constant 0 : i32
    %c0_i32_0 = arith.constant 0 : i32
    return %arg0, %c0_i32 : i32, i32
  }
}

module attributes {stable_mosaic.version = 11 : i64} {
  func.func @_dense_kernel(%arg0: i32, %arg1: i32, %arg2: memref<16x32xf32, #tpu.memory_space<vmem>>, %arg3: memref<32x96xbf16, #tpu.memory_space<vmem>>, %arg4: memref<1x96xf32, #tpu.memory_space<vmem>>, %arg5: memref<16x96xf32, #tpu.memory_space<vmem>>) attributes {dimension_semantics = [#tpu.dimension_semantics<parallel>, #tpu.dimension_semantics<parallel>], iteration_bounds = array<i64: 1, 1>, scalar_prefetch = 0 : i64, scratch_operands = 0 : i64, tpu.core_type = #tpu.core_type<tc>, window_params = [{transform_indices = @transform_0, window_bounds = array<i64: 16, 32>}, {transform_indices = @transform_1, window_bounds = array<i64: 32, 96>}, {transform_indices = @transform_2, window_bounds = array<i64: 1, 96>}, {transform_indices = @transform_3, window_bounds = array<i64: 16, 96>}]} {
    %c0 = arith.constant 0 : index
    %c0_0 = arith.constant 0 : index
    %0 = vector.load %arg2[%c0, %c0_0] : memref<16x32xf32, #tpu.memory_space<vmem>>, vector<16x32xf32>
    %1 = arith.truncf %0 : vector<16x32xf32> to vector<16x32xbf16>
    %c0_1 = arith.constant 0 : index
    %c0_2 = arith.constant 0 : index
    %2 = vector.load %arg3[%c0_1, %c0_2] : memref<32x96xbf16, #tpu.memory_space<vmem>>, vector<32x96xbf16>
    %cst = arith.constant dense<0.000000e+00> : vector<16x96xf32>
    %3 = tpu.matmul %1, %2, %cst {dimension_numbers = #tpu.dot_dimension_numbers<[1], [0], [0], [1], [0, 0, 1, 1], [], []>} : vector<16x32xbf16>, vector<32x96xbf16>, vector<16x96xf32> -> vector<16x96xf32>
    %c0_3 = arith.constant 0 : index
    %c0_4 = arith.constant 0 : index
    %4 = vector.load %arg4[%c0_3, %c0_4] : memref<1x96xf32, #tpu.memory_space<vmem>>, vector<1x96xf32>
    %5 = vector.broadcast %4 : vector<1x96xf32> to vector<16x96xf32>
    %6 = arith.addf %3, %5 : vector<16x96xf32>
    %c0_5 = arith.constant 0 : index
    %c0_6 = arith.constant 0 : index
    %7 = vector.load %arg5[%c0_5, %c0_6] : memref<16x96xf32, #tpu.memory_space<vmem>>, vector<16x96xf32>
    tpu.vector_store %arg5[%c0_5, %c0_6], %6 {strides = array<i32>} : memref<16x96xf32, #tpu.memory_space<vmem>>, vector<16x96xf32>,
    return
  }
  func.func @transform_0(%arg0: i32, %arg1: i32) -> (i32, i32) {
    %c0_i32 = arith.constant 0 : i32
    %c0_i32_0 = arith.constant 0 : i32
    return %arg0, %c0_i32 : i32, i32
  }
  func.func @transform_1(%arg0: i32, %arg1: i32) -> (i32, i32) {
    %c0_i32 = arith.constant 0 : i32
    %c0_i32_0 = arith.constant 0 : i32
    return %c0_i32, %arg1 : i32, i32
  }
  func.func @transform_2(%arg0: i32, %arg1: i32) -> (i32, i32) {
    %c0_i32 = arith.constant 0 : i32
    %c0_i32_0 = arith.constant 0 : i32
    return %c0_i32, %arg1 : i32, i32
  }
  func.func @transform_3(%arg0: i32, %arg1: i32) -> (i32, i32) {
    %c0_i32 = arith.constant 0 : i32
    return %arg0, %arg1 : i32, i32
  }
}

module attributes {stable_mosaic.version = 11 : i64} {
  func.func @_attn_kernel(%arg0: i32, %arg1: memref<8x96xf32, #tpu.memory_space<vmem>>, %arg2: memref<8x32xf32, #tpu.memory_space<vmem>>) attributes {dimension_semantics = [#tpu.dimension_semantics<parallel>], iteration_bounds = array<i64: 2>, scalar_prefetch = 0 : i64, scratch_operands = 0 : i64, tpu.core_type = #tpu.core_type<tc>, window_params = [{transform_indices = @transform_0, window_bounds = array<i64: 8, 96>}, {transform_indices = @transform_1, window_bounds = array<i64: 8, 32>}]} {
    %c0 = arith.constant 0 : index
    %c0_0 = arith.constant 0 : index
    %0 = vector.load %arg1[%c0, %c0_0] : memref<8x96xf32, #tpu.memory_space<vmem>>, vector<8x96xf32>
    %1 = vector.extract_strided_slice %0 {offsets = [0, 0], sizes = [8, 16], strides = [1, 1]} : vector<8x96xf32> to vector<8x16xf32>
    %2 = arith.truncf %1 : vector<8x16xf32> to vector<8x16xbf16>
    %3 = vector.extract_strided_slice %0 {offsets = [0, 32], sizes = [8, 16], strides = [1, 1]} : vector<8x96xf32> to vector<8x16xf32>
    %4 = arith.truncf %3 : vector<8x16xf32> to vector<8x16xbf16>
    %5 = vector.extract_strided_slice %0 {offsets = [0, 64], sizes = [8, 16], strides = [1, 1]} : vector<8x96xf32> to vector<8x16xf32>
    %6 = arith.truncf %5 : vector<8x16xf32> to vector<8x16xbf16>
    %cst = arith.constant dense<0.000000e+00> : vector<8x8xf32>
    %7 = tpu.matmul %2, %4, %cst {dimension_numbers = #tpu.dot_dimension_numbers<[1], [1], [0], [0], [0, 0, 1, 0], [], []>} : vector<8x16xbf16>, vector<8x16xbf16>, vector<8x8xf32> -> vector<8x8xf32>
    %cst_1 = arith.constant dense<0xFF800000> : vector<8xf32>
    %8 = vector.multi_reduction <maximumf>, %7, %cst_1 [1] : vector<8x8xf32> to vector<8xf32>
    %9 = vector.shape_cast %8 : vector<8xf32> to vector<8x1xf32>
    %10 = vector.broadcast %9 : vector<8x1xf32> to vector<8x8xf32>
    %11 = arith.subf %7, %10 : vector<8x8xf32>
    %12 = math.exp %11 : vector<8x8xf32>
    %cst_2 = arith.constant dense<0.000000e+00> : vector<8xf32>
    %13 = vector.multi_reduction <add>, %12, %cst_2 [1] : vector<8x8xf32> to vector<8xf32>
    %14 = vector.shape_cast %13 : vector<8xf32> to vector<8x1xf32>
    %15 = tpu.reciprocal %14 {approx = true} : vector<8x1xf32> -> vector<8x1xf32>
    %16 = vector.broadcast %15 : vector<8x1xf32> to vector<8x8xf32>
    %17 = arith.mulf %12, %16 : vector<8x8xf32>
    %18 = arith.truncf %17 : vector<8x8xf32> to vector<8x8xbf16>
    %cst_3 = arith.constant dense<0.000000e+00> : vector<8x16xf32>
    %19 = tpu.matmul %18, %6, %cst_3 {dimension_numbers = #tpu.dot_dimension_numbers<[1], [0], [0], [1], [0, 0, 1, 1], [], []>} : vector<8x8xbf16>, vector<8x16xbf16>, vector<8x16xf32> -> vector<8x16xf32>
    %c0_4 = arith.constant 0 : index
    %c0_5 = arith.constant 0 : index
    %20 = vector.load %arg2[%c0_4, %c0_5] : memref<8x32xf32, #tpu.memory_space<vmem>>, vector<8x16xf32>
    tpu.vector_store %arg2[%c0_4, %c0_5], %19 {strides = array<i32>} : memref<8x32xf32, #tpu.memory_space<vmem>>, vector<8x16xf32>,
    %21 = vector.extract_strided_slice %0 {offsets = [0, 16], sizes = [8, 16], strides = [1, 1]} : vector<8x96xf32> to vector<8x16xf32>
    %22 = arith.truncf %21 : vector<8x16xf32> to vector<8x16xbf16>
    %23 = vector.extract_strided_slice %0 {offsets = [0, 48], sizes = [8, 16], strides = [1, 1]} : vector<8x96xf32> to vector<8x16xf32>
    %24 = arith.truncf %23 : vector<8x16xf32> to vector<8x16xbf16>
    %25 = vector.extract_strided_slice %0 {offsets = [0, 80], sizes = [8, 16], strides = [1, 1]} : vector<8x96xf32> to vector<8x16xf32>
    %26 = arith.truncf %25 : vector<8x16xf32> to vector<8x16xbf16>
    %cst_6 = arith.constant dense<0.000000e+00> : vector<8x8xf32>
    %27 = tpu.matmul %22, %24, %cst_6 {dimension_numbers = #tpu.dot_dimension_numbers<[1], [1], [0], [0], [0, 0, 1, 0], [], []>} : vector<8x16xbf16>, vector<8x16xbf16>, vector<8x8xf32> -> vector<8x8xf32>
    %cst_7 = arith.constant dense<0xFF800000> : vector<8xf32>
    %28 = vector.multi_reduction <maximumf>, %27, %cst_7 [1] : vector<8x8xf32> to vector<8xf32>
    %29 = vector.shape_cast %28 : vector<8xf32> to vector<8x1xf32>
    %30 = vector.broadcast %29 : vector<8x1xf32> to vector<8x8xf32>
    %31 = arith.subf %27, %30 : vector<8x8xf32>
    %32 = math.exp %31 : vector<8x8xf32>
    %cst_8 = arith.constant dense<0.000000e+00> : vector<8xf32>
    %33 = vector.multi_reduction <add>, %32, %cst_8 [1] : vector<8x8xf32> to vector<8xf32>
    %34 = vector.shape_cast %33 : vector<8xf32> to vector<8x1xf32>
    %35 = tpu.reciprocal %34 {approx = true} : vector<8x1xf32> -> vector<8x1xf32>
    %36 = vector.broadcast %35 : vector<8x1xf32> to vector<8x8xf32>
    %37 = arith.mulf %32, %36 : vector<8x8xf32>
    %38 = arith.truncf %37 : vector<8x8xf32> to vector<8x8xbf16>
    %cst_9 = arith.constant dense<0.000000e+00> : vector<8x16xf32>
    %39 = tpu.matmul %38, %26, %cst_9 {dimension_numbers = #tpu.dot_dimension_numbers<[1], [0], [0], [1], [0, 0, 1, 1], [], []>} : vector<8x8xbf16>, vector<8x16xbf16>, vector<8x16xf32> -> vector<8x16xf32>
    %c0_10 = arith.constant 0 : index
    %c16 = arith.constant 16 : index
    %40 = vector.load %arg2[%c0_10, %c16] : memref<8x32xf32, #tpu.memory_space<vmem>>, vector<8x16xf32>
    tpu.vector_store %arg2[%c0_10, %c16], %39 {strides = array<i32>} : memref<8x32xf32, #tpu.memory_space<vmem>>, vector<8x16xf32>,
    return
  }
  func.func @transform_0(%arg0: i32) -> (i32, i32) {
    %c0_i32 = arith.constant 0 : i32
    %c0_i32_0 = arith.constant 0 : i32
    return %arg0, %c0_i32 : i32, i32
  }
  func.func @transform_1(%arg0: i32) -> (i32, i32) {
    %c0_i32 = arith.constant 0 : i32
    %c0_i32_0 = arith.constant 0 : i32
    return %arg0, %c0_i32 : i32, i32
  }
}

module attributes {stable_mosaic.version = 11 : i64} {
  func.func @_dense_ln_kernel(%arg0: i32, %arg1: memref<16x64xf32, #tpu.memory_space<vmem>>, %arg2: memref<64x32xbf16, #tpu.memory_space<vmem>>, %arg3: memref<1x32xf32, #tpu.memory_space<vmem>>, %arg4: memref<16x32xf32, #tpu.memory_space<vmem>>, %arg5: memref<1x32xf32, #tpu.memory_space<vmem>>, %arg6: memref<1x32xf32, #tpu.memory_space<vmem>>, %arg7: memref<16x32xf32, #tpu.memory_space<vmem>>) attributes {dimension_semantics = [#tpu.dimension_semantics<parallel>], iteration_bounds = array<i64: 1>, scalar_prefetch = 0 : i64, scratch_operands = 0 : i64, tpu.core_type = #tpu.core_type<tc>, window_params = [{transform_indices = @transform_0, window_bounds = array<i64: 16, 64>}, {pipeline_mode = #tpu.pipeline_mode<synchronous>, transform_indices = @transform_1, window_bounds = array<i64: 64, 32>}, {pipeline_mode = #tpu.pipeline_mode<synchronous>, transform_indices = @transform_2, window_bounds = array<i64: 1, 32>}, {transform_indices = @transform_3, window_bounds = array<i64: 16, 32>}, {pipeline_mode = #tpu.pipeline_mode<synchronous>, transform_indices = @transform_4, window_bounds = array<i64: 1, 32>}, {pipeline_mode = #tpu.pipeline_mode<synchronous>, transform_indices = @transform_5, window_bounds = array<i64: 1, 32>}, {transform_indices = @transform_6, window_bounds = array<i64: 16, 32>}]} {
    %c0 = arith.constant 0 : index
    %c0_0 = arith.constant 0 : index
    %0 = vector.load %arg1[%c0, %c0_0] : memref<16x64xf32, #tpu.memory_space<vmem>>, vector<16x64xf32>
    %1 = arith.truncf %0 : vector<16x64xf32> to vector<16x64xbf16>
    %c0_1 = arith.constant 0 : index
    %c0_2 = arith.constant 0 : index
    %2 = vector.load %arg2[%c0_1, %c0_2] : memref<64x32xbf16, #tpu.memory_space<vmem>>, vector<64x32xbf16>
    %cst = arith.constant dense<0.000000e+00> : vector<16x32xf32>
    %3 = tpu.matmul %1, %2, %cst {dimension_numbers = #tpu.dot_dimension_numbers<[1], [0], [0], [1], [0, 0, 1, 1], [], []>} : vector<16x64xbf16>, vector<64x32xbf16>, vector<16x32xf32> -> vector<16x32xf32>
    %c0_3 = arith.constant 0 : index
    %c0_4 = arith.constant 0 : index
    %4 = vector.load %arg3[%c0_3, %c0_4] : memref<1x32xf32, #tpu.memory_space<vmem>>, vector<1x32xf32>
    %5 = vector.broadcast %4 : vector<1x32xf32> to vector<16x32xf32>
    %6 = arith.addf %3, %5 : vector<16x32xf32>
    %c0_5 = arith.constant 0 : index
    %c0_6 = arith.constant 0 : index
    %7 = vector.load %arg4[%c0_5, %c0_6] : memref<16x32xf32, #tpu.memory_space<vmem>>, vector<16x32xf32>
    %8 = arith.addf %6, %7 : vector<16x32xf32>
    %cst_7 = arith.constant dense<0.000000e+00> : vector<16xf32>
    %9 = vector.multi_reduction <add>, %8, %cst_7 [1] : vector<16x32xf32> to vector<16xf32>
    %10 = vector.shape_cast %9 : vector<16xf32> to vector<16x1xf32>
    %cst_8 = arith.constant 3.200000e+01 : f32
    %11 = vector.broadcast %cst_8 : f32 to vector<16x1xf32>
    %12 = arith.divf %10, %11 : vector<16x1xf32>
    %13 = vector.broadcast %12 : vector<16x1xf32> to vector<16x32xf32>
    %14 = arith.subf %8, %13 : vector<16x32xf32>
    %15 = arith.mulf %14, %14 : vector<16x32xf32>
    %cst_9 = arith.constant dense<0.000000e+00> : vector<16xf32>
    %16 = vector.multi_reduction <add>, %15, %cst_9 [1] : vector<16x32xf32> to vector<16xf32>
    %17 = vector.shape_cast %16 : vector<16xf32> to vector<16x1xf32>
    %cst_10 = arith.constant 3.200000e+01 : f32
    %18 = vector.broadcast %cst_10 : f32 to vector<16x1xf32>
    %19 = arith.divf %17, %18 : vector<16x1xf32>
    %20 = vector.broadcast %12 : vector<16x1xf32> to vector<16x32xf32>
    %21 = arith.subf %8, %20 : vector<16x32xf32>
    %cst_11 = arith.constant 9.99999996E-13 : f32
    %22 = vector.broadcast %cst_11 : f32 to vector<16x1xf32>
    %23 = arith.addf %19, %22 : vector<16x1xf32>
    %24 = math.rsqrt %23 : vector<16x1xf32>
    %25 = vector.broadcast %24 : vector<16x1xf32> to vector<16x32xf32>
    %26 = arith.mulf %21, %25 : vector<16x32xf32>
    %c0_12 = arith.constant 0 : index
    %c0_13 = arith.constant 0 : index
    %27 = vector.load %arg5[%c0_12, %c0_13] : memref<1x32xf32, #tpu.memory_space<vmem>>, vector<1x32xf32>
    %28 = vector.broadcast %27 : vector<1x32xf32> to vector<16x32xf32>
    %29 = arith.mulf %26, %28 : vector<16x32xf32>
    %c0_14 = arith.constant 0 : index
    %c0_15 = arith.constant 0 : index
    %30 = vector.load %arg6[%c0_14, %c0_15] : memref<1x32xf32, #tpu.memory_space<vmem>>, vector<1x32xf32>
    %31 = vector.broadcast %30 : vector<1x32xf32> to vector<16x32xf32>
    %32 = arith.addf %29, %31 : vector<16x32xf32>
    %c0_16 = arith.constant 0 : index
    %c0_17 = arith.constant 0 : index
    %33 = vector.load %arg7[%c0_16, %c0_17] : memref<16x32xf32, #tpu.memory_space<vmem>>, vector<16x32xf32>
    tpu.vector_store %arg7[%c0_16, %c0_17], %32 {strides = array<i32>} : memref<16x32xf32, #tpu.memory_space<vmem>>, vector<16x32xf32>,
    return
  }
  func.func @transform_0(%arg0: i32) -> (i32, i32) {
    %c0_i32 = arith.constant 0 : i32
    %c0_i32_0 = arith.constant 0 : i32
    return %arg0, %c0_i32 : i32, i32
  }
  func.func @transform_1(%arg0: i32) -> (i32, i32) {
    %c0_i32 = arith.constant 0 : i32
    %c0_i32_0 = arith.constant 0 : i32
    %c0_i32_1 = arith.constant 0 : i32
    return %c0_i32, %c0_i32_0 : i32, i32
  }
  func.func @transform_2(%arg0: i32) -> (i32, i32) {
    %c0_i32 = arith.constant 0 : i32
    %c0_i32_0 = arith.constant 0 : i32
    %c0_i32_1 = arith.constant 0 : i32
    return %c0_i32, %c0_i32_0 : i32, i32
  }
  func.func @transform_3(%arg0: i32) -> (i32, i32) {
    %c0_i32 = arith.constant 0 : i32
    %c0_i32_0 = arith.constant 0 : i32
    return %arg0, %c0_i32 : i32, i32
  }
  func.func @transform_4(%arg0: i32) -> (i32, i32) {
    %c0_i32 = arith.constant 0 : i32
    %c0_i32_0 = arith.constant 0 : i32
    %c0_i32_1 = arith.constant 0 : i32
    return %c0_i32, %c0_i32_0 : i32, i32
  }
  func.func @transform_5(%arg0: i32) -> (i32, i32) {
    %c0_i32 = arith.constant 0 : i32
    %c0_i32_0 = arith.constant 0 : i32
    %c0_i32_1 = arith.constant 0 : i32
    return %c0_i32, %c0_i32_0 : i32, i32
  }
  func.func @transform_6(%arg0: i32) -> (i32, i32) {
    %c0_i32 = arith.constant 0 : i32
    %c0_i32_0 = arith.constant 0 : i32
    return %arg0, %c0_i32 : i32, i32
  }
}

module attributes {stable_mosaic.version = 11 : i64} {
  func.func @_dense_kernel(%arg0: i32, %arg1: i32, %arg2: memref<16x32xf32, #tpu.memory_space<vmem>>, %arg3: memref<32x64xbf16, #tpu.memory_space<vmem>>, %arg4: memref<1x64xf32, #tpu.memory_space<vmem>>, %arg5: memref<16x64xf32, #tpu.memory_space<vmem>>) attributes {dimension_semantics = [#tpu.dimension_semantics<parallel>, #tpu.dimension_semantics<parallel>], iteration_bounds = array<i64: 1, 1>, scalar_prefetch = 0 : i64, scratch_operands = 0 : i64, tpu.core_type = #tpu.core_type<tc>, window_params = [{transform_indices = @transform_0, window_bounds = array<i64: 16, 32>}, {transform_indices = @transform_1, window_bounds = array<i64: 32, 64>}, {transform_indices = @transform_2, window_bounds = array<i64: 1, 64>}, {transform_indices = @transform_3, window_bounds = array<i64: 16, 64>}]} {
    %c0 = arith.constant 0 : index
    %c0_0 = arith.constant 0 : index
    %0 = vector.load %arg2[%c0, %c0_0] : memref<16x32xf32, #tpu.memory_space<vmem>>, vector<16x32xf32>
    %1 = arith.truncf %0 : vector<16x32xf32> to vector<16x32xbf16>
    %c0_1 = arith.constant 0 : index
    %c0_2 = arith.constant 0 : index
    %2 = vector.load %arg3[%c0_1, %c0_2] : memref<32x64xbf16, #tpu.memory_space<vmem>>, vector<32x64xbf16>
    %cst = arith.constant dense<0.000000e+00> : vector<16x64xf32>
    %3 = tpu.matmul %1, %2, %cst {dimension_numbers = #tpu.dot_dimension_numbers<[1], [0], [0], [1], [0, 0, 1, 1], [], []>} : vector<16x32xbf16>, vector<32x64xbf16>, vector<16x64xf32> -> vector<16x64xf32>
    %c0_3 = arith.constant 0 : index
    %c0_4 = arith.constant 0 : index
    %4 = vector.load %arg4[%c0_3, %c0_4] : memref<1x64xf32, #tpu.memory_space<vmem>>, vector<1x64xf32>
    %5 = vector.broadcast %4 : vector<1x64xf32> to vector<16x64xf32>
    %6 = arith.addf %3, %5 : vector<16x64xf32>
    %7 = arith.mulf %6, %6 : vector<16x64xf32>
    %8 = arith.mulf %6, %7 : vector<16x64xf32>
    %cst_5 = arith.constant 4.471500e-02 : f32
    %9 = vector.broadcast %cst_5 : f32 to vector<16x64xf32>
    %10 = arith.mulf %9, %8 : vector<16x64xf32>
    %11 = arith.addf %6, %10 : vector<16x64xf32>
    %cst_6 = arith.constant 0.797884583 : f32
    %12 = vector.broadcast %cst_6 : f32 to vector<16x64xf32>
    %13 = arith.mulf %12, %11 : vector<16x64xf32>
    %14 = math.tanh %13 : vector<16x64xf32>
    %cst_7 = arith.constant 1.000000e+00 : f32
    %15 = vector.broadcast %cst_7 : f32 to vector<16x64xf32>
    %16 = arith.addf %15, %14 : vector<16x64xf32>
    %cst_8 = arith.constant 5.000000e-01 : f32
    %17 = vector.broadcast %cst_8 : f32 to vector<16x64xf32>
    %18 = arith.mulf %17, %16 : vector<16x64xf32>
    %19 = arith.mulf %6, %18 : vector<16x64xf32>
    %c0_9 = arith.constant 0 : index
    %c0_10 = arith.constant 0 : index
    %20 = vector.load %arg5[%c0_9, %c0_10] : memref<16x64xf32, #tpu.memory_space<vmem>>, vector<16x64xf32>
    tpu.vector_store %arg5[%c0_9, %c0_10], %19 {strides = array<i32>} : memref<16x64xf32, #tpu.memory_space<vmem>>, vector<16x64xf32>,
    return
  }
  func.func @transform_0(%arg0: i32, %arg1: i32) -> (i32, i32) {
    %c0_i32 = arith.constant 0 : i32
    %c0_i32_0 = arith.constant 0 : i32
    return %arg0, %c0_i32 : i32, i32
  }
  func.func @transform_1(%arg0: i32, %arg1: i32) -> (i32, i32) {
    %c0_i32 = arith.constant 0 : i32
    %c0_i32_0 = arith.constant 0 : i32
    return %c0_i32, %arg1 : i32, i32
  }
  func.func @transform_2(%arg0: i32, %arg1: i32) -> (i32, i32) {
    %c0_i32 = arith.constant 0 : i32
    %c0_i32_0 = arith.constant 0 : i32
    return %c0_i32, %arg1 : i32, i32
  }
  func.func @transform_3(%arg0: i32, %arg1: i32) -> (i32, i32) {
    %c0_i32 = arith.constant 0 : i32
    return %arg0, %arg1 : i32, i32
  }
}

module attributes {stable_mosaic.version = 11 : i64} {
  func.func @_gru_kernel(%arg0: i32, %arg1: memref<8x2x96xf32, #tpu.memory_space<vmem>>, %arg2: memref<8x2x96xf32, #tpu.memory_space<vmem>>, %arg3: memref<32x96xbf16, #tpu.memory_space<vmem>>, %arg4: memref<32x96xbf16, #tpu.memory_space<vmem>>, %arg5: memref<1x96xf32, #tpu.memory_space<vmem>>, %arg6: memref<1x96xf32, #tpu.memory_space<vmem>>, %arg7: memref<8x2x32xf32, #tpu.memory_space<vmem>>, %arg8: memref<8x2x32xf32, #tpu.memory_space<vmem>>, %arg9: memref<2x32xf32, #tpu.memory_space<vmem>>, %arg10: memref<2x32xf32, #tpu.memory_space<vmem>>, %arg11: memref<2x2x32xf32, #tpu.memory_space<vmem>>) attributes {dimension_semantics = [#tpu.dimension_semantics<arbitrary>], iteration_bounds = array<i64: 1>, scalar_prefetch = 0 : i64, scratch_operands = 1 : i64, tpu.core_type = #tpu.core_type<tc>, window_params = [{transform_indices = @transform_0, window_bounds = array<i64: 8, 2, 96>}, {transform_indices = @transform_1, window_bounds = array<i64: 8, 2, 96>}, {pipeline_mode = #tpu.pipeline_mode<synchronous>, transform_indices = @transform_2, window_bounds = array<i64: 32, 96>}, {pipeline_mode = #tpu.pipeline_mode<synchronous>, transform_indices = @transform_3, window_bounds = array<i64: 32, 96>}, {pipeline_mode = #tpu.pipeline_mode<synchronous>, transform_indices = @transform_4, window_bounds = array<i64: 1, 96>}, {pipeline_mode = #tpu.pipeline_mode<synchronous>, transform_indices = @transform_5, window_bounds = array<i64: 1, 96>}, {transform_indices = @transform_6, window_bounds = array<i64: 8, 2, 32>}, {transform_indices = @transform_7, window_bounds = array<i64: 8, 2, 32>}, {pipeline_mode = #tpu.pipeline_mode<synchronous>, transform_indices = @transform_8, window_bounds = array<i64: 2, 32>}, {pipeline_mode = #tpu.pipeline_mode<synchronous>, transform_indices = @transform_9, window_bounds = array<i64: 2, 32>}]} {
    %c0_i32 = arith.constant 0 : i32
    %0 = arith.cmpi eq, %arg0, %c0_i32 : i32
    %1 = arith.extui %0 : i1 to i32
    %c0_i32_0 = arith.constant 0 : i32
    %2 = arith.cmpi ne, %1, %c0_i32_0 : i32
    scf.if %2 {
      %cst = arith.constant 0.000000e+00 : f32
      %21 = vector.broadcast %cst : f32 to vector<2x2x32xf32>
      %c0_25 = arith.constant 0 : index
      %c0_26 = arith.constant 0 : index
      %c0_27 = arith.constant 0 : index
      %22 = vector.load %arg11[%c0_25, %c0_26, %c0_27] : memref<2x2x32xf32, #tpu.memory_space<vmem>>, vector<2x2x32xf32>
      tpu.vector_store %arg11[%c0_25, %c0_26, %c0_27], %21 {strides = array<i32>} : memref<2x2x32xf32, #tpu.memory_space<vmem>>, vector<2x2x32xf32>,
    } else {
    }
    %c0 = arith.constant 0 : index
    %c0_1 = arith.constant 0 : index
    %3 = vector.load %arg3[%c0, %c0_1] : memref<32x96xbf16, #tpu.memory_space<vmem>>, vector<32x96xbf16>
    %c0_2 = arith.constant 0 : index
    %c0_3 = arith.constant 0 : index
    %4 = vector.load %arg4[%c0_2, %c0_3] : memref<32x96xbf16, #tpu.memory_space<vmem>>, vector<32x96xbf16>
    %c0_4 = arith.constant 0 : index
    %c0_5 = arith.constant 0 : index
    %5 = vector.load %arg5[%c0_4, %c0_5] : memref<1x96xf32, #tpu.memory_space<vmem>>, vector<1x96xf32>
    %c0_6 = arith.constant 0 : index
    %c0_7 = arith.constant 0 : index
    %6 = vector.load %arg6[%c0_6, %c0_7] : memref<1x96xf32, #tpu.memory_space<vmem>>, vector<1x96xf32>
    %c0_8 = arith.constant 0 : index
    %c0_9 = arith.constant 0 : index
    %c0_10 = arith.constant 0 : index
    %7 = vector.load %arg11[%c0_8, %c0_9, %c0_10] : memref<2x2x32xf32, #tpu.memory_space<vmem>>, vector<1x2x32xf32>
    %8 = vector.shape_cast %7 : vector<1x2x32xf32> to vector<2x32xf32>
    %c1 = arith.constant 1 : index
    %c0_11 = arith.constant 0 : index
    %c0_12 = arith.constant 0 : index
    %9 = vector.load %arg11[%c1, %c0_11, %c0_12] : memref<2x2x32xf32, #tpu.memory_space<vmem>>, vector<1x2x32xf32>
    %10 = vector.shape_cast %9 : vector<1x2x32xf32> to vector<2x32xf32>
    %c0_i32_13 = arith.constant 0 : i32
    %c8_i32 = arith.constant 8 : i32
    %11 = arith.addi %c0_i32_13, %c8_i32 : i32
    %c1_i32 = arith.constant 1 : i32
    %12:2 = scf.for %arg12 = %c0_i32_13 to %11 step %c1_i32 iter_args(%arg13 = %8, %arg14 = %10) -> (vector<2x32xf32>, vector<2x32xf32>)  : i32 {
      %c7_i32 = arith.constant 7 : i32
      %21 = arith.subi %c7_i32, %arg12 : i32
      %22 = arith.index_cast %arg12 : i32 to index
      %c0_25 = arith.constant 0 : index
      %c0_26 = arith.constant 0 : index
      %23 = vector.load %arg1[%22, %c0_25, %c0_26] : memref<8x2x96xf32, #tpu.memory_space<vmem>>, vector<1x2x96xf32>
      %24 = vector.shape_cast %23 : vector<1x2x96xf32> to vector<2x96xf32>
      %25 = arith.truncf %arg13 : vector<2x32xf32> to vector<2x32xbf16>
      %cst = arith.constant dense<0.000000e+00> : vector<2x96xf32>
      %26 = tpu.matmul %25, %3, %cst {dimension_numbers = #tpu.dot_dimension_numbers<[1], [0], [0], [1], [0, 0, 1, 1], [], []>} : vector<2x32xbf16>, vector<32x96xbf16>, vector<2x96xf32> -> vector<2x96xf32>
      %27 = vector.broadcast %5 : vector<1x96xf32> to vector<2x96xf32>
      %28 = arith.addf %26, %27 : vector<2x96xf32>
      %29 = vector.extract_strided_slice %24 {offsets = [0, 0], sizes = [2, 32], strides = [1, 1]} : vector<2x96xf32> to vector<2x32xf32>
      %30 = vector.extract_strided_slice %28 {offsets = [0, 0], sizes = [2, 32], strides = [1, 1]} : vector<2x96xf32> to vector<2x32xf32>
      %31 = arith.addf %29, %30 : vector<2x32xf32>
      %32 = arith.negf %31 : vector<2x32xf32>
      %33 = math.exp %32 : vector<2x32xf32>
      %cst_27 = arith.constant 1.000000e+00 : f32
      %34 = vector.broadcast %cst_27 : f32 to vector<2x32xf32>
      %35 = arith.addf %34, %33 : vector<2x32xf32>
      %36 = arith.divf %34, %35 : vector<2x32xf32>
      %37 = vector.extract_strided_slice %24 {offsets = [0, 32], sizes = [2, 32], strides = [1, 1]} : vector<2x96xf32> to vector<2x32xf32>
      %38 = vector.extract_strided_slice %28 {offsets = [0, 32], sizes = [2, 32], strides = [1, 1]} : vector<2x96xf32> to vector<2x32xf32>
      %39 = arith.addf %37, %38 : vector<2x32xf32>
      %40 = arith.negf %39 : vector<2x32xf32>
      %41 = math.exp %40 : vector<2x32xf32>
      %cst_28 = arith.constant 1.000000e+00 : f32
      %42 = vector.broadcast %cst_28 : f32 to vector<2x32xf32>
      %43 = arith.addf %42, %41 : vector<2x32xf32>
      %44 = arith.divf %42, %43 : vector<2x32xf32>
      %45 = vector.extract_strided_slice %24 {offsets = [0, 64], sizes = [2, 32], strides = [1, 1]} : vector<2x96xf32> to vector<2x32xf32>
      %46 = vector.extract_strided_slice %28 {offsets = [0, 64], sizes = [2, 32], strides = [1, 1]} : vector<2x96xf32> to vector<2x32xf32>
      %47 = arith.mulf %36, %46 : vector<2x32xf32>
      %48 = arith.addf %45, %47 : vector<2x32xf32>
      %49 = math.tanh %48 : vector<2x32xf32>
      %cst_29 = arith.constant 1.000000e+00 : f32
      %50 = vector.broadcast %cst_29 : f32 to vector<2x32xf32>
      %51 = arith.subf %50, %44 : vector<2x32xf32>
      %52 = arith.mulf %51, %49 : vector<2x32xf32>
      %53 = arith.mulf %44, %arg13 : vector<2x32xf32>
      %54 = arith.addf %52, %53 : vector<2x32xf32>
      %55 = arith.index_cast %21 : i32 to index
      %c0_30 = arith.constant 0 : index
      %c0_31 = arith.constant 0 : index
      %56 = vector.load %arg2[%55, %c0_30, %c0_31] : memref<8x2x96xf32, #tpu.memory_space<vmem>>, vector<1x2x96xf32>
      %57 = vector.shape_cast %56 : vector<1x2x96xf32> to vector<2x96xf32>
      %58 = arith.truncf %arg14 : vector<2x32xf32> to vector<2x32xbf16>
      %cst_32 = arith.constant dense<0.000000e+00> : vector<2x96xf32>
      %59 = tpu.matmul %58, %4, %cst_32 {dimension_numbers = #tpu.dot_dimension_numbers<[1], [0], [0], [1], [0, 0, 1, 1], [], []>} : vector<2x32xbf16>, vector<32x96xbf16>, vector<2x96xf32> -> vector<2x96xf32>
      %60 = vector.broadcast %6 : vector<1x96xf32> to vector<2x96xf32>
      %61 = arith.addf %59, %60 : vector<2x96xf32>
      %62 = vector.extract_strided_slice %57 {offsets = [0, 0], sizes = [2, 32], strides = [1, 1]} : vector<2x96xf32> to vector<2x32xf32>
      %63 = vector.extract_strided_slice %61 {offsets = [0, 0], sizes = [2, 32], strides = [1, 1]} : vector<2x96xf32> to vector<2x32xf32>
      %64 = arith.addf %62, %63 : vector<2x32xf32>
      %65 = arith.negf %64 : vector<2x32xf32>
      %66 = math.exp %65 : vector<2x32xf32>
      %cst_33 = arith.constant 1.000000e+00 : f32
      %67 = vector.broadcast %cst_33 : f32 to vector<2x32xf32>
      %68 = arith.addf %67, %66 : vector<2x32xf32>
      %69 = arith.divf %67, %68 : vector<2x32xf32>
      %70 = vector.extract_strided_slice %57 {offsets = [0, 32], sizes = [2, 32], strides = [1, 1]} : vector<2x96xf32> to vector<2x32xf32>
      %71 = vector.extract_strided_slice %61 {offsets = [0, 32], sizes = [2, 32], strides = [1, 1]} : vector<2x96xf32> to vector<2x32xf32>
      %72 = arith.addf %70, %71 : vector<2x32xf32>
      %73 = arith.negf %72 : vector<2x32xf32>
      %74 = math.exp %73 : vector<2x32xf32>
      %cst_34 = arith.constant 1.000000e+00 : f32
      %75 = vector.broadcast %cst_34 : f32 to vector<2x32xf32>
      %76 = arith.addf %75, %74 : vector<2x32xf32>
      %77 = arith.divf %75, %76 : vector<2x32xf32>
      %78 = vector.extract_strided_slice %57 {offsets = [0, 64], sizes = [2, 32], strides = [1, 1]} : vector<2x96xf32> to vector<2x32xf32>
      %79 = vector.extract_strided_slice %61 {offsets = [0, 64], sizes = [2, 32], strides = [1, 1]} : vector<2x96xf32> to vector<2x32xf32>
      %80 = arith.mulf %69, %79 : vector<2x32xf32>
      %81 = arith.addf %78, %80 : vector<2x32xf32>
      %82 = math.tanh %81 : vector<2x32xf32>
      %cst_35 = arith.constant 1.000000e+00 : f32
      %83 = vector.broadcast %cst_35 : f32 to vector<2x32xf32>
      %84 = arith.subf %83, %77 : vector<2x32xf32>
      %85 = arith.mulf %84, %82 : vector<2x32xf32>
      %86 = arith.mulf %77, %arg14 : vector<2x32xf32>
      %87 = arith.addf %85, %86 : vector<2x32xf32>
      %88 = arith.index_cast %arg12 : i32 to index
      %c0_36 = arith.constant 0 : index
      %c0_37 = arith.constant 0 : index
      %89 = vector.load %arg7[%88, %c0_36, %c0_37] : memref<8x2x32xf32, #tpu.memory_space<vmem>>, vector<1x2x32xf32>
      %90 = vector.shape_cast %89 : vector<1x2x32xf32> to vector<2x32xf32>
      %91 = vector.shape_cast %54 : vector<2x32xf32> to vector<1x2x32xf32>
      tpu.vector_store %arg7[%88, %c0_36, %c0_37], %91 {strides = array<i32>} : memref<8x2x32xf32, #tpu.memory_space<vmem>>, vector<1x2x32xf32>,
      %92 = arith.index_cast %21 : i32 to index
      %c0_38 = arith.constant 0 : index
      %c0_39 = arith.constant 0 : index
      %93 = vector.load %arg8[%92, %c0_38, %c0_39] : memref<8x2x32xf32, #tpu.memory_space<vmem>>, vector<1x2x32xf32>
      %94 = vector.shape_cast %93 : vector<1x2x32xf32> to vector<2x32xf32>
      %95 = vector.shape_cast %87 : vector<2x32xf32> to vector<1x2x32xf32>
      tpu.vector_store %arg8[%92, %c0_38, %c0_39], %95 {strides = array<i32>} : memref<8x2x32xf32, #tpu.memory_space<vmem>>, vector<1x2x32xf32>,
      scf.yield %54, %87 : vector<2x32xf32>, vector<2x32xf32>
    }
    %c8_i32_14 = arith.constant 8 : i32
    %c0_15 = arith.constant 0 : index
    %c0_16 = arith.constant 0 : index
    %c0_17 = arith.constant 0 : index
    %13 = vector.load %arg11[%c0_15, %c0_16, %c0_17] : memref<2x2x32xf32, #tpu.memory_space<vmem>>, vector<1x2x32xf32>
    %14 = vector.shape_cast %13 : vector<1x2x32xf32> to vector<2x32xf32>
    %15 = vector.shape_cast %12#0 : vector<2x32xf32> to vector<1x2x32xf32>
    tpu.vector_store %arg11[%c0_15, %c0_16, %c0_17], %15 {strides = array<i32>} : memref<2x2x32xf32, #tpu.memory_space<vmem>>, vector<1x2x32xf32>,
    %c1_18 = arith.constant 1 : index
    %c0_19 = arith.constant 0 : index
    %c0_20 = arith.constant 0 : index
    %16 = vector.load %arg11[%c1_18, %c0_19, %c0_20] : memref<2x2x32xf32, #tpu.memory_space<vmem>>, vector<1x2x32xf32>
    %17 = vector.shape_cast %16 : vector<1x2x32xf32> to vector<2x32xf32>
    %18 = vector.shape_cast %12#1 : vector<2x32xf32> to vector<1x2x32xf32>
    tpu.vector_store %arg11[%c1_18, %c0_19, %c0_20], %18 {strides = array<i32>} : memref<2x2x32xf32, #tpu.memory_space<vmem>>, vector<1x2x32xf32>,
    %c0_21 = arith.constant 0 : index
    %c0_22 = arith.constant 0 : index
    %19 = vector.load %arg9[%c0_21, %c0_22] : memref<2x32xf32, #tpu.memory_space<vmem>>, vector<2x32xf32>
    tpu.vector_store %arg9[%c0_21, %c0_22], %12#0 {strides = array<i32>} : memref<2x32xf32, #tpu.memory_space<vmem>>, vector<2x32xf32>,
    %c0_23 = arith.constant 0 : index
    %c0_24 = arith.constant 0 : index
    %20 = vector.load %arg10[%c0_23, %c0_24] : memref<2x32xf32, #tpu.memory_space<vmem>>, vector<2x32xf32>
    tpu.vector_store %arg10[%c0_23, %c0_24], %12#1 {strides = array<i32>} : memref<2x32xf32, #tpu.memory_space<vmem>>, vector<2x32xf32>,
    return
  }
  func.func @transform_0(%arg0: i32) -> (i32, i32, i32) {
    %c0_i32 = arith.constant 0 : i32
    %c0_i32_0 = arith.constant 0 : i32
    %c0_i32_1 = arith.constant 0 : i32
    return %arg0, %c0_i32, %c0_i32_0 : i32, i32, i32
  }
  func.func @transform_1(%arg0: i32) -> (i32, i32, i32) {
    %c0_i32 = arith.constant 0 : i32
    %0 = arith.subi %c0_i32, %arg0 : i32
    %c0_i32_0 = arith.constant 0 : i32
    %c0_i32_1 = arith.constant 0 : i32
    %c0_i32_2 = arith.constant 0 : i32
    return %0, %c0_i32_0, %c0_i32_1 : i32, i32, i32
  }
  func.func @transform_2(%arg0: i32) -> (i32, i32) {
    %c0_i32 = arith.constant 0 : i32
    %c0_i32_0 = arith.constant 0 : i32
    %c0_i32_1 = arith.constant 0 : i32
    return %c0_i32, %c0_i32_0 : i32, i32
  }
  func.func @transform_3(%arg0: i32) -> (i32, i32) {
    %c0_i32 = arith.constant 0 : i32
    %c0_i32_0 = arith.constant 0 : i32
    %c0_i32_1 = arith.constant 0 : i32
    return %c0_i32, %c0_i32_0 : i32, i32
  }
  func.func @transform_4(%arg0: i32) -> (i32, i32) {
    %c0_i32 = arith.constant 0 : i32
    %c0_i32_0 = arith.constant 0 : i32
    %c0_i32_1 = arith.constant 0 : i32
    return %c0_i32, %c0_i32_0 : i32, i32
  }
  func.func @transform_5(%arg0: i32) -> (i32, i32) {
    %c0_i32 = arith.constant 0 : i32
    %c0_i32_0 = arith.constant 0 : i32
    %c0_i32_1 = arith.constant 0 : i32
    return %c0_i32, %c0_i32_0 : i32, i32
  }
  func.func @transform_6(%arg0: i32) -> (i32, i32, i32) {
    %c0_i32 = arith.constant 0 : i32
    %c0_i32_0 = arith.constant 0 : i32
    %c0_i32_1 = arith.constant 0 : i32
    return %arg0, %c0_i32, %c0_i32_0 : i32, i32, i32
  }
  func.func @transform_7(%arg0: i32) -> (i32, i32, i32) {
    %c0_i32 = arith.constant 0 : i32
    %0 = arith.subi %c0_i32, %arg0 : i32
    %c0_i32_0 = arith.constant 0 : i32
    %c0_i32_1 = arith.constant 0 : i32
    %c0_i32_2 = arith.constant 0 : i32
    return %0, %c0_i32_0, %c0_i32_1 : i32, i32, i32
  }
  func.func @transform_8(%arg0: i32) -> (i32, i32) {
    %c0_i32 = arith.constant 0 : i32
    %c0_i32_0 = arith.constant 0 : i32
    %c0_i32_1 = arith.constant 0 : i32
    return %c0_i32, %c0_i32_0 : i32, i32
  }
  func.func @transform_9(%arg0: i32) -> (i32, i32) {
    %c0_i32 = arith.constant 0 : i32
    %c0_i32_0 = arith.constant 0 : i32
    %c0_i32_1 = arith.constant 0 : i32
    return %c0_i32, %c0_i32_0 : i32, i32
  }
}

module attributes {stable_mosaic.version = 11 : i64} {
  func.func @_dense2_kernel(%arg0: i32, %arg1: i32, %arg2: memref<16x32xf32, #tpu.memory_space<vmem>>, %arg3: memref<16x32xf32, #tpu.memory_space<vmem>>, %arg4: memref<32x96xbf16, #tpu.memory_space<vmem>>, %arg5: memref<32x96xbf16, #tpu.memory_space<vmem>>, %arg6: memref<1x96xf32, #tpu.memory_space<vmem>>, %arg7: memref<16x96xf32, #tpu.memory_space<vmem>>) attributes {dimension_semantics = [#tpu.dimension_semantics<parallel>, #tpu.dimension_semantics<parallel>], iteration_bounds = array<i64: 1, 1>, scalar_prefetch = 0 : i64, scratch_operands = 0 : i64, tpu.core_type = #tpu.core_type<tc>, window_params = [{transform_indices = @transform_0, window_bounds = array<i64: 16, 32>}, {transform_indices = @transform_1, window_bounds = array<i64: 16, 32>}, {transform_indices = @transform_2, window_bounds = array<i64: 32, 96>}, {transform_indices = @transform_3, window_bounds = array<i64: 32, 96>}, {transform_indices = @transform_4, window_bounds = array<i64: 1, 96>}, {transform_indices = @transform_5, window_bounds = array<i64: 16, 96>}]} {
    %c0 = arith.constant 0 : index
    %c0_0 = arith.constant 0 : index
    %0 = vector.load %arg2[%c0, %c0_0] : memref<16x32xf32, #tpu.memory_space<vmem>>, vector<16x32xf32>
    %1 = arith.truncf %0 : vector<16x32xf32> to vector<16x32xbf16>
    %c0_1 = arith.constant 0 : index
    %c0_2 = arith.constant 0 : index
    %2 = vector.load %arg4[%c0_1, %c0_2] : memref<32x96xbf16, #tpu.memory_space<vmem>>, vector<32x96xbf16>
    %cst = arith.constant dense<0.000000e+00> : vector<16x96xf32>
    %3 = tpu.matmul %1, %2, %cst {dimension_numbers = #tpu.dot_dimension_numbers<[1], [0], [0], [1], [0, 0, 1, 1], [], []>} : vector<16x32xbf16>, vector<32x96xbf16>, vector<16x96xf32> -> vector<16x96xf32>
    %c0_3 = arith.constant 0 : index
    %c0_4 = arith.constant 0 : index
    %4 = vector.load %arg3[%c0_3, %c0_4] : memref<16x32xf32, #tpu.memory_space<vmem>>, vector<16x32xf32>
    %5 = arith.truncf %4 : vector<16x32xf32> to vector<16x32xbf16>
    %c0_5 = arith.constant 0 : index
    %c0_6 = arith.constant 0 : index
    %6 = vector.load %arg5[%c0_5, %c0_6] : memref<32x96xbf16, #tpu.memory_space<vmem>>, vector<32x96xbf16>
    %cst_7 = arith.constant dense<0.000000e+00> : vector<16x96xf32>
    %7 = tpu.matmul %5, %6, %cst_7 {dimension_numbers = #tpu.dot_dimension_numbers<[1], [0], [0], [1], [0, 0, 1, 1], [], []>} : vector<16x32xbf16>, vector<32x96xbf16>, vector<16x96xf32> -> vector<16x96xf32>
    %8 = arith.addf %3, %7 : vector<16x96xf32>
    %c0_8 = arith.constant 0 : index
    %c0_9 = arith.constant 0 : index
    %9 = vector.load %arg6[%c0_8, %c0_9] : memref<1x96xf32, #tpu.memory_space<vmem>>, vector<1x96xf32>
    %10 = vector.broadcast %9 : vector<1x96xf32> to vector<16x96xf32>
    %11 = arith.addf %8, %10 : vector<16x96xf32>
    %c0_10 = arith.constant 0 : index
    %c0_11 = arith.constant 0 : index
    %12 = vector.load %arg7[%c0_10, %c0_11] : memref<16x96xf32, #tpu.memory_space<vmem>>, vector<16x96xf32>
    tpu.vector_store %arg7[%c0_10, %c0_11], %11 {strides = array<i32>} : memref<16x96xf32, #tpu.memory_space<vmem>>, vector<16x96xf32>,
    return
  }
  func.func @transform_0(%arg0: i32, %arg1: i32) -> (i32, i32) {
    %c0_i32 = arith.constant 0 : i32
    %c0_i32_0 = arith.constant 0 : i32
    return %arg0, %c0_i32 : i32, i32
  }
  func.func @transform_1(%arg0: i32, %arg1: i32) -> (i32, i32) {
    %c0_i32 = arith.constant 0 : i32
    %c0_i32_0 = arith.constant 0 : i32
    return %arg0, %c0_i32 : i32, i32
  }
  func.func @transform_2(%arg0: i32, %arg1: i32) -> (i32, i32) {
    %c0_i32 = arith.constant 0 : i32
    %c0_i32_0 = arith.constant 0 : i32
    return %c0_i32, %arg1 : i32, i32
  }
  func.func @transform_3(%arg0: i32, %arg1: i32) -> (i32, i32) {
    %c0_i32 = arith.constant 0 : i32
    %c0_i32_0 = arith.constant 0 : i32
    return %c0_i32, %arg1 : i32, i32
  }
  func.func @transform_4(%arg0: i32, %arg1: i32) -> (i32, i32) {
    %c0_i32 = arith.constant 0 : i32
    %c0_i32_0 = arith.constant 0 : i32
    return %c0_i32, %arg1 : i32, i32
  }
  func.func @transform_5(%arg0: i32, %arg1: i32) -> (i32, i32) {
    %c0_i32 = arith.constant 0 : i32
    return %arg0, %arg1 : i32, i32
  }
}

module attributes {stable_mosaic.version = 11 : i64} {
  func.func @_gru_kernel(%arg0: i32, %arg1: memref<8x2x96xf32, #tpu.memory_space<vmem>>, %arg2: memref<8x2x96xf32, #tpu.memory_space<vmem>>, %arg3: memref<32x96xbf16, #tpu.memory_space<vmem>>, %arg4: memref<32x96xbf16, #tpu.memory_space<vmem>>, %arg5: memref<1x96xf32, #tpu.memory_space<vmem>>, %arg6: memref<1x96xf32, #tpu.memory_space<vmem>>, %arg7: memref<2x32xf32, #tpu.memory_space<vmem>>, %arg8: memref<2x32xf32, #tpu.memory_space<vmem>>, %arg9: memref<2x2x32xf32, #tpu.memory_space<vmem>>) attributes {dimension_semantics = [#tpu.dimension_semantics<arbitrary>], iteration_bounds = array<i64: 1>, scalar_prefetch = 0 : i64, scratch_operands = 1 : i64, tpu.core_type = #tpu.core_type<tc>, window_params = [{transform_indices = @transform_0, window_bounds = array<i64: 8, 2, 96>}, {transform_indices = @transform_1, window_bounds = array<i64: 8, 2, 96>}, {pipeline_mode = #tpu.pipeline_mode<synchronous>, transform_indices = @transform_2, window_bounds = array<i64: 32, 96>}, {pipeline_mode = #tpu.pipeline_mode<synchronous>, transform_indices = @transform_3, window_bounds = array<i64: 32, 96>}, {pipeline_mode = #tpu.pipeline_mode<synchronous>, transform_indices = @transform_4, window_bounds = array<i64: 1, 96>}, {pipeline_mode = #tpu.pipeline_mode<synchronous>, transform_indices = @transform_5, window_bounds = array<i64: 1, 96>}, {pipeline_mode = #tpu.pipeline_mode<synchronous>, transform_indices = @transform_6, window_bounds = array<i64: 2, 32>}, {pipeline_mode = #tpu.pipeline_mode<synchronous>, transform_indices = @transform_7, window_bounds = array<i64: 2, 32>}]} {
    %c0_i32 = arith.constant 0 : i32
    %0 = arith.cmpi eq, %arg0, %c0_i32 : i32
    %1 = arith.extui %0 : i1 to i32
    %c0_i32_0 = arith.constant 0 : i32
    %2 = arith.cmpi ne, %1, %c0_i32_0 : i32
    scf.if %2 {
      %cst = arith.constant 0.000000e+00 : f32
      %21 = vector.broadcast %cst : f32 to vector<2x2x32xf32>
      %c0_25 = arith.constant 0 : index
      %c0_26 = arith.constant 0 : index
      %c0_27 = arith.constant 0 : index
      %22 = vector.load %arg9[%c0_25, %c0_26, %c0_27] : memref<2x2x32xf32, #tpu.memory_space<vmem>>, vector<2x2x32xf32>
      tpu.vector_store %arg9[%c0_25, %c0_26, %c0_27], %21 {strides = array<i32>} : memref<2x2x32xf32, #tpu.memory_space<vmem>>, vector<2x2x32xf32>,
    } else {
    }
    %c0 = arith.constant 0 : index
    %c0_1 = arith.constant 0 : index
    %3 = vector.load %arg3[%c0, %c0_1] : memref<32x96xbf16, #tpu.memory_space<vmem>>, vector<32x96xbf16>
    %c0_2 = arith.constant 0 : index
    %c0_3 = arith.constant 0 : index
    %4 = vector.load %arg4[%c0_2, %c0_3] : memref<32x96xbf16, #tpu.memory_space<vmem>>, vector<32x96xbf16>
    %c0_4 = arith.constant 0 : index
    %c0_5 = arith.constant 0 : index
    %5 = vector.load %arg5[%c0_4, %c0_5] : memref<1x96xf32, #tpu.memory_space<vmem>>, vector<1x96xf32>
    %c0_6 = arith.constant 0 : index
    %c0_7 = arith.constant 0 : index
    %6 = vector.load %arg6[%c0_6, %c0_7] : memref<1x96xf32, #tpu.memory_space<vmem>>, vector<1x96xf32>
    %c0_8 = arith.constant 0 : index
    %c0_9 = arith.constant 0 : index
    %c0_10 = arith.constant 0 : index
    %7 = vector.load %arg9[%c0_8, %c0_9, %c0_10] : memref<2x2x32xf32, #tpu.memory_space<vmem>>, vector<1x2x32xf32>
    %8 = vector.shape_cast %7 : vector<1x2x32xf32> to vector<2x32xf32>
    %c1 = arith.constant 1 : index
    %c0_11 = arith.constant 0 : index
    %c0_12 = arith.constant 0 : index
    %9 = vector.load %arg9[%c1, %c0_11, %c0_12] : memref<2x2x32xf32, #tpu.memory_space<vmem>>, vector<1x2x32xf32>
    %10 = vector.shape_cast %9 : vector<1x2x32xf32> to vector<2x32xf32>
    %c0_i32_13 = arith.constant 0 : i32
    %c8_i32 = arith.constant 8 : i32
    %11 = arith.addi %c0_i32_13, %c8_i32 : i32
    %c1_i32 = arith.constant 1 : i32
    %12:2 = scf.for %arg10 = %c0_i32_13 to %11 step %c1_i32 iter_args(%arg11 = %8, %arg12 = %10) -> (vector<2x32xf32>, vector<2x32xf32>)  : i32 {
      %c7_i32 = arith.constant 7 : i32
      %21 = arith.subi %c7_i32, %arg10 : i32
      %22 = arith.index_cast %arg10 : i32 to index
      %c0_25 = arith.constant 0 : index
      %c0_26 = arith.constant 0 : index
      %23 = vector.load %arg1[%22, %c0_25, %c0_26] : memref<8x2x96xf32, #tpu.memory_space<vmem>>, vector<1x2x96xf32>
      %24 = vector.shape_cast %23 : vector<1x2x96xf32> to vector<2x96xf32>
      %25 = arith.truncf %arg11 : vector<2x32xf32> to vector<2x32xbf16>
      %cst = arith.constant dense<0.000000e+00> : vector<2x96xf32>
      %26 = tpu.matmul %25, %3, %cst {dimension_numbers = #tpu.dot_dimension_numbers<[1], [0], [0], [1], [0, 0, 1, 1], [], []>} : vector<2x32xbf16>, vector<32x96xbf16>, vector<2x96xf32> -> vector<2x96xf32>
      %27 = vector.broadcast %5 : vector<1x96xf32> to vector<2x96xf32>
      %28 = arith.addf %26, %27 : vector<2x96xf32>
      %29 = vector.extract_strided_slice %24 {offsets = [0, 0], sizes = [2, 32], strides = [1, 1]} : vector<2x96xf32> to vector<2x32xf32>
      %30 = vector.extract_strided_slice %28 {offsets = [0, 0], sizes = [2, 32], strides = [1, 1]} : vector<2x96xf32> to vector<2x32xf32>
      %31 = arith.addf %29, %30 : vector<2x32xf32>
      %32 = arith.negf %31 : vector<2x32xf32>
      %33 = math.exp %32 : vector<2x32xf32>
      %cst_27 = arith.constant 1.000000e+00 : f32
      %34 = vector.broadcast %cst_27 : f32 to vector<2x32xf32>
      %35 = arith.addf %34, %33 : vector<2x32xf32>
      %36 = arith.divf %34, %35 : vector<2x32xf32>
      %37 = vector.extract_strided_slice %24 {offsets = [0, 32], sizes = [2, 32], strides = [1, 1]} : vector<2x96xf32> to vector<2x32xf32>
      %38 = vector.extract_strided_slice %28 {offsets = [0, 32], sizes = [2, 32], strides = [1, 1]} : vector<2x96xf32> to vector<2x32xf32>
      %39 = arith.addf %37, %38 : vector<2x32xf32>
      %40 = arith.negf %39 : vector<2x32xf32>
      %41 = math.exp %40 : vector<2x32xf32>
      %cst_28 = arith.constant 1.000000e+00 : f32
      %42 = vector.broadcast %cst_28 : f32 to vector<2x32xf32>
      %43 = arith.addf %42, %41 : vector<2x32xf32>
      %44 = arith.divf %42, %43 : vector<2x32xf32>
      %45 = vector.extract_strided_slice %24 {offsets = [0, 64], sizes = [2, 32], strides = [1, 1]} : vector<2x96xf32> to vector<2x32xf32>
      %46 = vector.extract_strided_slice %28 {offsets = [0, 64], sizes = [2, 32], strides = [1, 1]} : vector<2x96xf32> to vector<2x32xf32>
      %47 = arith.mulf %36, %46 : vector<2x32xf32>
      %48 = arith.addf %45, %47 : vector<2x32xf32>
      %49 = math.tanh %48 : vector<2x32xf32>
      %cst_29 = arith.constant 1.000000e+00 : f32
      %50 = vector.broadcast %cst_29 : f32 to vector<2x32xf32>
      %51 = arith.subf %50, %44 : vector<2x32xf32>
      %52 = arith.mulf %51, %49 : vector<2x32xf32>
      %53 = arith.mulf %44, %arg11 : vector<2x32xf32>
      %54 = arith.addf %52, %53 : vector<2x32xf32>
      %55 = arith.index_cast %21 : i32 to index
      %c0_30 = arith.constant 0 : index
      %c0_31 = arith.constant 0 : index
      %56 = vector.load %arg2[%55, %c0_30, %c0_31] : memref<8x2x96xf32, #tpu.memory_space<vmem>>, vector<1x2x96xf32>
      %57 = vector.shape_cast %56 : vector<1x2x96xf32> to vector<2x96xf32>
      %58 = arith.truncf %arg12 : vector<2x32xf32> to vector<2x32xbf16>
      %cst_32 = arith.constant dense<0.000000e+00> : vector<2x96xf32>
      %59 = tpu.matmul %58, %4, %cst_32 {dimension_numbers = #tpu.dot_dimension_numbers<[1], [0], [0], [1], [0, 0, 1, 1], [], []>} : vector<2x32xbf16>, vector<32x96xbf16>, vector<2x96xf32> -> vector<2x96xf32>
      %60 = vector.broadcast %6 : vector<1x96xf32> to vector<2x96xf32>
      %61 = arith.addf %59, %60 : vector<2x96xf32>
      %62 = vector.extract_strided_slice %57 {offsets = [0, 0], sizes = [2, 32], strides = [1, 1]} : vector<2x96xf32> to vector<2x32xf32>
      %63 = vector.extract_strided_slice %61 {offsets = [0, 0], sizes = [2, 32], strides = [1, 1]} : vector<2x96xf32> to vector<2x32xf32>
      %64 = arith.addf %62, %63 : vector<2x32xf32>
      %65 = arith.negf %64 : vector<2x32xf32>
      %66 = math.exp %65 : vector<2x32xf32>
      %cst_33 = arith.constant 1.000000e+00 : f32
      %67 = vector.broadcast %cst_33 : f32 to vector<2x32xf32>
      %68 = arith.addf %67, %66 : vector<2x32xf32>
      %69 = arith.divf %67, %68 : vector<2x32xf32>
      %70 = vector.extract_strided_slice %57 {offsets = [0, 32], sizes = [2, 32], strides = [1, 1]} : vector<2x96xf32> to vector<2x32xf32>
      %71 = vector.extract_strided_slice %61 {offsets = [0, 32], sizes = [2, 32], strides = [1, 1]} : vector<2x96xf32> to vector<2x32xf32>
      %72 = arith.addf %70, %71 : vector<2x32xf32>
      %73 = arith.negf %72 : vector<2x32xf32>
      %74 = math.exp %73 : vector<2x32xf32>
      %cst_34 = arith.constant 1.000000e+00 : f32
      %75 = vector.broadcast %cst_34 : f32 to vector<2x32xf32>
      %76 = arith.addf %75, %74 : vector<2x32xf32>
      %77 = arith.divf %75, %76 : vector<2x32xf32>
      %78 = vector.extract_strided_slice %57 {offsets = [0, 64], sizes = [2, 32], strides = [1, 1]} : vector<2x96xf32> to vector<2x32xf32>
      %79 = vector.extract_strided_slice %61 {offsets = [0, 64], sizes = [2, 32], strides = [1, 1]} : vector<2x96xf32> to vector<2x32xf32>
      %80 = arith.mulf %69, %79 : vector<2x32xf32>
      %81 = arith.addf %78, %80 : vector<2x32xf32>
      %82 = math.tanh %81 : vector<2x32xf32>
      %cst_35 = arith.constant 1.000000e+00 : f32
      %83 = vector.broadcast %cst_35 : f32 to vector<2x32xf32>
      %84 = arith.subf %83, %77 : vector<2x32xf32>
      %85 = arith.mulf %84, %82 : vector<2x32xf32>
      %86 = arith.mulf %77, %arg12 : vector<2x32xf32>
      %87 = arith.addf %85, %86 : vector<2x32xf32>
      scf.yield %54, %87 : vector<2x32xf32>, vector<2x32xf32>
    }
    %c8_i32_14 = arith.constant 8 : i32
    %c0_15 = arith.constant 0 : index
    %c0_16 = arith.constant 0 : index
    %c0_17 = arith.constant 0 : index
    %13 = vector.load %arg9[%c0_15, %c0_16, %c0_17] : memref<2x2x32xf32, #tpu.memory_space<vmem>>, vector<1x2x32xf32>
    %14 = vector.shape_cast %13 : vector<1x2x32xf32> to vector<2x32xf32>
    %15 = vector.shape_cast %12#0 : vector<2x32xf32> to vector<1x2x32xf32>
    tpu.vector_store %arg9[%c0_15, %c0_16, %c0_17], %15 {strides = array<i32>} : memref<2x2x32xf32, #tpu.memory_space<vmem>>, vector<1x2x32xf32>,
    %c1_18 = arith.constant 1 : index
    %c0_19 = arith.constant 0 : index
    %c0_20 = arith.constant 0 : index
    %16 = vector.load %arg9[%c1_18, %c0_19, %c0_20] : memref<2x2x32xf32, #tpu.memory_space<vmem>>, vector<1x2x32xf32>
    %17 = vector.shape_cast %16 : vector<1x2x32xf32> to vector<2x32xf32>
    %18 = vector.shape_cast %12#1 : vector<2x32xf32> to vector<1x2x32xf32>
    tpu.vector_store %arg9[%c1_18, %c0_19, %c0_20], %18 {strides = array<i32>} : memref<2x2x32xf32, #tpu.memory_space<vmem>>, vector<1x2x32xf32>,
    %c0_21 = arith.constant 0 : index
    %c0_22 = arith.constant 0 : index
    %19 = vector.load %arg7[%c0_21, %c0_22] : memref<2x32xf32, #tpu.memory_space<vmem>>, vector<2x32xf32>
    tpu.vector_store %arg7[%c0_21, %c0_22], %12#0 {strides = array<i32>} : memref<2x32xf32, #tpu.memory_space<vmem>>, vector<2x32xf32>,
    %c0_23 = arith.constant 0 : index
    %c0_24 = arith.constant 0 : index
    %20 = vector.load %arg8[%c0_23, %c0_24] : memref<2x32xf32, #tpu.memory_space<vmem>>, vector<2x32xf32>
    tpu.vector_store %arg8[%c0_23, %c0_24], %12#1 {strides = array<i32>} : memref<2x32xf32, #tpu.memory_space<vmem>>, vector<2x32xf32>,
    return
  }
  func.func @transform_0(%arg0: i32) -> (i32, i32, i32) {
    %c0_i32 = arith.constant 0 : i32
    %c0_i32_0 = arith.constant 0 : i32
    %c0_i32_1 = arith.constant 0 : i32
    return %arg0, %c0_i32, %c0_i32_0 : i32, i32, i32
  }
  func.func @transform_1(%arg0: i32) -> (i32, i32, i32) {
    %c0_i32 = arith.constant 0 : i32
    %0 = arith.subi %c0_i32, %arg0 : i32
    %c0_i32_0 = arith.constant 0 : i32
    %c0_i32_1 = arith.constant 0 : i32
    %c0_i32_2 = arith.constant 0 : i32
    return %0, %c0_i32_0, %c0_i32_1 : i32, i32, i32
  }
  func.func @transform_2(%arg0: i32) -> (i32, i32) {
    %c0_i32 = arith.constant 0 : i32
    %c0_i32_0 = arith.constant 0 : i32
    %c0_i32_1 = arith.constant 0 : i32
    return %c0_i32, %c0_i32_0 : i32, i32
  }
  func.func @transform_3(%arg0: i32) -> (i32, i32) {
    %c0_i32 = arith.constant 0 : i32
    %c0_i32_0 = arith.constant 0 : i32
    %c0_i32_1 = arith.constant 0 : i32
    return %c0_i32, %c0_i32_0 : i32, i32
  }
  func.func @transform_4(%arg0: i32) -> (i32, i32) {
    %c0_i32 = arith.constant 0 : i32
    %c0_i32_0 = arith.constant 0 : i32
    %c0_i32_1 = arith.constant 0 : i32
    return %c0_i32, %c0_i32_0 : i32, i32
  }
  func.func @transform_5(%arg0: i32) -> (i32, i32) {
    %c0_i32 = arith.constant 0 : i32
    %c0_i32_0 = arith.constant 0 : i32
    %c0_i32_1 = arith.constant 0 : i32
    return %c0_i32, %c0_i32_0 : i32, i32
  }
  func.func @transform_6(%arg0: i32) -> (i32, i32) {
    %c0_i32 = arith.constant 0 : i32
    %c0_i32_0 = arith.constant 0 : i32
    %c0_i32_1 = arith.constant 0 : i32
    return %c0_i32, %c0_i32_0 : i32, i32
  }
  func.func @transform_7(%arg0: i32) -> (i32, i32) {
    %c0_i32 = arith.constant 0 : i32
    %c0_i32_0 = arith.constant 0 : i32
    %c0_i32_1 = arith.constant 0 : i32
    return %c0_i32, %c0_i32_0 : i32, i32
  }
}

module attributes {stable_mosaic.version = 11 : i64} {
  func.func @_dense2_kernel(%arg0: i32, %arg1: i32, %arg2: memref<2x32xf32, #tpu.memory_space<vmem>>, %arg3: memref<2x32xf32, #tpu.memory_space<vmem>>, %arg4: memref<32x4xbf16, #tpu.memory_space<vmem>>, %arg5: memref<32x4xbf16, #tpu.memory_space<vmem>>, %arg6: memref<1x4xf32, #tpu.memory_space<vmem>>, %arg7: memref<2x4xf32, #tpu.memory_space<vmem>>) attributes {dimension_semantics = [#tpu.dimension_semantics<parallel>, #tpu.dimension_semantics<parallel>], iteration_bounds = array<i64: 1, 1>, scalar_prefetch = 0 : i64, scratch_operands = 0 : i64, tpu.core_type = #tpu.core_type<tc>, window_params = [{transform_indices = @transform_0, window_bounds = array<i64: 2, 32>}, {transform_indices = @transform_1, window_bounds = array<i64: 2, 32>}, {transform_indices = @transform_2, window_bounds = array<i64: 32, 4>}, {transform_indices = @transform_3, window_bounds = array<i64: 32, 4>}, {transform_indices = @transform_4, window_bounds = array<i64: 1, 4>}, {transform_indices = @transform_5, window_bounds = array<i64: 2, 4>}]} {
    %c0 = arith.constant 0 : index
    %c0_0 = arith.constant 0 : index
    %0 = vector.load %arg2[%c0, %c0_0] : memref<2x32xf32, #tpu.memory_space<vmem>>, vector<2x32xf32>
    %1 = arith.truncf %0 : vector<2x32xf32> to vector<2x32xbf16>
    %c0_1 = arith.constant 0 : index
    %c0_2 = arith.constant 0 : index
    %2 = vector.load %arg4[%c0_1, %c0_2] : memref<32x4xbf16, #tpu.memory_space<vmem>>, vector<32x4xbf16>
    %cst = arith.constant dense<0.000000e+00> : vector<2x4xf32>
    %3 = tpu.matmul %1, %2, %cst {dimension_numbers = #tpu.dot_dimension_numbers<[1], [0], [0], [1], [0, 0, 1, 1], [], []>} : vector<2x32xbf16>, vector<32x4xbf16>, vector<2x4xf32> -> vector<2x4xf32>
    %c0_3 = arith.constant 0 : index
    %c0_4 = arith.constant 0 : index
    %4 = vector.load %arg3[%c0_3, %c0_4] : memref<2x32xf32, #tpu.memory_space<vmem>>, vector<2x32xf32>
    %5 = arith.truncf %4 : vector<2x32xf32> to vector<2x32xbf16>
    %c0_5 = arith.constant 0 : index
    %c0_6 = arith.constant 0 : index
    %6 = vector.load %arg5[%c0_5, %c0_6] : memref<32x4xbf16, #tpu.memory_space<vmem>>, vector<32x4xbf16>
    %cst_7 = arith.constant dense<0.000000e+00> : vector<2x4xf32>
    %7 = tpu.matmul %5, %6, %cst_7 {dimension_numbers = #tpu.dot_dimension_numbers<[1], [0], [0], [1], [0, 0, 1, 1], [], []>} : vector<2x32xbf16>, vector<32x4xbf16>, vector<2x4xf32> -> vector<2x4xf32>
    %8 = arith.addf %3, %7 : vector<2x4xf32>
    %c0_8 = arith.constant 0 : index
    %c0_9 = arith.constant 0 : index
    %9 = vector.load %arg6[%c0_8, %c0_9] : memref<1x4xf32, #tpu.memory_space<vmem>>, vector<1x4xf32>
    %10 = vector.broadcast %9 : vector<1x4xf32> to vector<2x4xf32>
    %11 = arith.addf %8, %10 : vector<2x4xf32>
    %c0_10 = arith.constant 0 : index
    %c0_11 = arith.constant 0 : index
    %12 = vector.load %arg7[%c0_10, %c0_11] : memref<2x4xf32, #tpu.memory_space<vmem>>, vector<2x4xf32>
    tpu.vector_store %arg7[%c0_10, %c0_11], %11 {strides = array<i32>} : memref<2x4xf32, #tpu.memory_space<vmem>>, vector<2x4xf32>,
    return
  }
  func.func @transform_0(%arg0: i32, %arg1: i32) -> (i32, i32) {
    %c0_i32 = arith.constant 0 : i32
    %c0_i32_0 = arith.constant 0 : i32
    return %arg0, %c0_i32 : i32, i32
  }
  func.func @transform_1(%arg0: i32, %arg1: i32) -> (i32, i32) {
    %c0_i32 = arith.constant 0 : i32
    %c0_i32_0 = arith.constant 0 : i32
    return %arg0, %c0_i32 : i32, i32
  }
  func.func @transform_2(%arg0: i32, %arg1: i32) -> (i32, i32) {
    %c0_i32 = arith.constant 0 : i32
    %c0_i32_0 = arith.constant 0 : i32
    return %c0_i32, %arg1 : i32, i32
  }
  func.func @transform_3(%arg0: i32, %arg1: i32) -> (i32, i32) {
    %c0_i32 = arith.constant 0 : i32
    %c0_i32_0 = arith.constant 0 : i32
    return %c0_i32, %arg1 : i32, i32
  }
  func.func @transform_4(%arg0: i32, %arg1: i32) -> (i32, i32) {
    %c0_i32 = arith.constant 0 : i32
    %c0_i32_0 = arith.constant 0 : i32
    return %c0_i32, %arg1 : i32, i32
  }
  func.func @transform_5(%arg0: i32, %arg1: i32) -> (i32, i32) {
    %c0_i32 = arith.constant 0 : i32
    return %arg0, %arg1 : i32, i32
  }
}

</mosaic_0001>

<llo_original>
// kernel: bert_with_gru_forward.18
$region0: #{bert_with_gru_forward.18}
  #allocation0 [shape = 'u32[]', space=smem, size = 0x4, offset = 0x4, fixed_abs, tag = 'smem constant byte address 0x4 - core index']
  #allocation1 [shape = 'u32[72,128]{1,0:T(1,128)}', space=vmem, size = 0x9000, scoped, tag = 'internal scratch']
  %s0 = inlined_call_operand.vmem [shape: f32[16,32], index: 0, kind: input, shape index: {}]
  %s1 = inlined_call_operand.vmem [shape: f32[1,32], index: 1, kind: input, shape index: {}]
  %s2 = inlined_call_operand.vmem [shape: f32[1,32], index: 2, kind: input, shape index: {}]
  %s3 = inlined_call_operand.vmem [shape: f32[16,32], index: 3, kind: output, shape index: {}]
  %s4 = sld [smem:[#allocation0]]
  $region22: #{bert_with_gru_forward.18} parent=0
    _
  %s6 = ssub.s32 1, %s4
  %s7 = scalar_select 0, %s6, %s4
  // Predicated region
  $region2: #{bert_with_gru_forward.18} parent=0 // pred_check
    _
  $region3: #{bert_with_gru_forward.18} parent=0 // pred_check_branch
    %9 = sbr.rel (0) target = $region5
  $region4: #{bert_with_gru_forward.18} parent=0 // pred_region
    _
  $region5: #{bert_with_gru_forward.18} parent=0 // pred_fallthru
    _
  // Predicated region
  $region6: #{bert_with_gru_forward.18} parent=0 // pred_check
    _
  $region7: #{bert_with_gru_forward.18} parent=0 // pred_check_branch
    %11 = sbr.rel (0) target = $region9
  $region8: #{bert_with_gru_forward.18} parent=0 // pred_region
    _
  $region9: #{bert_with_gru_forward.18} parent=0 // pred_fallthru
    _
  // Predicated region
  $region10: #{bert_with_gru_forward.18} parent=0 // pred_check
    _
  $region11: #{bert_with_gru_forward.18} parent=0 // pred_check_branch
    %13 = sbr.rel (0) target = $region13
  $region12: #{bert_with_gru_forward.18} parent=0 // pred_region
    _
  $region13: #{bert_with_gru_forward.18} parent=0 // pred_fallthru
    _
  %v14 = vld [vmem:[%s0] sm:$0xff]
  %v15 = vld [vmem:[%s0 + $0x8] sm:$0xff]
  %vm16 = vcmask 261120
  %v17 = vsel %vm16, %v14, 0.0
  %18 = vadd.xlane.f32.xlu0 %v17
  %v19 = vpop.xlane.xlu0 %18
  %v20 = vsel %vm16, %v15, 0.0
  %21 = vadd.xlane.f32.xlu0 %v20
  %v22 = vpop.xlane.xlu0 %21
  %v23 = vrcp.pop 32.0
  %v24 = vmul.f32 32.0, %v23
  %v25 = vsub.f32 1.0, %v24
  %v26 = vmul.f32 %v23, %v25
  %v27 = vadd.f32 %v23, %v26
  %vm28 = vweird.f32 %v23
  %v29 = vsel %vm28, %v23, %v27
  %v30 = vmul.f32 %v19, %v29
  %v31 = vmul.f32 %v22, %v29
  %v32 = vsub.f32 %v14, %v30
  %v33 = vsub.f32 %v15, %v31
  %v34 = vmul.f32 %v32, %v32
  %v35 = vmul.f32 %v33, %v33
  %v36 = vsel %vm16, %v34, 0.0
  %37 = vadd.xlane.f32.xlu0 %v36
  %v38 = vpop.xlane.xlu0 %37
  %v39 = vsel %vm16, %v35, 0.0
  %40 = vadd.xlane.f32.xlu0 %v39
  %v41 = vpop.xlane.xlu0 %40
  %v42 = vmul.f32 %v38, %v29
  %v43 = vmul.f32 %v41, %v29
  %v44 = vadd.f32 %v42, 1e-12
  %v45 = vadd.f32 %v43, 1e-12
  %v46 = vrsqrt.pop %v44
  %v47 = vmul.f32 %v46, %v44
  %v48 = vmul.f32 %v47, %v46
  %v49 = vmul.f32 0.5, %v48
  %v50 = vsub.f32 1.5, %v49
  %v51 = vmul.f32 %v46, %v50
  %vm52 = vweird.f32 %v44
  %vm53 = vweird.f32 %v46
  %vm54 = vmor %vm52, %vm53
  %v55 = vsel %vm54, %v46, %v51
  %v56 = vrsqrt.pop %v45
  %v57 = vmul.f32 %v56, %v45
  %v58 = vmul.f32 %v57, %v56
  %v59 = vmul.f32 0.5, %v58
  %v60 = vsub.f32 1.5, %v59
  %v61 = vmul.f32 %v56, %v60
  %vm62 = vweird.f32 %v45
  %vm63 = vweird.f32 %v56
  %vm64 = vmor %vm62, %vm63
  %v65 = vsel %vm64, %v56, %v61
  %v66 = vmul.f32 %v32, %v55
  %v67 = vmul.f32 %v33, %v65
  %v68 = vld [vmem:[%s1] sm:$0x1]
  %v70 = vperm.slane %v68, 0
  %v72 = vmul.f32 %v66, %v70
  %v73 = vmul.f32 %v67, %v70
  %v74 = vld [vmem:[%s2] sm:$0x1]
  %v76 = vperm.slane %v74, 0
  %v78 = vadd.f32 %v72, %v76
  %v79 = vadd.f32 %v73, %v76
  %80 = vst.msk [vmem:[%s3] sm:$0xff] %vm16, %v78
  %81 = vst.msk [vmem:[%s3 + $0x8] sm:$0xff] %vm16, %v79
  // Predicated region
  $region14: #{bert_with_gru_forward.18} parent=0 // pred_check
    _
  $region15: #{bert_with_gru_forward.18} parent=0 // pred_check_branch
    %83 = sbr.rel (0) target = $region17
  $region16: #{bert_with_gru_forward.18} parent=0 // pred_region
    _
  $region17: #{bert_with_gru_forward.18} parent=0 // pred_fallthru
    _
  // Predicated region
  $region18: #{bert_with_gru_forward.18} parent=0 // pred_check
    _
  $region19: #{bert_with_gru_forward.18} parent=0 // pred_check_branch
    %85 = sbr.rel (0) target = $region21
  $region20: #{bert_with_gru_forward.18} parent=0 // pred_region
    _
  $region21: #{bert_with_gru_forward.18} parent=0 // pred_fallthru
    _

// kernel: bert_with_gru_forward.19
$region0: #{bert_with_gru_forward.19}
  #allocation0 [shape = 'u32[]', space=smem, size = 0x4, offset = 0x4, fixed_abs, tag = 'smem constant byte address 0x4 - core index']
  #allocation1 [shape = 'u32[72,128]{1,0:T(1,128)}', space=vmem, size = 0x9000, scoped, tag = 'internal scratch']
  %s0 = inlined_call_operand.vmem [shape: f32[16,32], index: 0, kind: input, shape index: {}]
  %s1 = inlined_call_operand.vmem [shape: bf16[32,96], index: 1, kind: input, shape index: {}]
  %s2 = inlined_call_operand.vmem [shape: f32[1,96], index: 2, kind: input, shape index: {}]
  %s3 = inlined_call_operand.vmem [shape: f32[16,96], index: 3, kind: output, shape index: {}]
  %s4 = sld [smem:[#allocation0]]
  $region22: #{bert_with_gru_forward.19} parent=0
    _
  %s6 = ssub.s32 1, %s4
  %s7 = scalar_select 0, %s6, %s4
  // Predicated region
  $region2: #{bert_with_gru_forward.19} parent=0 // pred_check
    _
  $region3: #{bert_with_gru_forward.19} parent=0 // pred_check_branch
    %9 = sbr.rel (0) target = $region5
  $region4: #{bert_with_gru_forward.19} parent=0 // pred_region
    _
  $region5: #{bert_with_gru_forward.19} parent=0 // pred_fallthru
    _
  // Predicated region
  $region6: #{bert_with_gru_forward.19} parent=0 // pred_check
    _
  $region7: #{bert_with_gru_forward.19} parent=0 // pred_check_branch
    %11 = sbr.rel (0) target = $region9
  $region8: #{bert_with_gru_forward.19} parent=0 // pred_region
    _
  $region9: #{bert_with_gru_forward.19} parent=0 // pred_fallthru
    _
  // Predicated region
  $region10: #{bert_with_gru_forward.19} parent=0 // pred_check
    _
  $region11: #{bert_with_gru_forward.19} parent=0 // pred_check_branch
    %13 = sbr.rel (0) target = $region13
  $region12: #{bert_with_gru_forward.19} parent=0 // pred_region
    _
  $region13: #{bert_with_gru_forward.19} parent=0 // pred_fallthru
    _
  %v15 = vld [vmem:[%s0] sm:$0xff]
  %v16 = vld [vmem:[%s0 + $0x8] sm:$0xff]
  %v17 = vpack.c.bf16 %v16, %v15
  %v18 = vld [vmem:[%s1] sm:$0xf]
  %v19 = vld [vmem:[%s1 + $0x4] sm:$0xf]
  %v20 = vld [vmem:[%s1 + $0x8] sm:$0xf]
  %v21 = vld [vmem:[%s1 + $0xc] sm:$0xf]
  %v22 = vld [vmem:[%s2] sm:$0x1]
  %v24 = vperm.slane %v22, 0
  %v30 = vunpack.c.l.b16 %v18
  %v31 = vunpack.c.l.b16 %v19
  %v32 = vunpack.c.l.b16 %v20
  %v33 = vunpack.c.l.b16 %v21
  %v34 = vpack.c.b16 %v31, %v30
  %v35 = vpack.c.b16 %v33, %v32
  %vm38 = vcmask 261120
  %v40 = vsel %vm38, %v17, 0
  %42 = vmatpush.bf16.msra.mxu0 0
  %43 = vmatpush.bf16.msra.mxu0 0
  %44 = vmatpush.bf16.msra.mxu0 0
  %45 = vmatpush.bf16.msra.mxu0 0
  %46 = vmatpush.bf16.msra.mxu0 0
  %47 = vmatpush.bf16.msra.mxu0 0
  %48 = vmatpush.bf16.msra.mxu0 %v35
  %49 = vmatpush.bf16.msra.mxu0 %v34
  %50 = vmatmul.bf16.gmra.mxu0 %v40
  %v51 = vpop.f32.mrf.mxu0
  %v52 = vadd.f32 %v24, %v51
  %v53 = vpop.f32.mrf.mxu0
  %v54 = vadd.f32 %v24, %v53
  %55 = vdwg.mxu0
  %vm56 = vcmask 785408
  %57 = vst.msk [vmem:[%s3] sm:$0xff] %vm56, %v52
  %58 = vst.msk [vmem:[%s3 + $0x8] sm:$0xff] %vm56, %v54
  // Predicated region
  $region14: #{bert_with_gru_forward.19} parent=0 // pred_check
    _
  $region15: #{bert_with_gru_forward.19} parent=0 // pred_check_branch
    %60 = sbr.rel (0) target = $region17
  $region16: #{bert_with_gru_forward.19} parent=0 // pred_region
    _
  $region17: #{bert_with_gru_forward.19} parent=0 // pred_fallthru
    _
  // Predicated region
  $region18: #{bert_with_gru_forward.19} parent=0 // pred_check
    _
  $region19: #{bert_with_gru_forward.19} parent=0 // pred_check_branch
    %62 = sbr.rel (0) target = $region21
  $region20: #{bert_with_gru_forward.19} parent=0 // pred_region
    _
  $region21: #{bert_with_gru_forward.19} parent=0 // pred_fallthru
    _

// kernel: bert_with_gru_forward.21
$region0: #{bert_with_gru_forward.21}
  #allocation0 [shape = 'u32[]', space=smem, size = 0x4, offset = 0x4, fixed_abs, tag = 'smem constant byte address 0x4 - core index']
  #allocation1 [shape = 'u32[72,128]{1,0:T(1,128)}', space=vmem, size = 0x9000, scoped, tag = 'internal scratch']
  %s0 = inlined_call_operand.vmem [shape: f32[16,32], index: 0, kind: input, shape index: {}]
  %s1 = inlined_call_operand.vmem [shape: bf16[32,32], index: 1, kind: input, shape index: {}]
  %s2 = inlined_call_operand.vmem [shape: f32[1,32], index: 2, kind: input, shape index: {}]
  %s3 = inlined_call_operand.vmem [shape: f32[16,32], index: 3, kind: input, shape index: {}]
  %s4 = inlined_call_operand.vmem [shape: f32[1,32], index: 4, kind: input, shape index: {}]
  %s5 = inlined_call_operand.vmem [shape: f32[1,32], index: 5, kind: input, shape index: {}]
  %s6 = inlined_call_operand.vmem [shape: f32[16,32], index: 6, kind: output, shape index: {}]
  %s7 = sld [smem:[#allocation0]]
  $region34: #{bert_with_gru_forward.21} parent=0
    _
  %s9 = ssub.s32 1, %s7
  %s10 = scalar_select 0, %s9, %s7
  // Predicated region
  $region2: #{bert_with_gru_forward.21} parent=0 // pred_check
    _
  $region3: #{bert_with_gru_forward.21} parent=0 // pred_check_branch
    %12 = sbr.rel (0) target = $region5
  $region4: #{bert_with_gru_forward.21} parent=0 // pred_region
    _
  $region5: #{bert_with_gru_forward.21} parent=0 // pred_fallthru
    _
  // Predicated region
  $region6: #{bert_with_gru_forward.21} parent=0 // pred_check
    _
  $region7: #{bert_with_gru_forward.21} parent=0 // pred_check_branch
    %14 = sbr.rel (0) target = $region9
  $region8: #{bert_with_gru_forward.21} parent=0 // pred_region
    _
  $region9: #{bert_with_gru_forward.21} parent=0 // pred_fallthru
    _
  // Predicated region
  $region10: #{bert_with_gru_forward.21} parent=0 // pred_check
    _
  $region11: #{bert_with_gru_forward.21} parent=0 // pred_check_branch
    %16 = sbr.rel (0) target = $region13
  $region12: #{bert_with_gru_forward.21} parent=0 // pred_region
    _
  $region13: #{bert_with_gru_forward.21} parent=0 // pred_fallthru
    _
  // Predicated region
  $region14: #{bert_with_gru_forward.21} parent=0 // pred_check
    _
  $region15: #{bert_with_gru_forward.21} parent=0 // pred_check_branch
    %18 = sbr.rel (0) target = $region17
  $region16: #{bert_with_gru_forward.21} parent=0 // pred_region
    _
  $region17: #{bert_with_gru_forward.21} parent=0 // pred_fallthru
    _
  // Predicated region
  $region18: #{bert_with_gru_forward.21} parent=0 // pred_check
    _
  $region19: #{bert_with_gru_forward.21} parent=0 // pred_check_branch
    %20 = sbr.rel (0) target = $region21
  $region20: #{bert_with_gru_forward.21} parent=0 // pred_region
    _
  $region21: #{bert_with_gru_forward.21} parent=0 // pred_fallthru
    _
  // Predicated region
  $region22: #{bert_with_gru_forward.21} parent=0 // pred_check
    _
  $region23: #{bert_with_gru_forward.21} parent=0 // pred_check_branch
    %22 = sbr.rel (0) target = $region25
  $region24: #{bert_with_gru_forward.21} parent=0 // pred_region
    _
  $region25: #{bert_with_gru_forward.21} parent=0 // pred_fallthru
    _
  %v24 = vld [vmem:[%s0] sm:$0xff]
  %v25 = vld [vmem:[%s0 + $0x8] sm:$0xff]
  %v26 = vpack.c.bf16 %v25, %v24
  %v27 = vld [vmem:[%s1] sm:$0xf]
  %v28 = vld [vmem:[%s1 + $0x4] sm:$0xf]
  %v29 = vld [vmem:[%s1 + $0x8] sm:$0xf]
  %v30 = vld [vmem:[%s1 + $0xc] sm:$0xf]
  %v31 = vld [vmem:[%s2] sm:$0x1]
  %v33 = vperm.slane %v31, 0
  %v39 = vunpack.c.l.b16 %v27
  %v40 = vunpack.c.l.b16 %v28
  %v41 = vunpack.c.l.b16 %v29
  %v42 = vunpack.c.l.b16 %v30
  %v43 = vpack.c.b16 %v40, %v39
  %v44 = vpack.c.b16 %v42, %v41
  %vm47 = vcmask 261120
  %v49 = vsel %vm47, %v26, 0
  %51 = vmatpush.bf16.msra.mxu0 0
  %52 = vmatpush.bf16.msra.mxu0 0
  %53 = vmatpush.bf16.msra.mxu0 0
  %54 = vmatpush.bf16.msra.mxu0 0
  %55 = vmatpush.bf16.msra.mxu0 0
  %56 = vmatpush.bf16.msra.mxu0 0
  %57 = vmatpush.bf16.msra.mxu0 %v44
  %58 = vmatpush.bf16.msra.mxu0 %v43
  %59 = vmatmul.bf16.gmra.mxu0 %v49
  %v60 = vpop.f32.mrf.mxu0
  %v61 = vadd.f32 %v33, %v60
  %v62 = vpop.f32.mrf.mxu0
  %v63 = vadd.f32 %v33, %v62
  %64 = vdwg.mxu0
  %v65 = vld [vmem:[%s3] sm:$0xff]
  %v66 = vld [vmem:[%s3 + $0x8] sm:$0xff]
  %v67 = vadd.f32 %v61, %v65
  %v68 = vadd.f32 %v63, %v66
  %v69 = vsel %vm47, %v67, 0.0
  %70 = vadd.xlane.f32.xlu0 %v69
  %v71 = vpop.xlane.xlu0 %70
  %v72 = vsel %vm47, %v68, 0.0
  %73 = vadd.xlane.f32.xlu0 %v72
  %v74 = vpop.xlane.xlu0 %73
  %v75 = vrcp.pop 32.0
  %v76 = vmul.f32 32.0, %v75
  %v77 = vsub.f32 1.0, %v76
  %v78 = vmul.f32 %v75, %v77
  %v79 = vadd.f32 %v75, %v78
  %vm80 = vweird.f32 %v75
  %v81 = vsel %vm80, %v75, %v79
  %v82 = vmul.f32 %v71, %v81
  %v83 = vmul.f32 %v74, %v81
  %v84 = vsub.f32 %v67, %v82
  %v85 = vsub.f32 %v68, %v83
  %v86 = vmul.f32 %v84, %v84
  %v87 = vmul.f32 %v85, %v85
  %v88 = vsel %vm47, %v86, 0.0
  %89 = vadd.xlane.f32.xlu0 %v88
  %v90 = vpop.xlane.xlu0 %89
  %v91 = vsel %vm47, %v87, 0.0
  %92 = vadd.xlane.f32.xlu0 %v91
  %v93 = vpop.xlane.xlu0 %92
  %v94 = vmul.f32 %v90, %v81
  %v95 = vmul.f32 %v93, %v81
  %v96 = vadd.f32 %v94, 1e-12
  %v97 = vadd.f32 %v95, 1e-12
  %v98 = vrsqrt.pop %v96
  %v99 = vmul.f32 %v98, %v96
  %v100 = vmul.f32 %v99, %v98
  %v101 = vmul.f32 0.5, %v100
  %v102 = vsub.f32 1.5, %v101
  %v103 = vmul.f32 %v98, %v102
  %vm104 = vweird.f32 %v96
  %vm105 = vweird.f32 %v98
  %vm106 = vmor %vm104, %vm105
  %v107 = vsel %vm106, %v98, %v103
  %v108 = vrsqrt.pop %v97
  %v109 = vmul.f32 %v108, %v97
  %v110 = vmul.f32 %v109, %v108
  %v111 = vmul.f32 0.5, %v110
  %v112 = vsub.f32 1.5, %v111
  %v113 = vmul.f32 %v108, %v112
  %vm114 = vweird.f32 %v97
  %vm115 = vweird.f32 %v108
  %vm116 = vmor %vm114, %vm115
  %v117 = vsel %vm116, %v108, %v113
  %v118 = vmul.f32 %v84, %v107
  %v119 = vmul.f32 %v85, %v117
  %v120 = vld [vmem:[%s4] sm:$0x1]
  %v122 = vperm.slane %v120, 0
  %v124 = vmul.f32 %v118, %v122
  %v125 = vmul.f32 %v119, %v122
  %v126 = vld [vmem:[%s5] sm:$0x1]
  %v128 = vperm.slane %v126, 0
  %v130 = vadd.f32 %v124, %v128
  %v131 = vadd.f32 %v125, %v128
  %132 = vst.msk [vmem:[%s6] sm:$0xff] %vm47, %v130
  %133 = vst.msk [vmem:[%s6 + $0x8] sm:$0xff] %vm47, %v131
  // Predicated region
  $region26: #{bert_with_gru_forward.21} parent=0 // pred_check
    _
  $region27: #{bert_with_gru_forward.21} parent=0 // pred_check_branch
    %135 = sbr.rel (0) target = $region29
  $region28: #{bert_with_gru_forward.21} parent=0 // pred_region
    _
  $region29: #{bert_with_gru_forward.21} parent=0 // pred_fallthru
    _
  // Predicated region
  $region30: #{bert_with_gru_forward.21} parent=0 // pred_check
    _
  $region31: #{bert_with_gru_forward.21} parent=0 // pred_check_branch
    %137 = sbr.rel (0) target = $region33
  $region32: #{bert_with_gru_forward.21} parent=0 // pred_region
    _
  $region33: #{bert_with_gru_forward.21} parent=0 // pred_fallthru
    _

// kernel: bert_with_gru_forward.20
$region0: #{bert_with_gru_forward.20}
  #allocation0 [shape = 'u32[]', space=smem, size = 0x4, offset = 0x4, fixed_abs, tag = 'smem constant byte address 0x4 - core index']
  #allocation1 [shape = 'u32[72,128]{1,0:T(1,128)}', space=vmem, size = 0x9000, scoped, tag = 'internal scratch']
  %s0 = inlined_call_operand.vmem [shape: f32[16,96], index: 0, kind: input, shape index: {}]
  %s1 = inlined_call_operand.vmem [shape: f32[16,32], index: 1, kind: output, shape index: {}]
  %s2 = sld [smem:[#allocation0]]
  $region37: #{bert_with_gru_forward.20} parent=0
    _
  %s4 = ssub.s32 1, %s2
  %s5 = scalar_select 0, %s4, %s2
  loop: start=0, step=1, limit=4
  $region2: #{bert_with_gru_forward.20} parent=0 // loop_pre_header
    _
  $region3: #{bert_with_gru_forward.20} parent=0 // loop_header
    %s7 = sphi 0, %s11
    %p8 = scmp.ge.s32.totalorder %s7, 4
    %s17 = sphi 0, %s19
    %s20 = sphi 0, %s17
    %s21 = sphi 0, %s20
    %s37 = sphi 0, %s21
    %s43 = sphi 0, %s45
    %s46 = sphi 0, %s43
    %s47 = sphi 0, %s46
    %s63 = sphi 0, %s47
  $region4: #{bert_with_gru_forward.20} parent=0 // loop_header_branch
    %10 = sbr.rel (%p8) target = $region8
  $region5: #{bert_with_gru_forward.20} parent=0 // loop_body
    %s12 = ssub.s32 %s7, 1
    %s13 = ssub.s32 %s7, 2
    %s14 = sadd.s32 %s7, 1
    %s15 = ssub.s32 %s7, %s14
    %p16 = scmp.eq.s32.totalorder %s15, 0
    %s18 = sadd.s32 %s17, 1
    %s19 = scalar_select %p16, %s17, %s18
    %p22 = pneg %p16
    %p23 = scmp.eq.s32.totalorder %s7, 1
    %p24 = por %p22, %p23
    %p25 = scmp.ne.s32.totalorder %s17, %s20
    %p26 = scmp.eq.s32.totalorder %s7, 0
    %p27 = por %p25, %p26
    %p28 = scmp.ne.s32.totalorder %s17, %s20
    %p29 = scmp.eq.s32.totalorder %s12, 1
    %p30 = por %p28, %p29
    %p31 = scmp.ne.s32.totalorder %s20, %s21
    %p32 = scmp.eq.s32.totalorder %s12, 0
    %p33 = por %p31, %p32
    %p34 = scmp.ne.s32.totalorder %s20, %s21
    %p35 = scmp.eq.s32.totalorder %s13, 1
    %p36 = por %p34, %p35
    %p38 = scmp.ne.s32.totalorder %s21, %s37
    %p39 = scmp.eq.s32.totalorder %s13, 0
    %p40 = por %p38, %p39
    %s41 = ssub.s32 %s7, %s14
    %p42 = scmp.eq.s32.totalorder %s41, 0
    %s44 = sadd.s32 %s43, 1
    %s45 = scalar_select %p42, %s43, %s44
    %p48 = pneg %p42
    %p49 = scmp.eq.s32.totalorder %s7, 1
    %p50 = por %p48, %p49
    %p51 = scmp.ne.s32.totalorder %s43, %s46
    %p52 = scmp.eq.s32.totalorder %s7, 0
    %p53 = por %p51, %p52
    %p54 = scmp.ne.s32.totalorder %s43, %s46
    %p55 = scmp.eq.s32.totalorder %s12, 1
    %p56 = por %p54, %p55
    %p57 = scmp.ne.s32.totalorder %s46, %s47
    %p58 = scmp.eq.s32.totalorder %s12, 0
    %p59 = por %p57, %p58
    %p60 = scmp.ne.s32.totalorder %s46, %s47
    %p61 = scmp.eq.s32.totalorder %s13, 1
    %p62 = por %p60, %p61
    %p64 = scmp.ne.s32.totalorder %s47, %s63
    %p65 = scmp.eq.s32.totalorder %s13, 0
    %p66 = por %p64, %p65
    %p67 = scmp.le.s32.totalorder 1, %s7
    %p68 = scmp.lt.s32.totalorder %s7, 3
    %p69 = pnand %p67, %p68
    %p70 = pneg %p69
    // Predicated region
    $region9: #{bert_with_gru_forward.20} parent=5 // pred_check
      _
    $region10: #{bert_with_gru_forward.20} parent=5 // pred_check_branch
      %72 = sbr.rel (%p69) target = $region12
    $region11: #{bert_with_gru_forward.20} parent=5 // pred_region
      %s73 = ssub.s32 %s7, 1
    $region12: #{bert_with_gru_forward.20} parent=5 // pred_fallthru
      _
    %p74 = scmp.lt.s32.totalorder %s7, 2
    // Predicated region
    $region13: #{bert_with_gru_forward.20} parent=5 // pred_check
      %p75 = pneg %p74
    $region14: #{bert_with_gru_forward.20} parent=5 // pred_check_branch
      %77 = sbr.rel (%p75) target = $region16
    $region15: #{bert_with_gru_forward.20} parent=5 // pred_region
      // Predicated region
      $region17: #{bert_with_gru_forward.20} parent=15 // pred_check
        %p78 = pneg %p27
      $region18: #{bert_with_gru_forward.20} parent=15 // pred_check_branch
        %80 = sbr.rel (%p78) target = $region20
      $region19: #{bert_with_gru_forward.20} parent=15 // pred_region
        %p81 = scmp.lt.s32.totalorder %s7, 1
        %s82 = scalar_select %p81, %s7, 1
        %s83 = smul.addr %s82, 8
        %s84 = scalar_lea.vmem %s0, %s83
      $region20: #{bert_with_gru_forward.20} parent=15 // pred_fallthru
        _
    $region16: #{bert_with_gru_forward.20} parent=5 // pred_fallthru
      _
    %p85 = scmp.le.s32.totalorder 1, %s7
    %p86 = scmp.lt.s32.totalorder %s7, 3
    %p87 = pnand %p85, %p86
    %p88 = pneg %p87
    // Predicated region
    $region21: #{bert_with_gru_forward.20} parent=5 // pred_check
      _
    $region22: #{bert_with_gru_forward.20} parent=5 // pred_check_branch
      %90 = sbr.rel (%p87) target = $region24
    $region23: #{bert_with_gru_forward.20} parent=5 // pred_region
      %s91 = ssub.s32 %s7, 1
      %p92 = scmp.lt.s32.totalorder %s12, 1
      %s93 = scalar_select %p92, %s12, 1
      %s94 = smul.addr %s93, 8
      %s95 = scalar_lea.vmem %s0, %s94
      %p96 = pneg %p33
      %p97 = pneg %p30
      %p98 = pneg %p59
      %p99 = pneg %p56
      %p100 = scmp.lt.s32.totalorder %s12, 1
      %s101 = scalar_select %p100, %s12, 1
      %s102 = smul.addr %s101, 8
      %s103 = scalar_lea.vmem %s1, %s102
      %p104 = scmp.lt.s32.totalorder %s12, 1
      %s105 = scalar_select %p104, %s12, 1
      %s106 = smul.addr %s105, 8
      %s107 = scalar_lea.vmem %s0, %s106
      %p108 = scmp.lt.s32.totalorder %s12, 1
      %s109 = scalar_select %p108, %s12, 1
      %s110 = smul.addr %s109, 8
      %s111 = scalar_lea.vmem %s1, %s110
      %v113 = vld [vmem:[%s107] sm:$0xff]
      %v114 = vpack.c.bf16 %v113, %v113
      %116 = vrot.lane.b32.xlu0 %v114, 96
      %v117 = vpop.permute.xlu0 %116
      %vm118 = vcmask 130048
      %v120 = vsel %vm118, %v114, 0
      %v123 = vsel %vm118, %v117, 0
      %125 = vmatpush.bf16.xpose.msra.mxu0 0
      %126 = vmatpush.bf16.xpose.msra.mxu0 0
      %127 = vmatpush.bf16.xpose.msra.mxu0 0
      %128 = vmatpush.bf16.xpose.msra.mxu0 0
      %129 = vmatpush.bf16.xpose.msra.mxu0 0
      %130 = vmatpush.bf16.xpose.msra.mxu0 0
      %131 = vmatpush.bf16.xpose.msra.mxu0 0
      %132 = vmatpush.bf16.xpose.msra.mxu0 %v123
      %133 = vmatmul.bf16.gmra.mxu0 %v120
      %v134 = vpop.f32.mrf.mxu0
      %v135 = vadd.f32 0.0, %v134
      %v136 = vpop.f32.mrf.mxu0
      %137 = vdwg.mxu0
      %vm138 = vcmask 64512
      %v139 = vsel %vm138, %v135, -inf
      %140 = vmax.xlane.f32.xlu0 %v139
      %v141 = vpop.xlane.xlu0 %140
      %v142 = vsub.f32 %v135, %v141
      %v143 = vmul.f32 %v142, 1.442695
      %v144 = vpow.pop %v143
      %v145 = vsel %vm138, %v144, 0.0
      %146 = vadd.xlane.f32.xlu0 %v145
      %v147 = vpop.xlane.xlu0 %146
      %v148 = vrcp.pop %v147
      %v149 = vmul.f32 %v144, %v148
      %v150 = vpack.c.bf16 %v149, %v149
      %151 = vrot.lane.b32.xlu0 %v114, 64
      %v152 = vpop.permute.xlu0 %151
      %v154 = vsel %vm138, %v150, 0
      %vm156 = vcmask 1043456
      %v158 = vsel %vm156, %v152, 0
      %160 = vmatpush.bf16.msra.mxu0 0
      %161 = vmatpush.bf16.msra.mxu0 0
      %162 = vmatpush.bf16.msra.mxu0 0
      %163 = vmatpush.bf16.msra.mxu0 0
      %164 = vmatpush.bf16.msra.mxu0 0
      %165 = vmatpush.bf16.msra.mxu0 0
      %166 = vmatpush.bf16.msra.mxu0 0
      %167 = vmatpush.bf16.msra.mxu0 %v158
      %168 = vmatmul.bf16.gmra.mxu0 %v154
      %v169 = vpop.f32.mrf.mxu0
      %v170 = vadd.f32 0.0, %v169
      %v171 = vpop.f32.mrf.mxu0
      %172 = vdwg.mxu0
      %173 = vst.msk [vmem:[%s111] sm:$0xff] %vm118, %v170
      %174 = vrot.lane.b32.xlu0 %v114, 112
      %v175 = vpop.permute.xlu0 %174
      %176 = vrot.lane.b32.xlu0 %v114, 80
      %v177 = vpop.permute.xlu0 %176
      %v179 = vsel %vm118, %v175, 0
      %v182 = vsel %vm118, %v177, 0
      %184 = vmatpush.bf16.xpose.msra.mxu0 0
      %185 = vmatpush.bf16.xpose.msra.mxu0 0
      %186 = vmatpush.bf16.xpose.msra.mxu0 0
      %187 = vmatpush.bf16.xpose.msra.mxu0 0
      %188 = vmatpush.bf16.xpose.msra.mxu0 0
      %189 = vmatpush.bf16.xpose.msra.mxu0 0
      %190 = vmatpush.bf16.xpose.msra.mxu0 0
      %191 = vmatpush.bf16.xpose.msra.mxu0 %v182
      %192 = vmatmul.bf16.gmra.mxu0 %v179
      %v193 = vpop.f32.mrf.mxu0
      %v194 = vadd.f32 0.0, %v193
      %v195 = vpop.f32.mrf.mxu0
      %196 = vdwg.mxu0
      %v197 = vsel %vm138, %v194, -inf
      %198 = vmax.xlane.f32.xlu0 %v197
      %v199 = vpop.xlane.xlu0 %198
      %v200 = vsub.f32 %v194, %v199
      %v201 = vmul.f32 %v200, 1.442695
      %v202 = vpow.pop %v201
      %v203 = vsel %vm138, %v202, 0.0
      %204 = vadd.xlane.f32.xlu0 %v203
      %v205 = vpop.xlane.xlu0 %204
      %v206 = vrcp.pop %v205
      %v207 = vmul.f32 %v202, %v206
      %v208 = vpack.c.bf16 %v207, %v207
      %209 = vrot.lane.b32.xlu0 %v114, 48
      %v210 = vpop.permute.xlu0 %209
      %v212 = vsel %vm138, %v208, 0
      %v215 = vsel %vm156, %v210, 0
      %217 = vmatpush.bf16.msra.mxu0 0
      %218 = vmatpush.bf16.msra.mxu0 0
      %219 = vmatpush.bf16.msra.mxu0 0
      %220 = vmatpush.bf16.msra.mxu0 0
      %221 = vmatpush.bf16.msra.mxu0 0
      %222 = vmatpush.bf16.msra.mxu0 0
      %223 = vmatpush.bf16.msra.mxu0 0
      %224 = vmatpush.bf16.msra.mxu0 %v215
      %225 = vmatmul.bf16.gmra.mxu0 %v212
      %v226 = vpop.f32.mrf.mxu0
      %v227 = vadd.f32 0.0, %v226
      %v228 = vpop.f32.mrf.mxu0
      %229 = vdwg.mxu0
      %231 = vrot.lane.b32.xlu0 %v227, 16
      %v232 = vpop.permute.xlu0 %231
      %vm234 = vcmask 261248
      %235 = vst.msk [vmem:[%s111] sm:$0xff] %vm234, %v232
      %p236 = scmp.lt.s32.totalorder %s12, 1
      %s237 = scalar_select %p236, %s12, 1
      %s238 = smul.addr %s237, 8
      %s239 = scalar_lea.vmem %s1, %s238
      // Predicated region
      $region25: #{bert_with_gru_forward.20} parent=23 // pred_check
        %p240 = pneg %p56
      $region26: #{bert_with_gru_forward.20} parent=23 // pred_check_branch
        %242 = sbr.rel (%p240) target = $region28
      $region27: #{bert_with_gru_forward.20} parent=23 // pred_region
        _
      $region28: #{bert_with_gru_forward.20} parent=23 // pred_fallthru
        _
    $region24: #{bert_with_gru_forward.20} parent=5 // pred_fallthru
      _
    %p243 = scmp.le.s32.totalorder 2, %s7
    // Predicated region
    $region29: #{bert_with_gru_forward.20} parent=5 // pred_check
      %p244 = pneg %p243
    $region30: #{bert_with_gru_forward.20} parent=5 // pred_check_branch
      %246 = sbr.rel (%p244) target = $region32
    $region31: #{bert_with_gru_forward.20} parent=5 // pred_region
      %s247 = ssub.s32 %s7, 2
      // Predicated region
      $region33: #{bert_with_gru_forward.20} parent=31 // pred_check
        %p248 = pneg %p62
      $region34: #{bert_with_gru_forward.20} parent=31 // pred_check_branch
        %250 = sbr.rel (%p248) target = $region36
      $region35: #{bert_with_gru_forward.20} parent=31 // pred_region
        %p251 = scmp.lt.s32.totalorder %s13, 1
        %s252 = scalar_select %p251, %s13, 1
        %s253 = smul.addr %s252, 8
        %s254 = scalar_lea.vmem %s1, %s253
      $region36: #{bert_with_gru_forward.20} parent=31 // pred_fallthru
        _
    $region32: #{bert_with_gru_forward.20} parent=5 // pred_fallthru
      _
  $region6: #{bert_with_gru_forward.20} parent=0 // loop_footer
    %s11 = sadd.s32 1, %s7
  $region7: #{bert_with_gru_forward.20} parent=0 // loop_footer_branch
    %6 = sbr.rel target = $region3
  $region8: #{bert_with_gru_forward.20} parent=0 // loop_exit
    _

// kernel: bert_with_gru_forward.22
$region0: #{bert_with_gru_forward.22}
  #allocation0 [shape = 'u32[]', space=smem, size = 0x4, offset = 0x4, fixed_abs, tag = 'smem constant byte address 0x4 - core index']
  #allocation1 [shape = 'u32[72,128]{1,0:T(1,128)}', space=vmem, size = 0x9000, scoped, tag = 'internal scratch']
  %s0 = inlined_call_operand.vmem [shape: f32[16,32], index: 0, kind: input, shape index: {}]
  %s1 = inlined_call_operand.vmem [shape: bf16[32,64], index: 1, kind: input, shape index: {}]
  %s2 = inlined_call_operand.vmem [shape: f32[1,64], index: 2, kind: input, shape index: {}]
  %s3 = inlined_call_operand.vmem [shape: f32[16,64], index: 3, kind: output, shape index: {}]
  %s4 = sld [smem:[#allocation0]]
  $region22: #{bert_with_gru_forward.22} parent=0
    _
  %s6 = ssub.s32 1, %s4
  %s7 = scalar_select 0, %s6, %s4
  // Predicated region
  $region2: #{bert_with_gru_forward.22} parent=0 // pred_check
    _
  $region3: #{bert_with_gru_forward.22} parent=0 // pred_check_branch
    %9 = sbr.rel (0) target = $region5
  $region4: #{bert_with_gru_forward.22} parent=0 // pred_region
    _
  $region5: #{bert_with_gru_forward.22} parent=0 // pred_fallthru
    _
  // Predicated region
  $region6: #{bert_with_gru_forward.22} parent=0 // pred_check
    _
  $region7: #{bert_with_gru_forward.22} parent=0 // pred_check_branch
    %11 = sbr.rel (0) target = $region9
  $region8: #{bert_with_gru_forward.22} parent=0 // pred_region
    _
  $region9: #{bert_with_gru_forward.22} parent=0 // pred_fallthru
    _
  // Predicated region
  $region10: #{bert_with_gru_forward.22} parent=0 // pred_check
    _
  $region11: #{bert_with_gru_forward.22} parent=0 // pred_check_branch
    %13 = sbr.rel (0) target = $region13
  $region12: #{bert_with_gru_forward.22} parent=0 // pred_region
    _
  $region13: #{bert_with_gru_forward.22} parent=0 // pred_fallthru
    _
  %v15 = vld [vmem:[%s0] sm:$0xff]
  %v16 = vld [vmem:[%s0 + $0x8] sm:$0xff]
  %v17 = vpack.c.bf16 %v16, %v15
  %v18 = vld [vmem:[%s1] sm:$0xf]
  %v19 = vld [vmem:[%s1 + $0x4] sm:$0xf]
  %v20 = vld [vmem:[%s1 + $0x8] sm:$0xf]
  %v21 = vld [vmem:[%s1 + $0xc] sm:$0xf]
  %v22 = vld [vmem:[%s2] sm:$0x1]
  %v24 = vperm.slane %v22, 0
  %v30 = vunpack.c.l.b16 %v18
  %v31 = vunpack.c.l.b16 %v19
  %v32 = vunpack.c.l.b16 %v20
  %v33 = vunpack.c.l.b16 %v21
  %v34 = vpack.c.b16 %v31, %v30
  %v35 = vpack.c.b16 %v33, %v32
  %vm38 = vcmask 261120
  %v40 = vsel %vm38, %v17, 0
  %42 = vmatpush.bf16.msra.mxu0 0
  %43 = vmatpush.bf16.msra.mxu0 0
  %44 = vmatpush.bf16.msra.mxu0 0
  %45 = vmatpush.bf16.msra.mxu0 0
  %46 = vmatpush.bf16.msra.mxu0 0
  %47 = vmatpush.bf16.msra.mxu0 0
  %48 = vmatpush.bf16.msra.mxu0 %v35
  %49 = vmatpush.bf16.msra.mxu0 %v34
  %50 = vmatmul.bf16.gmra.mxu0 %v40
  %v51 = vpop.f32.mrf.mxu0
  %v52 = vadd.f32 %v24, %v51
  %v53 = vpop.f32.mrf.mxu0
  %v54 = vadd.f32 %v24, %v53
  %55 = vdwg.mxu0
  %v56 = vmul.f32 %v52, %v52
  %v57 = vmul.f32 %v54, %v54
  %v58 = vmul.f32 %v52, %v56
  %v59 = vmul.f32 %v54, %v57
  %v60 = vmul.f32 %v58, 0.044715
  %v61 = vmul.f32 %v59, 0.044715
  %v62 = vadd.f32 %v52, %v60
  %v63 = vadd.f32 %v54, %v61
  %v64 = vmul.f32 %v62, 0.7978846
  %v65 = vmul.f32 %v63, 0.7978846
  %v66 = vtanh.pop %v64
  %v67 = vtanh.pop %v65
  %v68 = vadd.f32 %v66, 1.0
  %v69 = vadd.f32 %v67, 1.0
  %v70 = vmul.f32 %v68, 0.5
  %v71 = vmul.f32 %v69, 0.5
  %v72 = vmul.f32 %v52, %v70
  %v73 = vmul.f32 %v54, %v71
  %vm74 = vcmask 523264
  %75 = vst.msk [vmem:[%s3] sm:$0xff] %vm74, %v72
  %76 = vst.msk [vmem:[%s3 + $0x8] sm:$0xff] %vm74, %v73
  // Predicated region
  $region14: #{bert_with_gru_forward.22} parent=0 // pred_check
    _
  $region15: #{bert_with_gru_forward.22} parent=0 // pred_check_branch
    %78 = sbr.rel (0) target = $region17
  $region16: #{bert_with_gru_forward.22} parent=0 // pred_region
    _
  $region17: #{bert_with_gru_forward.22} parent=0 // pred_fallthru
    _
  // Predicated region
  $region18: #{bert_with_gru_forward.22} parent=0 // pred_check
    _
  $region19: #{bert_with_gru_forward.22} parent=0 // pred_check_branch
    %80 = sbr.rel (0) target = $region21
  $region20: #{bert_with_gru_forward.22} parent=0 // pred_region
    _
  $region21: #{bert_with_gru_forward.22} parent=0 // pred_fallthru
    _

// kernel: bert_with_gru_forward.23
$region0: #{bert_with_gru_forward.23}
  #allocation0 [shape = 'u32[]', space=smem, size = 0x4, offset = 0x4, fixed_abs, tag = 'smem constant byte address 0x4 - core index']
  #allocation1 [shape = 'u32[72,128]{1,0:T(1,128)}', space=vmem, size = 0x9000, scoped, tag = 'internal scratch']
  %s0 = inlined_call_operand.vmem [shape: f32[16,64], index: 0, kind: input, shape index: {}]
  %s1 = inlined_call_operand.vmem [shape: bf16[64,32], index: 1, kind: input, shape index: {}]
  %s2 = inlined_call_operand.vmem [shape: f32[1,32], index: 2, kind: input, shape index: {}]
  %s3 = inlined_call_operand.vmem [shape: f32[16,32], index: 3, kind: input, shape index: {}]
  %s4 = inlined_call_operand.vmem [shape: f32[1,32], index: 4, kind: input, shape index: {}]
  %s5 = inlined_call_operand.vmem [shape: f32[1,32], index: 5, kind: input, shape index: {}]
  %s6 = inlined_call_operand.vmem [shape: f32[16,32], index: 6, kind: output, shape index: {}]
  %s7 = sld [smem:[#allocation0]]
  $region34: #{bert_with_gru_forward.23} parent=0
    _
  %s9 = ssub.s32 1, %s7
  %s10 = scalar_select 0, %s9, %s7
  // Predicated region
  $region2: #{bert_with_gru_forward.23} parent=0 // pred_check
    _
  $region3: #{bert_with_gru_forward.23} parent=0 // pred_check_branch
    %12 = sbr.rel (0) target = $region5
  $region4: #{bert_with_gru_forward.23} parent=0 // pred_region
    _
  $region5: #{bert_with_gru_forward.23} parent=0 // pred_fallthru
    _
  // Predicated region
  $region6: #{bert_with_gru_forward.23} parent=0 // pred_check
    _
  $region7: #{bert_with_gru_forward.23} parent=0 // pred_check_branch
    %14 = sbr.rel (0) target = $region9
  $region8: #{bert_with_gru_forward.23} parent=0 // pred_region
    _
  $region9: #{bert_with_gru_forward.23} parent=0 // pred_fallthru
    _
  // Predicated region
  $region10: #{bert_with_gru_forward.23} parent=0 // pred_check
    _
  $region11: #{bert_with_gru_forward.23} parent=0 // pred_check_branch
    %16 = sbr.rel (0) target = $region13
  $region12: #{bert_with_gru_forward.23} parent=0 // pred_region
    _
  $region13: #{bert_with_gru_forward.23} parent=0 // pred_fallthru
    _
  // Predicated region
  $region14: #{bert_with_gru_forward.23} parent=0 // pred_check
    _
  $region15: #{bert_with_gru_forward.23} parent=0 // pred_check_branch
    %18 = sbr.rel (0) target = $region17
  $region16: #{bert_with_gru_forward.23} parent=0 // pred_region
    _
  $region17: #{bert_with_gru_forward.23} parent=0 // pred_fallthru
    _
  // Predicated region
  $region18: #{bert_with_gru_forward.23} parent=0 // pred_check
    _
  $region19: #{bert_with_gru_forward.23} parent=0 // pred_check_branch
    %20 = sbr.rel (0) target = $region21
  $region20: #{bert_with_gru_forward.23} parent=0 // pred_region
    _
  $region21: #{bert_with_gru_forward.23} parent=0 // pred_fallthru
    _
  // Predicated region
  $region22: #{bert_with_gru_forward.23} parent=0 // pred_check
    _
  $region23: #{bert_with_gru_forward.23} parent=0 // pred_check_branch
    %22 = sbr.rel (0) target = $region25
  $region24: #{bert_with_gru_forward.23} parent=0 // pred_region
    _
  $region25: #{bert_with_gru_forward.23} parent=0 // pred_fallthru
    _
  %v24 = vld [vmem:[%s0] sm:$0xff]
  %v25 = vld [vmem:[%s0 + $0x8] sm:$0xff]
  %v26 = vpack.c.bf16 %v25, %v24
  %v27 = vld [vmem:[%s1] sm:$0xf]
  %v28 = vld [vmem:[%s1 + $0x4] sm:$0xf]
  %v29 = vld [vmem:[%s1 + $0x8] sm:$0xf]
  %v30 = vld [vmem:[%s1 + $0xc] sm:$0xf]
  %v31 = vld [vmem:[%s1 + $0x10] sm:$0xf]
  %v32 = vld [vmem:[%s1 + $0x14] sm:$0xf]
  %v33 = vld [vmem:[%s1 + $0x18] sm:$0xf]
  %v34 = vld [vmem:[%s1 + $0x1c] sm:$0xf]
  %v35 = vld [vmem:[%s2] sm:$0x1]
  %v37 = vperm.slane %v35, 0
  %v47 = vunpack.c.l.b16 %v27
  %v48 = vunpack.c.l.b16 %v28
  %v49 = vunpack.c.l.b16 %v29
  %v50 = vunpack.c.l.b16 %v30
  %v51 = vunpack.c.l.b16 %v31
  %v52 = vunpack.c.l.b16 %v32
  %v53 = vunpack.c.l.b16 %v33
  %v54 = vunpack.c.l.b16 %v34
  %v55 = vpack.c.b16 %v48, %v47
  %v56 = vpack.c.b16 %v50, %v49
  %v57 = vpack.c.b16 %v52, %v51
  %v58 = vpack.c.b16 %v54, %v53
  %vm63 = vcmask 523264
  %v65 = vsel %vm63, %v26, 0
  %67 = vmatpush.bf16.msra.mxu0 0
  %68 = vmatpush.bf16.msra.mxu0 0
  %69 = vmatpush.bf16.msra.mxu0 0
  %70 = vmatpush.bf16.msra.mxu0 0
  %71 = vmatpush.bf16.msra.mxu0 %v58
  %72 = vmatpush.bf16.msra.mxu0 %v57
  %73 = vmatpush.bf16.msra.mxu0 %v56
  %74 = vmatpush.bf16.msra.mxu0 %v55
  %75 = vmatmul.bf16.gmra.mxu0 %v65
  %v76 = vpop.f32.mrf.mxu0
  %v77 = vadd.f32 %v37, %v76
  %v78 = vpop.f32.mrf.mxu0
  %v79 = vadd.f32 %v37, %v78
  %80 = vdwg.mxu0
  %v81 = vld [vmem:[%s3] sm:$0xff]
  %v82 = vld [vmem:[%s3 + $0x8] sm:$0xff]
  %v83 = vadd.f32 %v77, %v81
  %v84 = vadd.f32 %v79, %v82
  %vm85 = vcmask 261120
  %v86 = vsel %vm85, %v83, 0.0
  %87 = vadd.xlane.f32.xlu0 %v86
  %v88 = vpop.xlane.xlu0 %87
  %v89 = vsel %vm85, %v84, 0.0
  %90 = vadd.xlane.f32.xlu0 %v89
  %v91 = vpop.xlane.xlu0 %90
  %v92 = vrcp.pop 32.0
  %v93 = vmul.f32 32.0, %v92
  %v94 = vsub.f32 1.0, %v93
  %v95 = vmul.f32 %v92, %v94
  %v96 = vadd.f32 %v92, %v95
  %vm97 = vweird.f32 %v92
  %v98 = vsel %vm97, %v92, %v96
  %v99 = vmul.f32 %v88, %v98
  %v100 = vmul.f32 %v91, %v98
  %v101 = vsub.f32 %v83, %v99
  %v102 = vsub.f32 %v84, %v100
  %v103 = vmul.f32 %v101, %v101
  %v104 = vmul.f32 %v102, %v102
  %v105 = vsel %vm85, %v103, 0.0
  %106 = vadd.xlane.f32.xlu0 %v105
  %v107 = vpop.xlane.xlu0 %106
  %v108 = vsel %vm85, %v104, 0.0
  %109 = vadd.xlane.f32.xlu0 %v108
  %v110 = vpop.xlane.xlu0 %109
  %v111 = vmul.f32 %v107, %v98
  %v112 = vmul.f32 %v110, %v98
  %v113 = vadd.f32 %v111, 1e-12
  %v114 = vadd.f32 %v112, 1e-12
  %v115 = vrsqrt.pop %v113
  %v116 = vmul.f32 %v115, %v113
  %v117 = vmul.f32 %v116, %v115
  %v118 = vmul.f32 0.5, %v117
  %v119 = vsub.f32 1.5, %v118
  %v120 = vmul.f32 %v115, %v119
  %vm121 = vweird.f32 %v113
  %vm122 = vweird.f32 %v115
  %vm123 = vmor %vm121, %vm122
  %v124 = vsel %vm123, %v115, %v120
  %v125 = vrsqrt.pop %v114
  %v126 = vmul.f32 %v125, %v114
  %v127 = vmul.f32 %v126, %v125
  %v128 = vmul.f32 0.5, %v127
  %v129 = vsub.f32 1.5, %v128
  %v130 = vmul.f32 %v125, %v129
  %vm131 = vweird.f32 %v114
  %vm132 = vweird.f32 %v125
  %vm133 = vmor %vm131, %vm132
  %v134 = vsel %vm133, %v125, %v130
  %v135 = vmul.f32 %v101, %v124
  %v136 = vmul.f32 %v102, %v134
  %v137 = vld [vmem:[%s4] sm:$0x1]
  %v139 = vperm.slane %v137, 0
  %v141 = vmul.f32 %v135, %v139
  %v142 = vmul.f32 %v136, %v139
  %v143 = vld [vmem:[%s5] sm:$0x1]
  %v145 = vperm.slane %v143, 0
  %v147 = vadd.f32 %v141, %v145
  %v148 = vadd.f32 %v142, %v145
  %149 = vst.msk [vmem:[%s6] sm:$0xff] %vm85, %v147
  %150 = vst.msk [vmem:[%s6 + $0x8] sm:$0xff] %vm85, %v148
  // Predicated region
  $region26: #{bert_with_gru_forward.23} parent=0 // pred_check
    _
  $region27: #{bert_with_gru_forward.23} parent=0 // pred_check_branch
    %152 = sbr.rel (0) target = $region29
  $region28: #{bert_with_gru_forward.23} parent=0 // pred_region
    _
  $region29: #{bert_with_gru_forward.23} parent=0 // pred_fallthru
    _
  // Predicated region
  $region30: #{bert_with_gru_forward.23} parent=0 // pred_check
    _
  $region31: #{bert_with_gru_forward.23} parent=0 // pred_check_branch
    %154 = sbr.rel (0) target = $region33
  $region32: #{bert_with_gru_forward.23} parent=0 // pred_region
    _
  $region33: #{bert_with_gru_forward.23} parent=0 // pred_fallthru
    _

// kernel: bert_with_gru_forward.31
$region0: #{bert_with_gru_forward.31}
  #allocation0 [shape = 'u32[]', space=smem, size = 0x4, offset = 0x4, fixed_abs, tag = 'smem constant byte address 0x4 - core index']
  #allocation1 [shape = 'u32[72,128]{1,0:T(1,128)}', space=vmem, size = 0x9000, scoped, tag = 'internal scratch']
  #allocation2 [shape = 'f32[2,2,32]{2,1,0:T(2,128)}', space=vmem, size = 0x800, scoped, tag = 'scratch operand']
  %s0 = inlined_call_operand.vmem [shape: f32[8,2,96], index: 0, kind: input, shape index: {}]
  %s1 = inlined_call_operand.vmem [shape: f32[8,2,96], index: 1, kind: input, shape index: {}]
  %s2 = inlined_call_operand.vmem [shape: bf16[32,96], index: 2, kind: input, shape index: {}]
  %s3 = inlined_call_operand.vmem [shape: bf16[32,96], index: 3, kind: input, shape index: {}]
  %s4 = inlined_call_operand.hbm [shape: f32[1,96], index: 4, kind: input, shape index: {}]
  %s5 = inlined_call_operand.hbm [shape: f32[1,96], index: 5, kind: input, shape index: {}]
  %s6 = inlined_call_operand.vmem [shape: f32[8,2,32], index: 6, kind: output, shape index: {0}]
  %s7 = inlined_call_operand.vmem [shape: f32[8,2,32], index: 7, kind: output, shape index: {1}]
  %s8 = inlined_call_operand.hbm [shape: f32[2,32], index: 8, kind: output, shape index: {2}]
  %s9 = inlined_call_operand.hbm [shape: f32[2,32], index: 9, kind: output, shape index: {3}]
  %10 = xla_tuple %s6, %s7, %s8, %s9
  %s11 = sld [smem:[#allocation0]]
  $region77: #{bert_with_gru_forward.31} parent=0
    _
  %s13 = ssub.s32 1, %s11
  %s14 = scalar_select 0, %s13, %s11
  $region1: #{bert_with_gru_forward.31} parent=0
    #allocation3 [shape = 'u8[512]{0}', space=vmem, size = 0x400, scoped, tag = 'input window, operand 4, single buffered']
    #allocation4 [shape = 's32[1]{0}', space=sflag, size = 0x4, scoped, tag = 'scoped memory for bert_with_gru_forward.31']
    #allocation5 [shape = 's32[1]{0}', space=sflag, size = 0x4, scoped, tag = 'scoped memory for bert_with_gru_forward.31']
    #allocation6 [shape = 'u8[512]{0}', space=vmem, size = 0x400, scoped, tag = 'input window, operand 5, single buffered']
    #allocation7 [shape = 's32[1]{0}', space=sflag, size = 0x4, scoped, tag = 'scoped memory for bert_with_gru_forward.31']
    #allocation8 [shape = 'u8[1024]{0}', space=vmem, size = 0x400, scoped, tag = 'output window, operand 2, single buffered']
    #allocation9 [shape = 'u8[1024]{0}', space=vmem, size = 0x400, scoped, tag = 'output window, operand 3, single buffered']
    #allocation10 [shape = 's32[1]{0}', space=sflag, size = 0x4, scoped, tag = 'scoped memory for bert_with_gru_forward.31']
    %15 = vsyncpa [#allocation4], 0
    %16 = vsyncpa [#allocation7], 0
    %17 = vsyncpa [#allocation5], 0
    %18 = vsyncpa [#allocation10], 0
    // Predicated region
    $region2: #{bert_with_gru_forward.31} parent=1 // pred_check
      _
    $region3: #{bert_with_gru_forward.31} parent=1 // pred_check_branch
      %20 = sbr.rel (0) target = $region5
    $region4: #{bert_with_gru_forward.31} parent=1 // pred_region
      _
    $region5: #{bert_with_gru_forward.31} parent=1 // pred_fallthru
      _
    // Predicated region
    $region6: #{bert_with_gru_forward.31} parent=1 // pred_check
      _
    $region7: #{bert_with_gru_forward.31} parent=1 // pred_check_branch
      %22 = sbr.rel (0) target = $region9
    $region8: #{bert_with_gru_forward.31} parent=1 // pred_region
      %s23 = ssub.s32 0, 0
      %s24 = smul.u32 8, %s23
      %p25 = scmp.lt.s32.totalorder %s24, 7
      %s26 = scalar_select %p25, %s24, 7
      %s27 = smul.addr %s26, 2
      %s28 = scalar_lea.vmem %s1, %s27
      %s29 = ssub.s32 0, 0
      %s30 = smul.u32 8, %s29
    $region9: #{bert_with_gru_forward.31} parent=1 // pred_fallthru
      _
    // Predicated region
    $region10: #{bert_with_gru_forward.31} parent=1 // pred_check
      _
    $region11: #{bert_with_gru_forward.31} parent=1 // pred_check_branch
      %32 = sbr.rel (0) target = $region13
    $region12: #{bert_with_gru_forward.31} parent=1 // pred_region
      _
    $region13: #{bert_with_gru_forward.31} parent=1 // pred_fallthru
      _
    // Predicated region
    $region14: #{bert_with_gru_forward.31} parent=1 // pred_check
      _
    $region15: #{bert_with_gru_forward.31} parent=1 // pred_check_branch
      %34 = sbr.rel (0) target = $region17
    $region16: #{bert_with_gru_forward.31} parent=1 // pred_region
      _
    $region17: #{bert_with_gru_forward.31} parent=1 // pred_fallthru
      _
    // Predicated region
    $region18: #{bert_with_gru_forward.31} parent=1 // pred_check
      _
    $region19: #{bert_with_gru_forward.31} parent=1 // pred_check_branch
      %36 = sbr.rel (0) target = $region21
    $region20: #{bert_with_gru_forward.31} parent=1 // pred_region
      %38 = vsyncadd [#allocation4], 0
      %s40 = sshll.u32 %s4, 4
      %s41 = int_to_ptr.hbm [resolvable:$true] %s40
      %s42 = sshll.u32 [#allocation3], 4
      %s43 = int_to_ptr.vmem [resolvable:$true] %s42
      %45 = dma.hbm_to_vmem [thread:$0]  %s41, 16, %s43, [#allocation4]
    $region21: #{bert_with_gru_forward.31} parent=1 // pred_fallthru
      _
    // Predicated region
    $region22: #{bert_with_gru_forward.31} parent=1 // pred_check
      _
    $region23: #{bert_with_gru_forward.31} parent=1 // pred_check_branch
      %47 = sbr.rel (0) target = $region25
    $region24: #{bert_with_gru_forward.31} parent=1 // pred_region
      %49 = vsyncadd [#allocation7], 0
      %s51 = sshll.u32 %s5, 4
      %s52 = int_to_ptr.hbm [resolvable:$true] %s51
      %s53 = sshll.u32 [#allocation6], 4
      %s54 = int_to_ptr.vmem [resolvable:$true] %s53
      %56 = dma.hbm_to_vmem [thread:$0]  %s52, 16, %s54, [#allocation7]
    $region25: #{bert_with_gru_forward.31} parent=1 // pred_fallthru
      _
    // Predicated region
    $region26: #{bert_with_gru_forward.31} parent=1 // pred_check
      _
    $region27: #{bert_with_gru_forward.31} parent=1 // pred_check_branch
      %58 = sbr.rel (0) target = $region29
    $region28: #{bert_with_gru_forward.31} parent=1 // pred_region
      %60 = dma.done [#allocation4], 16
    $region29: #{bert_with_gru_forward.31} parent=1 // pred_fallthru
      _
    // Predicated region
    $region30: #{bert_with_gru_forward.31} parent=1 // pred_check
      _
    $region31: #{bert_with_gru_forward.31} parent=1 // pred_check_branch
      %62 = sbr.rel (0) target = $region33
    $region32: #{bert_with_gru_forward.31} parent=1 // pred_region
      %64 = dma.done [#allocation7], 16
    $region33: #{bert_with_gru_forward.31} parent=1 // pred_fallthru
      _
    %s65 = ssub.s32 0, 0
    %s66 = smul.u32 8, %s65
    %p67 = scmp.lt.s32.totalorder %s66, 7
    %s68 = scalar_select %p67, %s66, 7
    %s69 = smul.addr %s68, 2
    %s70 = scalar_lea.vmem %s1, %s69
    %s71 = ssub.s32 0, 0
    %s72 = smul.u32 8, %s71
    %p73 = scmp.lt.s32.totalorder %s72, 7
    %s74 = scalar_select %p73, %s72, 7
    %s75 = smul.addr %s74, 2
    %s76 = scalar_lea.vmem %s7, %s75
    %s77 = ssub.s32 0, 0
    %s78 = smul.u32 8, %s77
    %p79 = scmp.lt.s32.totalorder %s78, 7
    %s80 = scalar_select %p79, %s78, 7
    %s81 = smul.addr %s80, 2
    %s82 = scalar_lea.vmem %s1, %s81
    %s83 = ssub.s32 0, 0
    %s84 = smul.u32 8, %s83
    %s85 = ssub.s32 0, 0
    %s86 = smul.u32 8, %s85
    %p87 = scmp.lt.s32.totalorder %s86, 7
    %s88 = scalar_select %p87, %s86, 7
    %s89 = smul.addr %s88, 2
    %s90 = scalar_lea.vmem %s7, %s89
    %s91 = ssub.s32 0, 0
    %s92 = smul.u32 8, %s91
    %p94 = scmp.eq.s32.totalorder 0, 0
    // Predicated region
    $region34: #{bert_with_gru_forward.31} parent=1 // pred_check
      %p95 = pneg %p94
    $region35: #{bert_with_gru_forward.31} parent=1 // pred_check_branch
      %97 = sbr.rel (%p95) target = $region37
    $region36: #{bert_with_gru_forward.31} parent=1 // pred_region
      %vm98 = vcmask 254976
      %99 = vst.msk [vmem:[#allocation2] sm:$0x3] %vm98, 0.0
      %100 = vst.msk [vmem:[#allocation2 + $0x2] sm:$0x3] %vm98, 0.0
    $region37: #{bert_with_gru_forward.31} parent=1 // pred_fallthru
      _
    %v101 = vld [vmem:[%s2] sm:$0xf]
    %v102 = vld [vmem:[%s2 + $0x4] sm:$0xf]
    %v103 = vld [vmem:[%s2 + $0x8] sm:$0xf]
    %v104 = vld [vmem:[%s2 + $0xc] sm:$0xf]
    %v105 = vld [vmem:[%s3] sm:$0xf]
    %v106 = vld [vmem:[%s3 + $0x4] sm:$0xf]
    %v107 = vld [vmem:[%s3 + $0x8] sm:$0xf]
    %v108 = vld [vmem:[%s3 + $0xc] sm:$0xf]
    %v109 = vld [vmem:[#allocation3] sm:$0x1]
    %v110 = vld [vmem:[#allocation6] sm:$0x1]
    %v111 = vld [vmem:[#allocation2] sm:$0x3]
    %s112 = scalar_lea.vmem [#allocation2], 2
    %v113 = vld [vmem:[%s112] sm:$0x3]
    loop: start=0, step=1, limit=8
    $region38: #{bert_with_gru_forward.31} parent=1 // loop_pre_header
      _
    $region39: #{bert_with_gru_forward.31} parent=1 // loop_header
      %s115 = sphi 0, %s119
      %p116 = scmp.ge.s32.totalorder %s115, 8
      %v120 = vphi %v111, %v282
      %v121 = vphi %v113, %v289
    $region40: #{bert_with_gru_forward.31} parent=1 // loop_header_branch
      %118 = sbr.rel (%p116) target = $region44
    $region41: #{bert_with_gru_forward.31} parent=1 // loop_body
      %s122 = ssub.s32 7, %s115
      %s123 = smul.u32 %s115, 2
      %s124 = scalar_lea.vmem %s0, %s123
      %v125 = vld [vmem:[%s124] sm:$0x3]
      %v126 = vpack.c.bf16 %v120, %v120
      %v128 = vperm.slane %v109, 0
      %v134 = vunpack.c.l.b16 %v101
      %v135 = vunpack.c.l.b16 %v102
      %v136 = vunpack.c.l.b16 %v103
      %v137 = vunpack.c.l.b16 %v104
      %v138 = vpack.c.b16 %v135, %v134
      %v139 = vpack.c.b16 %v137, %v136
      %vm142 = vcmask 261120
      %v144 = vsel %vm142, %v126, 0
      %146 = vmatpush.bf16.msra.mxu0 0
      %147 = vmatpush.bf16.msra.mxu0 0
      %148 = vmatpush.bf16.msra.mxu0 0
      %149 = vmatpush.bf16.msra.mxu0 0
      %150 = vmatpush.bf16.msra.mxu0 0
      %151 = vmatpush.bf16.msra.mxu0 0
      %152 = vmatpush.bf16.msra.mxu0 %v139
      %153 = vmatpush.bf16.msra.mxu0 %v138
      %154 = vmatmul.bf16.gmra.mxu0 %v144
      %v155 = vpop.f32.mrf.mxu0
      %v156 = vadd.f32 %v128, %v155
      %v157 = vpop.f32.mrf.mxu0
      %158 = vdwg.mxu0
      %v159 = vadd.f32 %v125, %v156
      %v160 = vxor.u32 %v159, 2147483648
      %v161 = vmul.f32 %v160, 1.442695
      %v162 = vpow.pop %v161
      %v163 = vadd.f32 %v162, 1.0
      %v164 = vrcp.pop %v163
      %v165 = vmul.f32 %v163, %v164
      %v166 = vsub.f32 1.0, %v165
      %v167 = vmul.f32 %v164, %v166
      %v168 = vadd.f32 %v164, %v167
      %vm169 = vweird.f32 %v163
      %vm170 = vweird.f32 %v164
      %vm171 = vmor %vm169, %vm170
      %v172 = vsel %vm171, %v164, %v168
      %v173 = vand.u32 2147483647, %v163
      %vm174 = vcmp.eq.f32.partialorder %v173, 8.507059e+37
      %v175 = vand.u32 %v163, 2147483648
      %v176 = vor.u32 1.1754944e-38, %v175
      %v177 = vsel %vm174, %v176, %v172
      %v178 = vmul.f32 1.0, %v177
      %180 = vrot.lane.b32.xlu0 %v156, 64
      %v181 = vpop.permute.xlu0 %180
      %v183 = vmul.f32 %v178, %v181
      %185 = vrot.lane.b32.xlu0 %v183, 64
      %v186 = vpop.permute.xlu0 %185
      %v188 = vadd.f32 %v125, %v186
      %v189 = vtanh.pop %v188
      %v190 = vsub.f32 1.0, %v178
      %192 = vrot.lane.b32.xlu0 %v189, 96
      %v193 = vpop.permute.xlu0 %192
      %v195 = vmul.f32 %v190, %v193
      %197 = vrot.lane.b32.xlu0 %v120, 32
      %v198 = vpop.permute.xlu0 %197
      %v200 = vmul.f32 %v178, %v198
      %v201 = vadd.f32 %v195, %v200
      %s202 = smul.u32 %s122, 2
      %s203 = scalar_lea.vmem %s82, %s202
      %v204 = vld [vmem:[%s203] sm:$0x3]
      %v205 = vpack.c.bf16 %v121, %v121
      %v207 = vperm.slane %v110, 0
      %v213 = vunpack.c.l.b16 %v105
      %v214 = vunpack.c.l.b16 %v106
      %v215 = vunpack.c.l.b16 %v107
      %v216 = vunpack.c.l.b16 %v108
      %v217 = vpack.c.b16 %v214, %v213
      %v218 = vpack.c.b16 %v216, %v215
      %v222 = vsel %vm142, %v205, 0
      %224 = vmatpush.bf16.msra.mxu0 0
      %225 = vmatpush.bf16.msra.mxu0 0
      %226 = vmatpush.bf16.msra.mxu0 0
      %227 = vmatpush.bf16.msra.mxu0 0
      %228 = vmatpush.bf16.msra.mxu0 0
      %229 = vmatpush.bf16.msra.mxu0 0
      %230 = vmatpush.bf16.msra.mxu0 %v218
      %231 = vmatpush.bf16.msra.mxu0 %v217
      %232 = vmatmul.bf16.gmra.mxu0 %v222
      %v233 = vpop.f32.mrf.mxu0
      %v234 = vadd.f32 %v207, %v233
      %v235 = vpop.f32.mrf.mxu0
      %236 = vdwg.mxu0
      %v237 = vadd.f32 %v204, %v234
      %v238 = vxor.u32 %v237, 2147483648
      %v239 = vmul.f32 %v238, 1.442695
      %v240 = vpow.pop %v239
      %v241 = vadd.f32 %v240, 1.0
      %v242 = vrcp.pop %v241
      %v243 = vmul.f32 %v241, %v242
      %v244 = vsub.f32 1.0, %v243
      %v245 = vmul.f32 %v242, %v244
      %v246 = vadd.f32 %v242, %v245
      %vm247 = vweird.f32 %v241
      %vm248 = vweird.f32 %v242
      %vm249 = vmor %vm247, %vm248
      %v250 = vsel %vm249, %v242, %v246
      %v251 = vand.u32 2147483647, %v241
      %vm252 = vcmp.eq.f32.partialorder %v251, 8.507059e+37
      %v253 = vand.u32 %v241, 2147483648
      %v254 = vor.u32 1.1754944e-38, %v253
      %v255 = vsel %vm252, %v254, %v250
      %v256 = vmul.f32 1.0, %v255
      %258 = vrot.lane.b32.xlu0 %v234, 64
      %v259 = vpop.permute.xlu0 %258
      %v261 = vmul.f32 %v256, %v259
      %263 = vrot.lane.b32.xlu0 %v261, 64
      %v264 = vpop.permute.xlu0 %263
      %v266 = vadd.f32 %v204, %v264
      %v267 = vtanh.pop %v266
      %v268 = vsub.f32 1.0, %v256
      %270 = vrot.lane.b32.xlu0 %v267, 96
      %v271 = vpop.permute.xlu0 %270
      %v273 = vmul.f32 %v268, %v271
      %275 = vrot.lane.b32.xlu0 %v121, 32
      %v276 = vpop.permute.xlu0 %275
      %v278 = vmul.f32 %v256, %v276
      %v279 = vadd.f32 %v273, %v278
      %281 = vrot.lane.b32.xlu0 %v201, 96
      %v282 = vpop.permute.xlu0 %281
      %s284 = scalar_lea.vmem %s6, %s123
      %vm285 = vcmask 254976
      %286 = vst.msk [vmem:[%s284] sm:$0x3] %vm285, %v282
      %288 = vrot.lane.b32.xlu0 %v279, 96
      %v289 = vpop.permute.xlu0 %288
      %s291 = scalar_lea.vmem %s90, %s202
      %292 = vst.msk [vmem:[%s291] sm:$0x3] %vm285, %v289
    $region42: #{bert_with_gru_forward.31} parent=1 // loop_footer
      %s119 = sadd.s32 1, %s115
    $region43: #{bert_with_gru_forward.31} parent=1 // loop_footer_branch
      %114 = sbr.rel target = $region39
    $region44: #{bert_with_gru_forward.31} parent=1 // loop_exit
      _
    %vm293 = vcmask 254976
    %294 = vst.msk [vmem:[#allocation2] sm:$0x3] %vm293, %v120
    %295 = vst.msk [vmem:[%s112] sm:$0x3] %vm293, %v121
    %296 = vst.msk [vmem:[#allocation8] sm:$0x3] %vm293, %v120
    %297 = vst.msk [vmem:[#allocation9] sm:$0x3] %vm293, %v121
    %s298 = ssub.s32 0, 0
    %s299 = smul.u32 8, %s298
    %p300 = scmp.lt.s32.totalorder %s299, 7
    %s301 = scalar_select %p300, %s299, 7
    %s302 = smul.addr %s301, 2
    %s303 = scalar_lea.vmem %s7, %s302
    // Predicated region
    $region45: #{bert_with_gru_forward.31} parent=1 // pred_check
      _
    $region46: #{bert_with_gru_forward.31} parent=1 // pred_check_branch
      %305 = sbr.rel (0) target = $region48
    $region47: #{bert_with_gru_forward.31} parent=1 // pred_region
      _
    $region48: #{bert_with_gru_forward.31} parent=1 // pred_fallthru
      _
    // Predicated region
    $region49: #{bert_with_gru_forward.31} parent=1 // pred_check
      _
    $region50: #{bert_with_gru_forward.31} parent=1 // pred_check_branch
      %307 = sbr.rel (0) target = $region52
    $region51: #{bert_with_gru_forward.31} parent=1 // pred_region
      %s308 = ssub.s32 0, 0
      %s309 = smul.u32 8, %s308
    $region52: #{bert_with_gru_forward.31} parent=1 // pred_fallthru
      _
    // Predicated region
    $region53: #{bert_with_gru_forward.31} parent=1 // pred_check
      _
    $region54: #{bert_with_gru_forward.31} parent=1 // pred_check_branch
      %311 = sbr.rel (0) target = $region56
    $region55: #{bert_with_gru_forward.31} parent=1 // pred_region
      %313 = vsyncadd [#allocation5], 0
      %s315 = sshll.u32 [#allocation8], 4
      %s316 = int_to_ptr.vmem [resolvable:$true] %s315
      %s317 = sshll.u32 %s8, 4
      %s318 = int_to_ptr.hbm [resolvable:$true] %s317
      %320 = dma.vmem_to_hbm [thread:$0]  %s316, 32, %s318, [#allocation5]
    $region56: #{bert_with_gru_forward.31} parent=1 // pred_fallthru
      _
    // Predicated region
    $region57: #{bert_with_gru_forward.31} parent=1 // pred_check
      _
    $region58: #{bert_with_gru_forward.31} parent=1 // pred_check_branch
      %322 = sbr.rel (0) target = $region60
    $region59: #{bert_with_gru_forward.31} parent=1 // pred_region
      %324 = vsyncadd [#allocation10], 0
      %s326 = sshll.u32 [#allocation9], 4
      %s327 = int_to_ptr.vmem [resolvable:$true] %s326
      %s328 = sshll.u32 %s9, 4
      %s329 = int_to_ptr.hbm [resolvable:$true] %s328
      %331 = dma.vmem_to_hbm [thread:$0]  %s327, 32, %s329, [#allocation10]
    $region60: #{bert_with_gru_forward.31} parent=1 // pred_fallthru
      _
    // Predicated region
    $region61: #{bert_with_gru_forward.31} parent=1 // pred_check
      _
    $region62: #{bert_with_gru_forward.31} parent=1 // pred_check_branch
      %333 = sbr.rel (0) target = $region64
    $region63: #{bert_with_gru_forward.31} parent=1 // pred_region
      _
    $region64: #{bert_with_gru_forward.31} parent=1 // pred_fallthru
      _
    // Predicated region
    $region65: #{bert_with_gru_forward.31} parent=1 // pred_check
      _
    $region66: #{bert_with_gru_forward.31} parent=1 // pred_check_branch
      %335 = sbr.rel (0) target = $region68
    $region67: #{bert_with_gru_forward.31} parent=1 // pred_region
      %s336 = ssub.s32 0, 0
      %s337 = smul.u32 8, %s336
      %p338 = scmp.lt.s32.totalorder %s337, 7
      %s339 = scalar_select %p338, %s337, 7
      %s340 = smul.addr %s339, 2
      %s341 = scalar_lea.vmem %s7, %s340
    $region68: #{bert_with_gru_forward.31} parent=1 // pred_fallthru
      _
    // Predicated region
    $region69: #{bert_with_gru_forward.31} parent=1 // pred_check
      _
    $region70: #{bert_with_gru_forward.31} parent=1 // pred_check_branch
      %343 = sbr.rel (0) target = $region72
    $region71: #{bert_with_gru_forward.31} parent=1 // pred_region
      %345 = dma.done [#allocation5], 32
    $region72: #{bert_with_gru_forward.31} parent=1 // pred_fallthru
      _
    // Predicated region
    $region73: #{bert_with_gru_forward.31} parent=1 // pred_check
      _
    $region74: #{bert_with_gru_forward.31} parent=1 // pred_check_branch
      %347 = sbr.rel (0) target = $region76
    $region75: #{bert_with_gru_forward.31} parent=1 // pred_region
      %349 = dma.done [#allocation10], 32
    $region76: #{bert_with_gru_forward.31} parent=1 // pred_fallthru
      _
    %350 = vsyncpa [#allocation4], 1
    %351 = vsyncpa [#allocation7], 1
    %352 = vsyncpa [#allocation5], 1
    %353 = vsyncpa [#allocation10], 1

// kernel: bert_with_gru_forward.33
$region0: #{bert_with_gru_forward.33}
  #allocation0 [shape = 'u32[]', space=smem, size = 0x4, offset = 0x4, fixed_abs, tag = 'smem constant byte address 0x4 - core index']
  #allocation1 [shape = 'u32[72,128]{1,0:T(1,128)}', space=vmem, size = 0x9000, scoped, tag = 'internal scratch']
  %s0 = inlined_call_operand.vmem [shape: f32[16,32], index: 0, kind: input, shape index: {}]
  %s1 = inlined_call_operand.vmem [shape: f32[16,32], index: 1, kind: input, shape index: {}]
  %s2 = inlined_call_operand.vmem [shape: bf16[32,96], index: 2, kind: input, shape index: {}]
  %s3 = inlined_call_operand.vmem [shape: bf16[32,96], index: 3, kind: input, shape index: {}]
  %s4 = inlined_call_operand.hbm [shape: f32[1,96], index: 4, kind: input, shape index: {}]
  %s5 = inlined_call_operand.vmem [shape: f32[16,96], index: 5, kind: output, shape index: {}]
  %s6 = sld [smem:[#allocation0]]
  $region34: #{bert_with_gru_forward.33} parent=0
    _
  %s8 = ssub.s32 1, %s6
  %s9 = scalar_select 0, %s8, %s6
  $region1: #{bert_with_gru_forward.33} parent=0
    #allocation2 [shape = 'u8[512]{0}', space=vmem, size = 0x400, scoped, tag = 'input window, operand 4, single buffered']
    #allocation3 [shape = 's32[1]{0}', space=sflag, size = 0x4, scoped, tag = 'scoped memory for bert_with_gru_forward.33']
    %10 = vsyncpa [#allocation3], 0
    // Predicated region
    $region2: #{bert_with_gru_forward.33} parent=1 // pred_check
      _
    $region3: #{bert_with_gru_forward.33} parent=1 // pred_check_branch
      %12 = sbr.rel (0) target = $region5
    $region4: #{bert_with_gru_forward.33} parent=1 // pred_region
      _
    $region5: #{bert_with_gru_forward.33} parent=1 // pred_fallthru
      _
    // Predicated region
    $region6: #{bert_with_gru_forward.33} parent=1 // pred_check
      _
    $region7: #{bert_with_gru_forward.33} parent=1 // pred_check_branch
      %14 = sbr.rel (0) target = $region9
    $region8: #{bert_with_gru_forward.33} parent=1 // pred_region
      _
    $region9: #{bert_with_gru_forward.33} parent=1 // pred_fallthru
      _
    // Predicated region
    $region10: #{bert_with_gru_forward.33} parent=1 // pred_check
      _
    $region11: #{bert_with_gru_forward.33} parent=1 // pred_check_branch
      %16 = sbr.rel (0) target = $region13
    $region12: #{bert_with_gru_forward.33} parent=1 // pred_region
      _
    $region13: #{bert_with_gru_forward.33} parent=1 // pred_fallthru
      _
    // Predicated region
    $region14: #{bert_with_gru_forward.33} parent=1 // pred_check
      _
    $region15: #{bert_with_gru_forward.33} parent=1 // pred_check_branch
      %18 = sbr.rel (0) target = $region17
    $region16: #{bert_with_gru_forward.33} parent=1 // pred_region
      _
    $region17: #{bert_with_gru_forward.33} parent=1 // pred_fallthru
      _
    // Predicated region
    $region18: #{bert_with_gru_forward.33} parent=1 // pred_check
      _
    $region19: #{bert_with_gru_forward.33} parent=1 // pred_check_branch
      %20 = sbr.rel (0) target = $region21
    $region20: #{bert_with_gru_forward.33} parent=1 // pred_region
      %22 = vsyncadd [#allocation3], 0
      %s24 = sshll.u32 %s4, 4
      %s25 = int_to_ptr.hbm [resolvable:$true] %s24
      %s26 = sshll.u32 [#allocation2], 4
      %s27 = int_to_ptr.vmem [resolvable:$true] %s26
      %29 = dma.hbm_to_vmem [thread:$0]  %s25, 16, %s27, [#allocation3]
    $region21: #{bert_with_gru_forward.33} parent=1 // pred_fallthru
      _
    // Predicated region
    $region22: #{bert_with_gru_forward.33} parent=1 // pred_check
      _
    $region23: #{bert_with_gru_forward.33} parent=1 // pred_check_branch
      %31 = sbr.rel (0) target = $region25
    $region24: #{bert_with_gru_forward.33} parent=1 // pred_region
      %33 = dma.done [#allocation3], 16
    $region25: #{bert_with_gru_forward.33} parent=1 // pred_fallthru
      _
    %v35 = vld [vmem:[%s0] sm:$0xff]
    %v36 = vld [vmem:[%s0 + $0x8] sm:$0xff]
    %v37 = vpack.c.bf16 %v36, %v35
    %v38 = vld [vmem:[%s2] sm:$0xf]
    %v39 = vld [vmem:[%s2 + $0x4] sm:$0xf]
    %v40 = vld [vmem:[%s2 + $0x8] sm:$0xf]
    %v41 = vld [vmem:[%s2 + $0xc] sm:$0xf]
    %v42 = vld [vmem:[%s1] sm:$0xff]
    %v43 = vld [vmem:[%s1 + $0x8] sm:$0xff]
    %v44 = vpack.c.bf16 %v43, %v42
    %v45 = vld [vmem:[%s3] sm:$0xf]
    %v46 = vld [vmem:[%s3 + $0x4] sm:$0xf]
    %v47 = vld [vmem:[%s3 + $0x8] sm:$0xf]
    %v48 = vld [vmem:[%s3 + $0xc] sm:$0xf]
    %v53 = vunpack.c.l.b16 %v45
    %v54 = vunpack.c.l.b16 %v46
    %v55 = vunpack.c.l.b16 %v47
    %v56 = vunpack.c.l.b16 %v48
    %v57 = vpack.c.b16 %v54, %v53
    %v58 = vpack.c.b16 %v56, %v55
    %vm61 = vcmask 261120
    %v63 = vsel %vm61, %v44, 0
    %65 = vmatpush.bf16.msra.mxu0 0
    %66 = vmatpush.bf16.msra.mxu0 0
    %67 = vmatpush.bf16.msra.mxu0 0
    %68 = vmatpush.bf16.msra.mxu0 0
    %69 = vmatpush.bf16.msra.mxu0 0
    %70 = vmatpush.bf16.msra.mxu0 0
    %71 = vmatpush.bf16.msra.mxu0 %v58
    %72 = vmatpush.bf16.msra.mxu0 %v57
    %73 = vmatmul.bf16.gmra.mxu0 %v63
    %v74 = vpop.f32.mrf.mxu0
    %v75 = vadd.f32 0.0, %v74
    %v76 = vpop.f32.mrf.mxu0
    %v77 = vadd.f32 0.0, %v76
    %78 = vdwg.mxu0
    %v83 = vunpack.c.l.b16 %v38
    %v84 = vunpack.c.l.b16 %v39
    %v85 = vunpack.c.l.b16 %v40
    %v86 = vunpack.c.l.b16 %v41
    %v87 = vpack.c.b16 %v84, %v83
    %v88 = vpack.c.b16 %v86, %v85
    %v92 = vsel %vm61, %v37, 0
    %94 = vmatpush.bf16.msra.mxu0 0
    %95 = vmatpush.bf16.msra.mxu0 0
    %96 = vmatpush.bf16.msra.mxu0 0
    %97 = vmatpush.bf16.msra.mxu0 0
    %98 = vmatpush.bf16.msra.mxu0 0
    %99 = vmatpush.bf16.msra.mxu0 0
    %100 = vmatpush.bf16.msra.mxu0 %v88
    %101 = vmatpush.bf16.msra.mxu0 %v87
    %102 = vmatmul.bf16.gmra.mxu0 %v92
    %v103 = vpop.f32.mrf.mxu0
    %v104 = vadd.f32 %v75, %v103
    %v105 = vpop.f32.mrf.mxu0
    %v106 = vadd.f32 %v77, %v105
    %107 = vdwg.mxu0
    %v108 = vld [vmem:[#allocation2] sm:$0x1]
    %v110 = vperm.slane %v108, 0
    %v112 = vadd.f32 %v104, %v110
    %v113 = vadd.f32 %v106, %v110
    %vm114 = vcmask 785408
    %115 = vst.msk [vmem:[%s5] sm:$0xff] %vm114, %v112
    %116 = vst.msk [vmem:[%s5 + $0x8] sm:$0xff] %vm114, %v113
    // Predicated region
    $region26: #{bert_with_gru_forward.33} parent=1 // pred_check
      _
    $region27: #{bert_with_gru_forward.33} parent=1 // pred_check_branch
      %118 = sbr.rel (0) target = $region29
    $region28: #{bert_with_gru_forward.33} parent=1 // pred_region
      _
    $region29: #{bert_with_gru_forward.33} parent=1 // pred_fallthru
      _
    // Predicated region
    $region30: #{bert_with_gru_forward.33} parent=1 // pred_check
      _
    $region31: #{bert_with_gru_forward.33} parent=1 // pred_check_branch
      %120 = sbr.rel (0) target = $region33
    $region32: #{bert_with_gru_forward.33} parent=1 // pred_region
      _
    $region33: #{bert_with_gru_forward.33} parent=1 // pred_fallthru
      _
    %121 = vsyncpa [#allocation3], 1

// kernel: bert_with_gru_forward.35
$region0: #{bert_with_gru_forward.35}
  #allocation0 [shape = 'u32[]', space=smem, size = 0x4, offset = 0x4, fixed_abs, tag = 'smem constant byte address 0x4 - core index']
  #allocation1 [shape = 'u32[72,128]{1,0:T(1,128)}', space=vmem, size = 0x9000, scoped, tag = 'internal scratch']
  %s0 = inlined_call_operand.vmem [shape: f32[2,32], index: 0, kind: input, shape index: {}]
  %s1 = inlined_call_operand.vmem [shape: f32[2,32], index: 1, kind: input, shape index: {}]
  %s2 = inlined_call_operand.vmem [shape: bf16[32,4], index: 2, kind: input, shape index: {}]
  %s3 = inlined_call_operand.vmem [shape: bf16[32,4], index: 3, kind: input, shape index: {}]
  %s4 = inlined_call_operand.vmem [shape: f32[1,4], index: 4, kind: input, shape index: {}]
  %s5 = inlined_call_operand.hbm [shape: f32[2,4], index: 5, kind: output, shape index: {}]
  %s6 = sld [smem:[#allocation0]]
  $region30: #{bert_with_gru_forward.35} parent=0
    _
  %s8 = ssub.s32 1, %s6
  %s9 = scalar_select 0, %s8, %s6
  $region1: #{bert_with_gru_forward.35} parent=0
    #allocation2 [shape = 'u8[1024]{0}', space=vmem, size = 0x400, scoped, tag = 'output window, operand 0, single buffered']
    #allocation3 [shape = 's32[1]{0}', space=sflag, size = 0x4, scoped, tag = 'scoped memory for bert_with_gru_forward.35']
    %10 = vsyncpa [#allocation3], 0
    // Predicated region
    $region2: #{bert_with_gru_forward.35} parent=1 // pred_check
      _
    $region3: #{bert_with_gru_forward.35} parent=1 // pred_check_branch
      %12 = sbr.rel (0) target = $region5
    $region4: #{bert_with_gru_forward.35} parent=1 // pred_region
      _
    $region5: #{bert_with_gru_forward.35} parent=1 // pred_fallthru
      _
    // Predicated region
    $region6: #{bert_with_gru_forward.35} parent=1 // pred_check
      _
    $region7: #{bert_with_gru_forward.35} parent=1 // pred_check_branch
      %14 = sbr.rel (0) target = $region9
    $region8: #{bert_with_gru_forward.35} parent=1 // pred_region
      _
    $region9: #{bert_with_gru_forward.35} parent=1 // pred_fallthru
      _
    // Predicated region
    $region10: #{bert_with_gru_forward.35} parent=1 // pred_check
      _
    $region11: #{bert_with_gru_forward.35} parent=1 // pred_check_branch
      %16 = sbr.rel (0) target = $region13
    $region12: #{bert_with_gru_forward.35} parent=1 // pred_region
      _
    $region13: #{bert_with_gru_forward.35} parent=1 // pred_fallthru
      _
    // Predicated region
    $region14: #{bert_with_gru_forward.35} parent=1 // pred_check
      _
    $region15: #{bert_with_gru_forward.35} parent=1 // pred_check_branch
      %18 = sbr.rel (0) target = $region17
    $region16: #{bert_with_gru_forward.35} parent=1 // pred_region
      _
    $region17: #{bert_with_gru_forward.35} parent=1 // pred_fallthru
      _
    // Predicated region
    $region18: #{bert_with_gru_forward.35} parent=1 // pred_check
      _
    $region19: #{bert_with_gru_forward.35} parent=1 // pred_check_branch
      %20 = sbr.rel (0) target = $region21
    $region20: #{bert_with_gru_forward.35} parent=1 // pred_region
      _
    $region21: #{bert_with_gru_forward.35} parent=1 // pred_fallthru
      _
    %v22 = vld [vmem:[%s0] sm:$0x3]
    %v23 = vpack.c.bf16 %v22, %v22
    %v24 = vld [vmem:[%s2] sm:$0xf]
    %v25 = vld [vmem:[%s2 + $0x4] sm:$0xf]
    %v26 = vld [vmem:[%s2 + $0x8] sm:$0xf]
    %v27 = vld [vmem:[%s2 + $0xc] sm:$0xf]
    %v28 = vld [vmem:[%s1] sm:$0x3]
    %v29 = vpack.c.bf16 %v28, %v28
    %v30 = vld [vmem:[%s3] sm:$0xf]
    %v31 = vld [vmem:[%s3 + $0x4] sm:$0xf]
    %v32 = vld [vmem:[%s3 + $0x8] sm:$0xf]
    %v33 = vld [vmem:[%s3 + $0xc] sm:$0xf]
    %v38 = vunpack.c.l.b16 %v30
    %v39 = vunpack.c.l.b16 %v31
    %v40 = vunpack.c.l.b16 %v32
    %v41 = vunpack.c.l.b16 %v33
    %v42 = vpack.c.b16 %v39, %v38
    %v43 = vpack.c.b16 %v41, %v40
    %vm46 = vcmask 261120
    %v48 = vsel %vm46, %v29, 0
    %50 = vmatpush.bf16.msra.mxu0 0
    %51 = vmatpush.bf16.msra.mxu0 0
    %52 = vmatpush.bf16.msra.mxu0 0
    %53 = vmatpush.bf16.msra.mxu0 0
    %54 = vmatpush.bf16.msra.mxu0 0
    %55 = vmatpush.bf16.msra.mxu0 0
    %56 = vmatpush.bf16.msra.mxu0 %v43
    %57 = vmatpush.bf16.msra.mxu0 %v42
    %58 = vmatmul.bf16.gmra.mxu0 %v48
    %v59 = vpop.f32.mrf.mxu0
    %v60 = vadd.f32 0.0, %v59
    %v61 = vpop.f32.mrf.mxu0
    %62 = vdwg.mxu0
    %v67 = vunpack.c.l.b16 %v24
    %v68 = vunpack.c.l.b16 %v25
    %v69 = vunpack.c.l.b16 %v26
    %v70 = vunpack.c.l.b16 %v27
    %v71 = vpack.c.b16 %v68, %v67
    %v72 = vpack.c.b16 %v70, %v69
    %v76 = vsel %vm46, %v23, 0
    %78 = vmatpush.bf16.msra.mxu0 0
    %79 = vmatpush.bf16.msra.mxu0 0
    %80 = vmatpush.bf16.msra.mxu0 0
    %81 = vmatpush.bf16.msra.mxu0 0
    %82 = vmatpush.bf16.msra.mxu0 0
    %83 = vmatpush.bf16.msra.mxu0 0
    %84 = vmatpush.bf16.msra.mxu0 %v72
    %85 = vmatpush.bf16.msra.mxu0 %v71
    %86 = vmatmul.bf16.gmra.mxu0 %v76
    %v87 = vpop.f32.mrf.mxu0
    %v88 = vadd.f32 %v60, %v87
    %v89 = vpop.f32.mrf.mxu0
    %90 = vdwg.mxu0
    %v91 = vld [vmem:[%s4] sm:$0x1]
    %v93 = vperm.slane %v91, 0
    %v95 = vadd.f32 %v88, %v93
    %vm96 = vcmask 25600
    %97 = vst.msk [vmem:[#allocation2] sm:$0x3] %vm96, %v95
    // Predicated region
    $region22: #{bert_with_gru_forward.35} parent=1 // pred_check
      _
    $region23: #{bert_with_gru_forward.35} parent=1 // pred_check_branch
      %99 = sbr.rel (0) target = $region25
    $region24: #{bert_with_gru_forward.35} parent=1 // pred_region
      %101 = vsyncadd [#allocation3], 0
      %s103 = sshll.u32 [#allocation2], 4
      %s104 = int_to_ptr.vmem [resolvable:$true] %s103
      %s105 = sshll.u32 %s5, 4
      %s106 = int_to_ptr.hbm [resolvable:$true] %s105
      %108 = dma.vmem_to_hbm [thread:$0]  %s104, 32, %s106, [#allocation3]
    $region25: #{bert_with_gru_forward.35} parent=1 // pred_fallthru
      _
    // Predicated region
    $region26: #{bert_with_gru_forward.35} parent=1 // pred_check
      _
    $region27: #{bert_with_gru_forward.35} parent=1 // pred_check_branch
      %110 = sbr.rel (0) target = $region29
    $region28: #{bert_with_gru_forward.35} parent=1 // pred_region
      %112 = dma.done [#allocation3], 32
    $region29: #{bert_with_gru_forward.35} parent=1 // pred_fallthru
      _
    %113 = vsyncpa [#allocation3], 1

// kernel: bert_with_gru_forward.34
$region0: #{bert_with_gru_forward.34}
  #allocation0 [shape = 'u32[]', space=smem, size = 0x4, offset = 0x4, fixed_abs, tag = 'smem constant byte address 0x4 - core index']
  #allocation1 [shape = 'u32[72,128]{1,0:T(1,128)}', space=vmem, size = 0x9000, scoped, tag = 'internal scratch']
  #allocation2 [shape = 'f32[2,2,32]{2,1,0:T(2,128)}', space=vmem, size = 0x800, scoped, tag = 'scratch operand']
  %s0 = inlined_call_operand.vmem [shape: f32[8,2,96], index: 0, kind: input, shape index: {}]
  %s1 = inlined_call_operand.vmem [shape: f32[8,2,96], index: 1, kind: input, shape index: {}]
  %s2 = inlined_call_operand.vmem [shape: bf16[32,96], index: 2, kind: input, shape index: {}]
  %s3 = inlined_call_operand.vmem [shape: bf16[32,96], index: 3, kind: input, shape index: {}]
  %s4 = inlined_call_operand.hbm [shape: f32[1,96], index: 4, kind: input, shape index: {}]
  %s5 = inlined_call_operand.hbm [shape: f32[1,96], index: 5, kind: input, shape index: {}]
  %s6 = inlined_call_operand.vmem [shape: f32[2,32], index: 6, kind: output, shape index: {0}]
  %s7 = inlined_call_operand.vmem [shape: f32[2,32], index: 7, kind: output, shape index: {1}]
  %8 = xla_tuple %s6, %s7
  %s9 = sld [smem:[#allocation0]]
  $region61: #{bert_with_gru_forward.34} parent=0
    _
  %s11 = ssub.s32 1, %s9
  %s12 = scalar_select 0, %s11, %s9
  $region1: #{bert_with_gru_forward.34} parent=0
    #allocation3 [shape = 'u8[512]{0}', space=vmem, size = 0x400, scoped, tag = 'input window, operand 4, single buffered']
    #allocation4 [shape = 's32[1]{0}', space=sflag, size = 0x4, scoped, tag = 'scoped memory for bert_with_gru_forward.34']
    #allocation5 [shape = 'u8[512]{0}', space=vmem, size = 0x400, scoped, tag = 'input window, operand 5, single buffered']
    #allocation6 [shape = 's32[1]{0}', space=sflag, size = 0x4, scoped, tag = 'scoped memory for bert_with_gru_forward.34']
    %13 = vsyncpa [#allocation4], 0
    %14 = vsyncpa [#allocation6], 0
    // Predicated region
    $region2: #{bert_with_gru_forward.34} parent=1 // pred_check
      _
    $region3: #{bert_with_gru_forward.34} parent=1 // pred_check_branch
      %16 = sbr.rel (0) target = $region5
    $region4: #{bert_with_gru_forward.34} parent=1 // pred_region
      _
    $region5: #{bert_with_gru_forward.34} parent=1 // pred_fallthru
      _
    // Predicated region
    $region6: #{bert_with_gru_forward.34} parent=1 // pred_check
      _
    $region7: #{bert_with_gru_forward.34} parent=1 // pred_check_branch
      %18 = sbr.rel (0) target = $region9
    $region8: #{bert_with_gru_forward.34} parent=1 // pred_region
      %s19 = ssub.s32 0, 0
      %s20 = smul.u32 8, %s19
      %p21 = scmp.lt.s32.totalorder %s20, 7
      %s22 = scalar_select %p21, %s20, 7
      %s23 = smul.addr %s22, 2
      %s24 = scalar_lea.vmem %s1, %s23
      %s25 = ssub.s32 0, 0
      %s26 = smul.u32 8, %s25
    $region9: #{bert_with_gru_forward.34} parent=1 // pred_fallthru
      _
    // Predicated region
    $region10: #{bert_with_gru_forward.34} parent=1 // pred_check
      _
    $region11: #{bert_with_gru_forward.34} parent=1 // pred_check_branch
      %28 = sbr.rel (0) target = $region13
    $region12: #{bert_with_gru_forward.34} parent=1 // pred_region
      _
    $region13: #{bert_with_gru_forward.34} parent=1 // pred_fallthru
      _
    // Predicated region
    $region14: #{bert_with_gru_forward.34} parent=1 // pred_check
      _
    $region15: #{bert_with_gru_forward.34} parent=1 // pred_check_branch
      %30 = sbr.rel (0) target = $region17
    $region16: #{bert_with_gru_forward.34} parent=1 // pred_region
      _
    $region17: #{bert_with_gru_forward.34} parent=1 // pred_fallthru
      _
    // Predicated region
    $region18: #{bert_with_gru_forward.34} parent=1 // pred_check
      _
    $region19: #{bert_with_gru_forward.34} parent=1 // pred_check_branch
      %32 = sbr.rel (0) target = $region21
    $region20: #{bert_with_gru_forward.34} parent=1 // pred_region
      %34 = vsyncadd [#allocation4], 0
      %s36 = sshll.u32 %s4, 4
      %s37 = int_to_ptr.hbm [resolvable:$true] %s36
      %s38 = sshll.u32 [#allocation3], 4
      %s39 = int_to_ptr.vmem [resolvable:$true] %s38
      %41 = dma.hbm_to_vmem [thread:$0]  %s37, 16, %s39, [#allocation4]
    $region21: #{bert_with_gru_forward.34} parent=1 // pred_fallthru
      _
    // Predicated region
    $region22: #{bert_with_gru_forward.34} parent=1 // pred_check
      _
    $region23: #{bert_with_gru_forward.34} parent=1 // pred_check_branch
      %43 = sbr.rel (0) target = $region25
    $region24: #{bert_with_gru_forward.34} parent=1 // pred_region
      %45 = vsyncadd [#allocation6], 0
      %s47 = sshll.u32 %s5, 4
      %s48 = int_to_ptr.hbm [resolvable:$true] %s47
      %s49 = sshll.u32 [#allocation5], 4
      %s50 = int_to_ptr.vmem [resolvable:$true] %s49
      %52 = dma.hbm_to_vmem [thread:$0]  %s48, 16, %s50, [#allocation6]
    $region25: #{bert_with_gru_forward.34} parent=1 // pred_fallthru
      _
    // Predicated region
    $region26: #{bert_with_gru_forward.34} parent=1 // pred_check
      _
    $region27: #{bert_with_gru_forward.34} parent=1 // pred_check_branch
      %54 = sbr.rel (0) target = $region29
    $region28: #{bert_with_gru_forward.34} parent=1 // pred_region
      %56 = dma.done [#allocation4], 16
    $region29: #{bert_with_gru_forward.34} parent=1 // pred_fallthru
      _
    // Predicated region
    $region30: #{bert_with_gru_forward.34} parent=1 // pred_check
      _
    $region31: #{bert_with_gru_forward.34} parent=1 // pred_check_branch
      %58 = sbr.rel (0) target = $region33
    $region32: #{bert_with_gru_forward.34} parent=1 // pred_region
      %60 = dma.done [#allocation6], 16
    $region33: #{bert_with_gru_forward.34} parent=1 // pred_fallthru
      _
    %s61 = ssub.s32 0, 0
    %s62 = smul.u32 8, %s61
    %p63 = scmp.lt.s32.totalorder %s62, 7
    %s64 = scalar_select %p63, %s62, 7
    %s65 = smul.addr %s64, 2
    %s66 = scalar_lea.vmem %s1, %s65
    %s67 = ssub.s32 0, 0
    %s68 = smul.u32 8, %s67
    %p69 = scmp.lt.s32.totalorder %s68, 7
    %s70 = scalar_select %p69, %s68, 7
    %s71 = smul.addr %s70, 2
    %s72 = scalar_lea.vmem %s1, %s71
    %s73 = ssub.s32 0, 0
    %s74 = smul.u32 8, %s73
    %p76 = scmp.eq.s32.totalorder 0, 0
    // Predicated region
    $region34: #{bert_with_gru_forward.34} parent=1 // pred_check
      %p77 = pneg %p76
    $region35: #{bert_with_gru_forward.34} parent=1 // pred_check_branch
      %79 = sbr.rel (%p77) target = $region37
    $region36: #{bert_with_gru_forward.34} parent=1 // pred_region
      %vm80 = vcmask 254976
      %81 = vst.msk [vmem:[#allocation2] sm:$0x3] %vm80, 0.0
      %82 = vst.msk [vmem:[#allocation2 + $0x2] sm:$0x3] %vm80, 0.0
    $region37: #{bert_with_gru_forward.34} parent=1 // pred_fallthru
      _
    %v83 = vld [vmem:[%s2] sm:$0xf]
    %v84 = vld [vmem:[%s2 + $0x4] sm:$0xf]
    %v85 = vld [vmem:[%s2 + $0x8] sm:$0xf]
    %v86 = vld [vmem:[%s2 + $0xc] sm:$0xf]
    %v87 = vld [vmem:[%s3] sm:$0xf]
    %v88 = vld [vmem:[%s3 + $0x4] sm:$0xf]
    %v89 = vld [vmem:[%s3 + $0x8] sm:$0xf]
    %v90 = vld [vmem:[%s3 + $0xc] sm:$0xf]
    %v91 = vld [vmem:[#allocation3] sm:$0x1]
    %v92 = vld [vmem:[#allocation5] sm:$0x1]
    %v93 = vld [vmem:[#allocation2] sm:$0x3]
    %s94 = scalar_lea.vmem [#allocation2], 2
    %v95 = vld [vmem:[%s94] sm:$0x3]
    loop: start=0, step=1, limit=8
    $region38: #{bert_with_gru_forward.34} parent=1 // loop_pre_header
      _
    $region39: #{bert_with_gru_forward.34} parent=1 // loop_header
      %s97 = sphi 0, %s101
      %p98 = scmp.ge.s32.totalorder %s97, 8
      %v102 = vphi %v93, %v264
      %v103 = vphi %v95, %v268
    $region40: #{bert_with_gru_forward.34} parent=1 // loop_header_branch
      %100 = sbr.rel (%p98) target = $region44
    $region41: #{bert_with_gru_forward.34} parent=1 // loop_body
      %s104 = ssub.s32 7, %s97
      %s105 = smul.u32 %s97, 2
      %s106 = scalar_lea.vmem %s0, %s105
      %v107 = vld [vmem:[%s106] sm:$0x3]
      %v108 = vpack.c.bf16 %v102, %v102
      %v110 = vperm.slane %v91, 0
      %v116 = vunpack.c.l.b16 %v83
      %v117 = vunpack.c.l.b16 %v84
      %v118 = vunpack.c.l.b16 %v85
      %v119 = vunpack.c.l.b16 %v86
      %v120 = vpack.c.b16 %v117, %v116
      %v121 = vpack.c.b16 %v119, %v118
      %vm124 = vcmask 261120
      %v126 = vsel %vm124, %v108, 0
      %128 = vmatpush.bf16.msra.mxu0 0
      %129 = vmatpush.bf16.msra.mxu0 0
      %130 = vmatpush.bf16.msra.mxu0 0
      %131 = vmatpush.bf16.msra.mxu0 0
      %132 = vmatpush.bf16.msra.mxu0 0
      %133 = vmatpush.bf16.msra.mxu0 0
      %134 = vmatpush.bf16.msra.mxu0 %v121
      %135 = vmatpush.bf16.msra.mxu0 %v120
      %136 = vmatmul.bf16.gmra.mxu0 %v126
      %v137 = vpop.f32.mrf.mxu0
      %v138 = vadd.f32 %v110, %v137
      %v139 = vpop.f32.mrf.mxu0
      %140 = vdwg.mxu0
      %v141 = vadd.f32 %v107, %v138
      %v142 = vxor.u32 %v141, 2147483648
      %v143 = vmul.f32 %v142, 1.442695
      %v144 = vpow.pop %v143
      %v145 = vadd.f32 %v144, 1.0
      %v146 = vrcp.pop %v145
      %v147 = vmul.f32 %v145, %v146
      %v148 = vsub.f32 1.0, %v147
      %v149 = vmul.f32 %v146, %v148
      %v150 = vadd.f32 %v146, %v149
      %vm151 = vweird.f32 %v145
      %vm152 = vweird.f32 %v146
      %vm153 = vmor %vm151, %vm152
      %v154 = vsel %vm153, %v146, %v150
      %v155 = vand.u32 2147483647, %v145
      %vm156 = vcmp.eq.f32.partialorder %v155, 8.507059e+37
      %v157 = vand.u32 %v145, 2147483648
      %v158 = vor.u32 1.1754944e-38, %v157
      %v159 = vsel %vm156, %v158, %v154
      %v160 = vmul.f32 1.0, %v159
      %162 = vrot.lane.b32.xlu0 %v138, 64
      %v163 = vpop.permute.xlu0 %162
      %v165 = vmul.f32 %v160, %v163
      %167 = vrot.lane.b32.xlu0 %v165, 64
      %v168 = vpop.permute.xlu0 %167
      %v170 = vadd.f32 %v107, %v168
      %v171 = vtanh.pop %v170
      %v172 = vsub.f32 1.0, %v160
      %174 = vrot.lane.b32.xlu0 %v171, 96
      %v175 = vpop.permute.xlu0 %174
      %v177 = vmul.f32 %v172, %v175
      %179 = vrot.lane.b32.xlu0 %v102, 32
      %v180 = vpop.permute.xlu0 %179
      %v182 = vmul.f32 %v160, %v180
      %v183 = vadd.f32 %v177, %v182
      %s184 = smul.u32 %s104, 2
      %s185 = scalar_lea.vmem %s72, %s184
      %v186 = vld [vmem:[%s185] sm:$0x3]
      %v187 = vpack.c.bf16 %v103, %v103
      %v189 = vperm.slane %v92, 0
      %v195 = vunpack.c.l.b16 %v87
      %v196 = vunpack.c.l.b16 %v88
      %v197 = vunpack.c.l.b16 %v89
      %v198 = vunpack.c.l.b16 %v90
      %v199 = vpack.c.b16 %v196, %v195
      %v200 = vpack.c.b16 %v198, %v197
      %v204 = vsel %vm124, %v187, 0
      %206 = vmatpush.bf16.msra.mxu0 0
      %207 = vmatpush.bf16.msra.mxu0 0
      %208 = vmatpush.bf16.msra.mxu0 0
      %209 = vmatpush.bf16.msra.mxu0 0
      %210 = vmatpush.bf16.msra.mxu0 0
      %211 = vmatpush.bf16.msra.mxu0 0
      %212 = vmatpush.bf16.msra.mxu0 %v200
      %213 = vmatpush.bf16.msra.mxu0 %v199
      %214 = vmatmul.bf16.gmra.mxu0 %v204
      %v215 = vpop.f32.mrf.mxu0
      %v216 = vadd.f32 %v189, %v215
      %v217 = vpop.f32.mrf.mxu0
      %218 = vdwg.mxu0
      %v219 = vadd.f32 %v186, %v216
      %v220 = vxor.u32 %v219, 2147483648
      %v221 = vmul.f32 %v220, 1.442695
      %v222 = vpow.pop %v221
      %v223 = vadd.f32 %v222, 1.0
      %v224 = vrcp.pop %v223
      %v225 = vmul.f32 %v223, %v224
      %v226 = vsub.f32 1.0, %v225
      %v227 = vmul.f32 %v224, %v226
      %v228 = vadd.f32 %v224, %v227
      %vm229 = vweird.f32 %v223
      %vm230 = vweird.f32 %v224
      %vm231 = vmor %vm229, %vm230
      %v232 = vsel %vm231, %v224, %v228
      %v233 = vand.u32 2147483647, %v223
      %vm234 = vcmp.eq.f32.partialorder %v233, 8.507059e+37
      %v235 = vand.u32 %v223, 2147483648
      %v236 = vor.u32 1.1754944e-38, %v235
      %v237 = vsel %vm234, %v236, %v232
      %v238 = vmul.f32 1.0, %v237
      %240 = vrot.lane.b32.xlu0 %v216, 64
      %v241 = vpop.permute.xlu0 %240
      %v243 = vmul.f32 %v238, %v241
      %245 = vrot.lane.b32.xlu0 %v243, 64
      %v246 = vpop.permute.xlu0 %245
      %v248 = vadd.f32 %v186, %v246
      %v249 = vtanh.pop %v248
      %v250 = vsub.f32 1.0, %v238
      %252 = vrot.lane.b32.xlu0 %v249, 96
      %v253 = vpop.permute.xlu0 %252
      %v255 = vmul.f32 %v250, %v253
      %257 = vrot.lane.b32.xlu0 %v103, 32
      %v258 = vpop.permute.xlu0 %257
      %v260 = vmul.f32 %v238, %v258
      %v261 = vadd.f32 %v255, %v260
      %263 = vrot.lane.b32.xlu0 %v183, 96
      %v264 = vpop.permute.xlu0 %263
      %267 = vrot.lane.b32.xlu0 %v261, 96
      %v268 = vpop.permute.xlu0 %267
    $region42: #{bert_with_gru_forward.34} parent=1 // loop_footer
      %s101 = sadd.s32 1, %s97
    $region43: #{bert_with_gru_forward.34} parent=1 // loop_footer_branch
      %96 = sbr.rel target = $region39
    $region44: #{bert_with_gru_forward.34} parent=1 // loop_exit
      _
    %vm270 = vcmask 254976
    %271 = vst.msk [vmem:[#allocation2] sm:$0x3] %vm270, %v102
    %272 = vst.msk [vmem:[%s94] sm:$0x3] %vm270, %v103
    %273 = vst.msk [vmem:[%s6] sm:$0x3] %vm270, %v102
    %274 = vst.msk [vmem:[%s7] sm:$0x3] %vm270, %v103
    // Predicated region
    $region45: #{bert_with_gru_forward.34} parent=1 // pred_check
      _
    $region46: #{bert_with_gru_forward.34} parent=1 // pred_check_branch
      %276 = sbr.rel (0) target = $region48
    $region47: #{bert_with_gru_forward.34} parent=1 // pred_region
      _
    $region48: #{bert_with_gru_forward.34} parent=1 // pred_fallthru
      _
    // Predicated region
    $region49: #{bert_with_gru_forward.34} parent=1 // pred_check
      _
    $region50: #{bert_with_gru_forward.34} parent=1 // pred_check_branch
      %278 = sbr.rel (0) target = $region52
    $region51: #{bert_with_gru_forward.34} parent=1 // pred_region
      _
    $region52: #{bert_with_gru_forward.34} parent=1 // pred_fallthru
      _
    // Predicated region
    $region53: #{bert_with_gru_forward.34} parent=1 // pred_check
      _
    $region54: #{bert_with_gru_forward.34} parent=1 // pred_check_branch
      %280 = sbr.rel (0) target = $region56
    $region55: #{bert_with_gru_forward.34} parent=1 // pred_region
      _
    $region56: #{bert_with_gru_forward.34} parent=1 // pred_fallthru
      _
    // Predicated region
    $region57: #{bert_with_gru_forward.34} parent=1 // pred_check
      _
    $region58: #{bert_with_gru_forward.34} parent=1 // pred_check_branch
      %282 = sbr.rel (0) target = $region60
    $region59: #{bert_with_gru_forward.34} parent=1 // pred_region
      _
    $region60: #{bert_with_gru_forward.34} parent=1 // pred_fallthru
      _
    %283 = vsyncpa [#allocation4], 1
    %284 = vsyncpa [#allocation6], 1

</llo_original>
